<compile_context>
chip_gen: v6e
topology: v6e:2x2x1
jax: 0.10.0
libtpu: 0.0.40
codegen_flags: <defaults>
</compile_context>

<pallas_src>
import jax
import jax.numpy as jnp
from jax.experimental import pallas as pl
from jax.experimental.pallas import tpu as pltpu

# ----------------------------- model dims (small, consistent with module) ---
VOCAB = 4          # Vocab() with no build_vocab -> n_words == 4 (pad/sos/eos/unk)
VOCAB_PAD = 128    # lane-dense padded fc_out width
EMB_DIM = 128      # scaled down from 256
HIDDEN_DIM = 128   # scaled down from 512
ENC_LAYERS = 2
DEC_LAYERS = 3
PAD_IDX = 0

_H = HIDDEN_DIM
_K = EMB_DIM + HIDDEN_DIM      # fused matmul depth (EMB == HIDDEN here)


# ----------------------------- in-kernel LSTM stack --------------------------
def _lstm_stack_step(x, w_ref, b_ref, h_scr, c_scr):
    """One timestep through a stacked LSTM, state held in VMEM scratch.

    x: (B, EMB)   w_ref: (L, EMB+H, 4H)   b_ref: (L, 1, 4H)
    h_scr/c_scr: (L, B, H) scratch (read+updated in place).
    PyTorch gate order: i, f, g, o ; bias = b_ih + b_hh (pre-summed).
    Returns the top-layer hidden state (B, H).
    """
    n_layers = h_scr.shape[0]
    inp = x
    for l in range(n_layers):                      # static unroll over layers
        h = h_scr[l]
        c = c_scr[l]
        xh = jnp.concatenate([inp, h], axis=-1)    # (B, EMB+H): one K=256 matmul
        gates = (jnp.dot(xh, w_ref[l], preferred_element_type=jnp.float32)
                 + b_ref[l])
        i = jax.nn.sigmoid(gates[:, 0 * _H:1 * _H])
        f = jax.nn.sigmoid(gates[:, 1 * _H:2 * _H])
        g = jnp.tanh(gates[:, 2 * _H:3 * _H])
        o = jax.nn.sigmoid(gates[:, 3 * _H:4 * _H])
        c_new = f * c + i * g
        h_new = o * jnp.tanh(c_new)
        h_scr[l] = h_new
        c_scr[l] = c_new
        inp = h_new
    return inp


# ----------------------------- fused encoder kernel --------------------------
def encoder_kernel(x_ref, w_ref, b_ref, h_out_ref, c_out_ref, h_scr, c_scr):
    """Grid axis = time.  x_ref: (1, B, EMB) block for step t."""
    t = pl.program_id(0)

    @pl.when(t == 0)
    def _():
        h_scr[...] = jnp.zeros_like(h_scr)
        c_scr[...] = jnp.zeros_like(c_scr)

    _lstm_stack_step(x_ref[0], w_ref, b_ref, h_scr, c_scr)

    @pl.when(t == pl.num_programs(0) - 1)
    def _():
        h_out_ref[...] = h_scr[...]
        c_out_ref[...] = c_scr[...]


# ----------------------------- fused decoder kernel --------------------------
def decoder_kernel(x_ref, h0_ref, c0_ref, w_ref, b_ref, fcw_ref, fcb_ref,
                   out_ref, h_scr, c_scr):
    """Grid axis = time.  Writes lane-dense padded logits for step t."""
    t = pl.program_id(0)

    @pl.when(t == 0)
    def _():
        h_scr[...] = h0_ref[...]
        c_scr[...] = c0_ref[...]

    top = _lstm_stack_step(x_ref[0], w_ref, b_ref, h_scr, c_scr)
    out_ref[0] = (jnp.dot(top, fcw_ref[...], preferred_element_type=jnp.float32)
                  + fcb_ref[...])


# ----------------------------- pallas_call wrappers ---------------------------
def run_encoder(emb_src, enc_w, enc_b):
    """emb_src: (T, Bp, EMB) -> (h, c) each (ENC_LAYERS, Bp, H)."""
    T, Bp, _ = emb_src.shape
    state_shape = jax.ShapeDtypeStruct((ENC_LAYERS, Bp, HIDDEN_DIM), jnp.float32)
    return pl.pallas_call(
        encoder_kernel,
        out_shape=(state_shape, state_shape),
        grid_spec=pltpu.PrefetchScalarGridSpec(
            num_scalar_prefetch=0,
            grid=(T,),
            in_specs=[
                pl.BlockSpec((1, Bp, EMB_DIM), lambda t: (t, 0, 0)),
                pl.BlockSpec((ENC_LAYERS, _K, 4 * _H), lambda t: (0, 0, 0)),
                pl.BlockSpec((ENC_LAYERS, 1, 4 * _H), lambda t: (0, 0, 0)),
            ],
            out_specs=(
                pl.BlockSpec((ENC_LAYERS, Bp, HIDDEN_DIM), lambda t: (0, 0, 0)),
                pl.BlockSpec((ENC_LAYERS, Bp, HIDDEN_DIM), lambda t: (0, 0, 0)),
            ),
            scratch_shapes=[
                pltpu.VMEM((ENC_LAYERS, Bp, HIDDEN_DIM), jnp.float32),
                pltpu.VMEM((ENC_LAYERS, Bp, HIDDEN_DIM), jnp.float32),
            ]),
        compiler_params=pltpu.CompilerParams(
            dimension_semantics=("arbitrary",)),
    )(emb_src, enc_w, enc_b)


def run_decoder(emb_tgt, h0, c0, dec_w, dec_b, fc_w, fc_b):
    """emb_tgt: (T-1, Bp, EMB) -> padded logits (T-1, Bp, VOCAB_PAD)."""
    T, Bp, _ = emb_tgt.shape
    return pl.pallas_call(
        decoder_kernel,
        out_shape=jax.ShapeDtypeStruct((T, Bp, VOCAB_PAD), jnp.float32),
        grid_spec=pltpu.PrefetchScalarGridSpec(
            num_scalar_prefetch=0,
            grid=(T,),
            in_specs=[
                pl.BlockSpec((1, Bp, EMB_DIM), lambda t: (t, 0, 0)),
                pl.BlockSpec((DEC_LAYERS, Bp, HIDDEN_DIM), lambda t: (0, 0, 0)),
                pl.BlockSpec((DEC_LAYERS, Bp, HIDDEN_DIM), lambda t: (0, 0, 0)),
                pl.BlockSpec((DEC_LAYERS, _K, 4 * _H), lambda t: (0, 0, 0)),
                pl.BlockSpec((DEC_LAYERS, 1, 4 * _H), lambda t: (0, 0, 0)),
                pl.BlockSpec((HIDDEN_DIM, VOCAB_PAD), lambda t: (0, 0)),
                pl.BlockSpec((1, VOCAB_PAD), lambda t: (0, 0)),
            ],
            out_specs=pl.BlockSpec((1, Bp, VOCAB_PAD), lambda t: (t, 0, 0)),
            scratch_shapes=[
                pltpu.VMEM((DEC_LAYERS, Bp, HIDDEN_DIM), jnp.float32),
                pltpu.VMEM((DEC_LAYERS, Bp, HIDDEN_DIM), jnp.float32),
            ]),
        compiler_params=pltpu.CompilerParams(
            dimension_semantics=("arbitrary",)),
    )(emb_tgt, h0, c0, dec_w, dec_b, fc_w, fc_b)


# ----------------------------- parameter construction ------------------------
def make_params(key):
    """Deterministic synthetic parameters (uniform(-0.1, 0.1))."""
    keys = jax.random.split(key, 24)
    ki = iter(keys)

    def unif(shape):
        return jax.random.uniform(next(ki), shape, jnp.float32, -0.1, 0.1)

    # embeddings, padding_idx row zeroed (as in nn.Embedding(padding_idx=0))
    emb_enc = unif((VOCAB, EMB_DIM)).at[PAD_IDX].set(0.0)
    emb_dec = unif((VOCAB, EMB_DIM)).at[PAD_IDX].set(0.0)

    def lstm_layer(in_dim):
        # fused weight: [w_ih ; w_hh] pre-transposed -> (in_dim + H, 4H)
        w_ih = unif((in_dim, 4 * HIDDEN_DIM))
        w_hh = unif((HIDDEN_DIM, 4 * HIDDEN_DIM))
        b = unif((1, 4 * HIDDEN_DIM)) + unif((1, 4 * HIDDEN_DIM))  # b_ih + b_hh
        return jnp.concatenate([w_ih, w_hh], axis=0), b

    # EMB_DIM == HIDDEN_DIM so all layers share the (EMB+H, 4H) fused shape.
    enc = [lstm_layer(EMB_DIM if l == 0 else HIDDEN_DIM) for l in range(ENC_LAYERS)]
    dec = [lstm_layer(EMB_DIM if l == 0 else HIDDEN_DIM) for l in range(DEC_LAYERS)]

    fc_w = unif((HIDDEN_DIM, VOCAB))
    fc_b = unif((1, VOCAB))

    return {
        "emb_enc": emb_enc,
        "emb_dec": emb_dec,
        "enc_w": jnp.stack([w for w, _ in enc], 0),   # (2, 256, 512)
        "enc_b": jnp.stack([b for _, b in enc], 0),   # (2, 1, 512)
        "dec_w": jnp.stack([w for w, _ in dec], 0),   # (3, 256, 512)
        "dec_b": jnp.stack([b for _, b in dec], 0),   # (3, 1, 512)
        # fc padded to lane-dense 128-wide output
        "fc_w": jnp.pad(fc_w, ((0, 0), (0, VOCAB_PAD - VOCAB))),   # (128, 128)
        "fc_b": jnp.pad(fc_b, ((0, 0), (0, VOCAB_PAD - VOCAB))),   # (1, 128)
    }


# ----------------------------- forward pass ----------------------------------
def seq2seq_forward(params, src, tgt):
    """src: (B, src_len) int32, tgt: (B, tgt_len) int32 -> (B, tgt_len, VOCAB)."""
    B, src_len = src.shape
    _, tgt_len = tgt.shape
    Bp = ((B + 7) // 8) * 8                                # sublane-pad batch

    # ---- encoder: embed, reshape to (T, Bp, EMB), one fused kernel ----
    emb_src = jnp.transpose(params["emb_enc"][src], (1, 0, 2))   # (T, B, E)
    emb_src = jnp.pad(emb_src, ((0, 0), (0, Bp - B), (0, 0)))
    h_enc, c_enc = run_encoder(emb_src, params["enc_w"], params["enc_b"])

    # ---- match decoder layer count (repeat last encoder layer) ----
    if DEC_LAYERS > ENC_LAYERS:
        diff = DEC_LAYERS - ENC_LAYERS
        h0 = jnp.concatenate([h_enc, jnp.repeat(h_enc[-1:], diff, axis=0)], 0)
        c0 = jnp.concatenate([c_enc, jnp.repeat(c_enc[-1:], diff, axis=0)], 0)
    elif DEC_LAYERS < ENC_LAYERS:
        h0, c0 = h_enc[:DEC_LAYERS], c_enc[:DEC_LAYERS]
    else:
        h0, c0 = h_enc, c_enc

    # ---- decoder: teacher forcing -> all inputs known up-front (tgt[:, :-1]) ----
    emb_tgt = jnp.transpose(params["emb_dec"][tgt[:, :tgt_len - 1]], (1, 0, 2))
    emb_tgt = jnp.pad(emb_tgt, ((0, 0), (0, Bp - B), (0, 0)))    # (T-1, Bp, E)

    logits = run_decoder(emb_tgt, h0, c0, params["dec_w"], params["dec_b"],
                         params["fc_w"], params["fc_b"])         # (T-1, Bp, 128)

    # slice away batch / vocab padding, restore (B, T, VOCAB) with zero t=0 row
    logits = jnp.transpose(logits[:, :B, :VOCAB], (1, 0, 2))     # (B, T-1, V)
    outputs = jnp.concatenate(
        [jnp.zeros((B, 1, VOCAB), jnp.float32), logits], axis=1)
    return outputs


# ----------------------------- main ------------------------------------------
if __name__ == "__main__":
    key = jax.random.PRNGKey(0)
    k_params, k_src, k_tgt = jax.random.split(key, 3)

    params = make_params(k_params)

    B, SRC_LEN, TGT_LEN = 2, 8, 8
    src = jax.random.randint(k_src, (B, SRC_LEN), 0, VOCAB, dtype=jnp.int32)
    tgt = jax.random.randint(k_tgt, (B, TGT_LEN), 0, VOCAB, dtype=jnp.int32)
    # force <sos> at position 0 as the dataset would
    tgt = tgt.at[:, 0].set(1)

    fwd = jax.jit(seq2seq_forward)
    out = fwd(params, src, tgt)
    jax.block_until_ready(out)

    assert out.shape == (B, TGT_LEN, VOCAB)
    assert bool(jnp.all(out[:, 0, :] == 0.0))
    print("KERNEL_OK")
</pallas_src>

<mosaic_0001>
module attributes {stable_mosaic.version = 11 : i64} {
  func.func @encoder_kernel(%arg0: i32, %arg1: memref<1x8x128xf32, #tpu.memory_space<vmem>>, %arg2: memref<2x256x512xf32, #tpu.memory_space<vmem>>, %arg3: memref<2x1x512xf32, #tpu.memory_space<vmem>>, %arg4: memref<2x8x128xf32, #tpu.memory_space<vmem>>, %arg5: memref<2x8x128xf32, #tpu.memory_space<vmem>>, %arg6: memref<2x8x128xf32, #tpu.memory_space<vmem>>, %arg7: memref<2x8x128xf32, #tpu.memory_space<vmem>>) attributes {dimension_semantics = [#tpu.dimension_semantics<arbitrary>], iteration_bounds = array<i64: 8>, scalar_prefetch = 0 : i64, scratch_operands = 2 : i64, tpu.core_type = #tpu.core_type<tc>, window_params = [{transform_indices = @transform_0, window_bounds = array<i64: 1, 8, 128>}, {pipeline_mode = #tpu.pipeline_mode<synchronous>, transform_indices = @transform_1, window_bounds = array<i64: 2, 256, 512>}, {pipeline_mode = #tpu.pipeline_mode<synchronous>, transform_indices = @transform_2, window_bounds = array<i64: 2, 1, 512>}, {pipeline_mode = #tpu.pipeline_mode<synchronous>, transform_indices = @transform_3, window_bounds = array<i64: 2, 8, 128>}, {pipeline_mode = #tpu.pipeline_mode<synchronous>, transform_indices = @transform_4, window_bounds = array<i64: 2, 8, 128>}]} {
    %c0_i32 = arith.constant 0 : i32
    %0 = arith.cmpi eq, %arg0, %c0_i32 : i32
    %1 = arith.extui %0 : i1 to i32
    %c0_i32_0 = arith.constant 0 : i32
    %2 = arith.cmpi ne, %1, %c0_i32_0 : i32
    scf.if %2 {
      %cst_46 = arith.constant 0.000000e+00 : f32
      %94 = vector.broadcast %cst_46 : f32 to vector<2x8x128xf32>
      %c0_47 = arith.constant 0 : index
      %c0_48 = arith.constant 0 : index
      %c0_49 = arith.constant 0 : index
      %95 = vector.load %arg6[%c0_47, %c0_48, %c0_49] : memref<2x8x128xf32, #tpu.memory_space<vmem>>, vector<2x8x128xf32>
      tpu.vector_store %arg6[%c0_47, %c0_48, %c0_49], %94 {strides = array<i32>} : memref<2x8x128xf32, #tpu.memory_space<vmem>>, vector<2x8x128xf32>,
      %cst_50 = arith.constant 0.000000e+00 : f32
      %96 = vector.broadcast %cst_50 : f32 to vector<2x8x128xf32>
      %c0_51 = arith.constant 0 : index
      %c0_52 = arith.constant 0 : index
      %c0_53 = arith.constant 0 : index
      %97 = vector.load %arg7[%c0_51, %c0_52, %c0_53] : memref<2x8x128xf32, #tpu.memory_space<vmem>>, vector<2x8x128xf32>
      tpu.vector_store %arg7[%c0_51, %c0_52, %c0_53], %96 {strides = array<i32>} : memref<2x8x128xf32, #tpu.memory_space<vmem>>, vector<2x8x128xf32>,
    } else {
    }
    %c0 = arith.constant 0 : index
    %c0_1 = arith.constant 0 : index
    %c0_2 = arith.constant 0 : index
    %3 = vector.load %arg1[%c0, %c0_1, %c0_2] : memref<1x8x128xf32, #tpu.memory_space<vmem>>, vector<1x8x128xf32>
    %4 = vector.shape_cast %3 : vector<1x8x128xf32> to vector<8x128xf32>
    %c0_3 = arith.constant 0 : index
    %c0_4 = arith.constant 0 : index
    %c0_5 = arith.constant 0 : index
    %5 = vector.load %arg6[%c0_3, %c0_4, %c0_5] : memref<2x8x128xf32, #tpu.memory_space<vmem>>, vector<1x8x128xf32>
    %6 = vector.shape_cast %5 : vector<1x8x128xf32> to vector<8x128xf32>
    %c0_6 = arith.constant 0 : index
    %c0_7 = arith.constant 0 : index
    %c0_8 = arith.constant 0 : index
    %7 = vector.load %arg7[%c0_6, %c0_7, %c0_8] : memref<2x8x128xf32, #tpu.memory_space<vmem>>, vector<1x8x128xf32>
    %8 = vector.shape_cast %7 : vector<1x8x128xf32> to vector<8x128xf32>
    %9 = tpu.concatenate %4, %6 in 1 : vector<8x128xf32>, vector<8x128xf32> -> vector<8x256xf32>
    %c0_9 = arith.constant 0 : index
    %c0_10 = arith.constant 0 : index
    %c0_11 = arith.constant 0 : index
    %10 = vector.load %arg2[%c0_9, %c0_10, %c0_11] : memref<2x256x512xf32, #tpu.memory_space<vmem>>, vector<1x256x512xf32>
    %11 = vector.shape_cast %10 : vector<1x256x512xf32> to vector<256x512xf32>
    %cst = arith.constant dense<0.000000e+00> : vector<8x512xf32>
    %12 = tpu.matmul %9, %11, %cst {dimension_numbers = #tpu.dot_dimension_numbers<[1], [0], [0], [1], [0, 0, 1, 1], [], []>} : vector<8x256xf32>, vector<256x512xf32>, vector<8x512xf32> -> vector<8x512xf32>
    %c0_12 = arith.constant 0 : index
    %c0_13 = arith.constant 0 : index
    %c0_14 = arith.constant 0 : index
    %13 = vector.load %arg3[%c0_12, %c0_13, %c0_14] : memref<2x1x512xf32, #tpu.memory_space<vmem>>, vector<1x1x512xf32>
    %14 = vector.shape_cast %13 : vector<1x1x512xf32> to vector<1x512xf32>
    %15 = vector.broadcast %14 : vector<1x512xf32> to vector<8x512xf32>
    %16 = arith.addf %12, %15 : vector<8x512xf32>
    %17 = vector.extract_strided_slice %16 {offsets = [0, 0], sizes = [8, 128], strides = [1, 1]} : vector<8x512xf32> to vector<8x128xf32>
    %18 = arith.negf %17 : vector<8x128xf32>
    %19 = math.exp %18 : vector<8x128xf32>
    %cst_15 = arith.constant 1.000000e+00 : f32
    %20 = vector.broadcast %cst_15 : f32 to vector<8x128xf32>
    %21 = arith.addf %20, %19 : vector<8x128xf32>
    %22 = arith.divf %20, %21 : vector<8x128xf32>
    %23 = vector.extract_strided_slice %16 {offsets = [0, 128], sizes = [8, 128], strides = [1, 1]} : vector<8x512xf32> to vector<8x128xf32>
    %24 = arith.negf %23 : vector<8x128xf32>
    %25 = math.exp %24 : vector<8x128xf32>
    %cst_16 = arith.constant 1.000000e+00 : f32
    %26 = vector.broadcast %cst_16 : f32 to vector<8x128xf32>
    %27 = arith.addf %26, %25 : vector<8x128xf32>
    %28 = arith.divf %26, %27 : vector<8x128xf32>
    %29 = vector.extract_strided_slice %16 {offsets = [0, 256], sizes = [8, 128], strides = [1, 1]} : vector<8x512xf32> to vector<8x128xf32>
    %30 = math.tanh %29 : vector<8x128xf32>
    %31 = vector.extract_strided_slice %16 {offsets = [0, 384], sizes = [8, 128], strides = [1, 1]} : vector<8x512xf32> to vector<8x128xf32>
    %32 = arith.negf %31 : vector<8x128xf32>
    %33 = math.exp %32 : vector<8x128xf32>
    %cst_17 = arith.constant 1.000000e+00 : f32
    %34 = vector.broadcast %cst_17 : f32 to vector<8x128xf32>
    %35 = arith.addf %34, %33 : vector<8x128xf32>
    %36 = arith.divf %34, %35 : vector<8x128xf32>
    %37 = arith.mulf %28, %8 : vector<8x128xf32>
    %38 = arith.mulf %22, %30 : vector<8x128xf32>
    %39 = arith.addf %37, %38 : vector<8x128xf32>
    %40 = math.tanh %39 : vector<8x128xf32>
    %41 = arith.mulf %36, %40 : vector<8x128xf32>
    %c0_18 = arith.constant 0 : index
    %c0_19 = arith.constant 0 : index
    %c0_20 = arith.constant 0 : index
    %42 = vector.load %arg6[%c0_18, %c0_19, %c0_20] : memref<2x8x128xf32, #tpu.memory_space<vmem>>, vector<1x8x128xf32>
    %43 = vector.shape_cast %42 : vector<1x8x128xf32> to vector<8x128xf32>
    %44 = vector.shape_cast %41 : vector<8x128xf32> to vector<1x8x128xf32>
    tpu.vector_store %arg6[%c0_18, %c0_19, %c0_20], %44 {strides = array<i32>} : memref<2x8x128xf32, #tpu.memory_space<vmem>>, vector<1x8x128xf32>,
    %c0_21 = arith.constant 0 : index
    %c0_22 = arith.constant 0 : index
    %c0_23 = arith.constant 0 : index
    %45 = vector.load %arg7[%c0_21, %c0_22, %c0_23] : memref<2x8x128xf32, #tpu.memory_space<vmem>>, vector<1x8x128xf32>
    %46 = vector.shape_cast %45 : vector<1x8x128xf32> to vector<8x128xf32>
    %47 = vector.shape_cast %39 : vector<8x128xf32> to vector<1x8x128xf32>
    tpu.vector_store %arg7[%c0_21, %c0_22, %c0_23], %47 {strides = array<i32>} : memref<2x8x128xf32, #tpu.memory_space<vmem>>, vector<1x8x128xf32>,
    %c1 = arith.constant 1 : index
    %c0_24 = arith.constant 0 : index
    %c0_25 = arith.constant 0 : index
    %48 = vector.load %arg6[%c1, %c0_24, %c0_25] : memref<2x8x128xf32, #tpu.memory_space<vmem>>, vector<1x8x128xf32>
    %49 = vector.shape_cast %48 : vector<1x8x128xf32> to vector<8x128xf32>
    %c1_26 = arith.constant 1 : index
    %c0_27 = arith.constant 0 : index
    %c0_28 = arith.constant 0 : index
    %50 = vector.load %arg7[%c1_26, %c0_27, %c0_28] : memref<2x8x128xf32, #tpu.memory_space<vmem>>, vector<1x8x128xf32>
    %51 = vector.shape_cast %50 : vector<1x8x128xf32> to vector<8x128xf32>
    %52 = tpu.concatenate %41, %49 in 1 : vector<8x128xf32>, vector<8x128xf32> -> vector<8x256xf32>
    %c1_29 = arith.constant 1 : index
    %c0_30 = arith.constant 0 : index
    %c0_31 = arith.constant 0 : index
    %53 = vector.load %arg2[%c1_29, %c0_30, %c0_31] : memref<2x256x512xf32, #tpu.memory_space<vmem>>, vector<1x256x512xf32>
    %54 = vector.shape_cast %53 : vector<1x256x512xf32> to vector<256x512xf32>
    %cst_32 = arith.constant dense<0.000000e+00> : vector<8x512xf32>
    %55 = tpu.matmul %52, %54, %cst_32 {dimension_numbers = #tpu.dot_dimension_numbers<[1], [0], [0], [1], [0, 0, 1, 1], [], []>} : vector<8x256xf32>, vector<256x512xf32>, vector<8x512xf32> -> vector<8x512xf32>
    %c1_33 = arith.constant 1 : index
    %c0_34 = arith.constant 0 : index
    %c0_35 = arith.constant 0 : index
    %56 = vector.load %arg3[%c1_33, %c0_34, %c0_35] : memref<2x1x512xf32, #tpu.memory_space<vmem>>, vector<1x1x512xf32>
    %57 = vector.shape_cast %56 : vector<1x1x512xf32> to vector<1x512xf32>
    %58 = vector.broadcast %57 : vector<1x512xf32> to vector<8x512xf32>
    %59 = arith.addf %55, %58 : vector<8x512xf32>
    %60 = vector.extract_strided_slice %59 {offsets = [0, 0], sizes = [8, 128], strides = [1, 1]} : vector<8x512xf32> to vector<8x128xf32>
    %61 = arith.negf %60 : vector<8x128xf32>
    %62 = math.exp %61 : vector<8x128xf32>
    %cst_36 = arith.constant 1.000000e+00 : f32
    %63 = vector.broadcast %cst_36 : f32 to vector<8x128xf32>
    %64 = arith.addf %63, %62 : vector<8x128xf32>
    %65 = arith.divf %63, %64 : vector<8x128xf32>
    %66 = vector.extract_strided_slice %59 {offsets = [0, 128], sizes = [8, 128], strides = [1, 1]} : vector<8x512xf32> to vector<8x128xf32>
    %67 = arith.negf %66 : vector<8x128xf32>
    %68 = math.exp %67 : vector<8x128xf32>
    %cst_37 = arith.constant 1.000000e+00 : f32
    %69 = vector.broadcast %cst_37 : f32 to vector<8x128xf32>
    %70 = arith.addf %69, %68 : vector<8x128xf32>
    %71 = arith.divf %69, %70 : vector<8x128xf32>
    %72 = vector.extract_strided_slice %59 {offsets = [0, 256], sizes = [8, 128], strides = [1, 1]} : vector<8x512xf32> to vector<8x128xf32>
    %73 = math.tanh %72 : vector<8x128xf32>
    %74 = vector.extract_strided_slice %59 {offsets = [0, 384], sizes = [8, 128], strides = [1, 1]} : vector<8x512xf32> to vector<8x128xf32>
    %75 = arith.negf %74 : vector<8x128xf32>
    %76 = math.exp %75 : vector<8x128xf32>
    %cst_38 = arith.constant 1.000000e+00 : f32
    %77 = vector.broadcast %cst_38 : f32 to vector<8x128xf32>
    %78 = arith.addf %77, %76 : vector<8x128xf32>
    %79 = arith.divf %77, %78 : vector<8x128xf32>
    %80 = arith.mulf %71, %51 : vector<8x128xf32>
    %81 = arith.mulf %65, %73 : vector<8x128xf32>
    %82 = arith.addf %80, %81 : vector<8x128xf32>
    %83 = math.tanh %82 : vector<8x128xf32>
    %84 = arith.mulf %79, %83 : vector<8x128xf32>
    %c1_39 = arith.constant 1 : index
    %c0_40 = arith.constant 0 : index
    %c0_41 = arith.constant 0 : index
    %85 = vector.load %arg6[%c1_39, %c0_40, %c0_41] : memref<2x8x128xf32, #tpu.memory_space<vmem>>, vector<1x8x128xf32>
    %86 = vector.shape_cast %85 : vector<1x8x128xf32> to vector<8x128xf32>
    %87 = vector.shape_cast %84 : vector<8x128xf32> to vector<1x8x128xf32>
    tpu.vector_store %arg6[%c1_39, %c0_40, %c0_41], %87 {strides = array<i32>} : memref<2x8x128xf32, #tpu.memory_space<vmem>>, vector<1x8x128xf32>,
    %c1_42 = arith.constant 1 : index
    %c0_43 = arith.constant 0 : index
    %c0_44 = arith.constant 0 : index
    %88 = vector.load %arg7[%c1_42, %c0_43, %c0_44] : memref<2x8x128xf32, #tpu.memory_space<vmem>>, vector<1x8x128xf32>
    %89 = vector.shape_cast %88 : vector<1x8x128xf32> to vector<8x128xf32>
    %90 = vector.shape_cast %82 : vector<8x128xf32> to vector<1x8x128xf32>
    tpu.vector_store %arg7[%c1_42, %c0_43, %c0_44], %90 {strides = array<i32>} : memref<2x8x128xf32, #tpu.memory_space<vmem>>, vector<1x8x128xf32>,
    %c7_i32 = arith.constant 7 : i32
    %91 = arith.cmpi eq, %arg0, %c7_i32 : i32
    %92 = arith.extui %91 : i1 to i32
    %c0_i32_45 = arith.constant 0 : i32
    %93 = arith.cmpi ne, %92, %c0_i32_45 : i32
    scf.if %93 {
      %c0_46 = arith.constant 0 : index
      %c0_47 = arith.constant 0 : index
      %c0_48 = arith.constant 0 : index
      %94 = vector.load %arg6[%c0_46, %c0_47, %c0_48] : memref<2x8x128xf32, #tpu.memory_space<vmem>>, vector<2x8x128xf32>
      %c0_49 = arith.constant 0 : index
      %c0_50 = arith.constant 0 : index
      %c0_51 = arith.constant 0 : index
      %95 = vector.load %arg4[%c0_49, %c0_50, %c0_51] : memref<2x8x128xf32, #tpu.memory_space<vmem>>, vector<2x8x128xf32>
      tpu.vector_store %arg4[%c0_49, %c0_50, %c0_51], %94 {strides = array<i32>} : memref<2x8x128xf32, #tpu.memory_space<vmem>>, vector<2x8x128xf32>,
      %c0_52 = arith.constant 0 : index
      %c0_53 = arith.constant 0 : index
      %c0_54 = arith.constant 0 : index
      %96 = vector.load %arg7[%c0_52, %c0_53, %c0_54] : memref<2x8x128xf32, #tpu.memory_space<vmem>>, vector<2x8x128xf32>
      %c0_55 = arith.constant 0 : index
      %c0_56 = arith.constant 0 : index
      %c0_57 = arith.constant 0 : index
      %97 = vector.load %arg5[%c0_55, %c0_56, %c0_57] : memref<2x8x128xf32, #tpu.memory_space<vmem>>, vector<2x8x128xf32>
      tpu.vector_store %arg5[%c0_55, %c0_56, %c0_57], %96 {strides = array<i32>} : memref<2x8x128xf32, #tpu.memory_space<vmem>>, vector<2x8x128xf32>,
    } else {
    }
    return
  }
  func.func @transform_0(%arg0: i32) -> (i32, i32, i32) {
    %c0_i32 = arith.constant 0 : i32
    %c0_i32_0 = arith.constant 0 : i32
    %c0_i32_1 = arith.constant 0 : i32
    return %arg0, %c0_i32, %c0_i32_0 : i32, i32, i32
  }
  func.func @transform_1(%arg0: i32) -> (i32, i32, i32) {
    %c0_i32 = arith.constant 0 : i32
    %c0_i32_0 = arith.constant 0 : i32
    %c0_i32_1 = arith.constant 0 : i32
    %c0_i32_2 = arith.constant 0 : i32
    return %c0_i32, %c0_i32_0, %c0_i32_1 : i32, i32, i32
  }
  func.func @transform_2(%arg0: i32) -> (i32, i32, i32) {
    %c0_i32 = arith.constant 0 : i32
    %c0_i32_0 = arith.constant 0 : i32
    %c0_i32_1 = arith.constant 0 : i32
    %c0_i32_2 = arith.constant 0 : i32
    return %c0_i32, %c0_i32_0, %c0_i32_1 : i32, i32, i32
  }
  func.func @transform_3(%arg0: i32) -> (i32, i32, i32) {
    %c0_i32 = arith.constant 0 : i32
    %c0_i32_0 = arith.constant 0 : i32
    %c0_i32_1 = arith.constant 0 : i32
    %c0_i32_2 = arith.constant 0 : i32
    return %c0_i32, %c0_i32_0, %c0_i32_1 : i32, i32, i32
  }
  func.func @transform_4(%arg0: i32) -> (i32, i32, i32) {
    %c0_i32 = arith.constant 0 : i32
    %c0_i32_0 = arith.constant 0 : i32
    %c0_i32_1 = arith.constant 0 : i32
    %c0_i32_2 = arith.constant 0 : i32
    return %c0_i32, %c0_i32_0, %c0_i32_1 : i32, i32, i32
  }
}

module attributes {stable_mosaic.version = 11 : i64} {
  func.func @decoder_kernel(%arg0: i32, %arg1: memref<1x8x128xf32, #tpu.memory_space<vmem>>, %arg2: memref<3x8x128xf32, #tpu.memory_space<vmem>>, %arg3: memref<3x8x128xf32, #tpu.memory_space<vmem>>, %arg4: memref<3x256x512xf32, #tpu.memory_space<vmem>>, %arg5: memref<3x1x512xf32, #tpu.memory_space<vmem>>, %arg6: memref<128x128xf32, #tpu.memory_space<vmem>>, %arg7: memref<1x128xf32, #tpu.memory_space<vmem>>, %arg8: memref<1x8x128xf32, #tpu.memory_space<vmem>>, %arg9: memref<3x8x128xf32, #tpu.memory_space<vmem>>, %arg10: memref<3x8x128xf32, #tpu.memory_space<vmem>>) attributes {dimension_semantics = [#tpu.dimension_semantics<arbitrary>], iteration_bounds = array<i64: 7>, scalar_prefetch = 0 : i64, scratch_operands = 2 : i64, tpu.core_type = #tpu.core_type<tc>, window_params = [{transform_indices = @transform_0, window_bounds = array<i64: 1, 8, 128>}, {pipeline_mode = #tpu.pipeline_mode<synchronous>, transform_indices = @transform_1, window_bounds = array<i64: 3, 8, 128>}, {pipeline_mode = #tpu.pipeline_mode<synchronous>, transform_indices = @transform_2, window_bounds = array<i64: 3, 8, 128>}, {pipeline_mode = #tpu.pipeline_mode<synchronous>, transform_indices = @transform_3, window_bounds = array<i64: 3, 256, 512>}, {pipeline_mode = #tpu.pipeline_mode<synchronous>, transform_indices = @transform_4, window_bounds = array<i64: 3, 1, 512>}, {pipeline_mode = #tpu.pipeline_mode<synchronous>, transform_indices = @transform_5, window_bounds = array<i64: 128, 128>}, {pipeline_mode = #tpu.pipeline_mode<synchronous>, transform_indices = @transform_6, window_bounds = array<i64: 1, 128>}, {transform_indices = @transform_7, window_bounds = array<i64: 1, 8, 128>}]} {
    %c0_i32 = arith.constant 0 : i32
    %0 = arith.cmpi eq, %arg0, %c0_i32 : i32
    %1 = arith.extui %0 : i1 to i32
    %c0_i32_0 = arith.constant 0 : i32
    %2 = arith.cmpi ne, %1, %c0_i32_0 : i32
    scf.if %2 {
      %c0_74 = arith.constant 0 : index
      %c0_75 = arith.constant 0 : index
      %c0_76 = arith.constant 0 : index
      %142 = vector.load %arg2[%c0_74, %c0_75, %c0_76] : memref<3x8x128xf32, #tpu.memory_space<vmem>>, vector<3x8x128xf32>
      %c0_77 = arith.constant 0 : index
      %c0_78 = arith.constant 0 : index
      %c0_79 = arith.constant 0 : index
      %143 = vector.load %arg9[%c0_77, %c0_78, %c0_79] : memref<3x8x128xf32, #tpu.memory_space<vmem>>, vector<3x8x128xf32>
      tpu.vector_store %arg9[%c0_77, %c0_78, %c0_79], %142 {strides = array<i32>} : memref<3x8x128xf32, #tpu.memory_space<vmem>>, vector<3x8x128xf32>,
      %c0_80 = arith.constant 0 : index
      %c0_81 = arith.constant 0 : index
      %c0_82 = arith.constant 0 : index
      %144 = vector.load %arg3[%c0_80, %c0_81, %c0_82] : memref<3x8x128xf32, #tpu.memory_space<vmem>>, vector<3x8x128xf32>
      %c0_83 = arith.constant 0 : index
      %c0_84 = arith.constant 0 : index
      %c0_85 = arith.constant 0 : index
      %145 = vector.load %arg10[%c0_83, %c0_84, %c0_85] : memref<3x8x128xf32, #tpu.memory_space<vmem>>, vector<3x8x128xf32>
      tpu.vector_store %arg10[%c0_83, %c0_84, %c0_85], %144 {strides = array<i32>} : memref<3x8x128xf32, #tpu.memory_space<vmem>>, vector<3x8x128xf32>,
    } else {
    }
    %c0 = arith.constant 0 : index
    %c0_1 = arith.constant 0 : index
    %c0_2 = arith.constant 0 : index
    %3 = vector.load %arg1[%c0, %c0_1, %c0_2] : memref<1x8x128xf32, #tpu.memory_space<vmem>>, vector<1x8x128xf32>
    %4 = vector.shape_cast %3 : vector<1x8x128xf32> to vector<8x128xf32>
    %c0_3 = arith.constant 0 : index
    %c0_4 = arith.constant 0 : index
    %c0_5 = arith.constant 0 : index
    %5 = vector.load %arg9[%c0_3, %c0_4, %c0_5] : memref<3x8x128xf32, #tpu.memory_space<vmem>>, vector<1x8x128xf32>
    %6 = vector.shape_cast %5 : vector<1x8x128xf32> to vector<8x128xf32>
    %c0_6 = arith.constant 0 : index
    %c0_7 = arith.constant 0 : index
    %c0_8 = arith.constant 0 : index
    %7 = vector.load %arg10[%c0_6, %c0_7, %c0_8] : memref<3x8x128xf32, #tpu.memory_space<vmem>>, vector<1x8x128xf32>
    %8 = vector.shape_cast %7 : vector<1x8x128xf32> to vector<8x128xf32>
    %9 = tpu.concatenate %4, %6 in 1 : vector<8x128xf32>, vector<8x128xf32> -> vector<8x256xf32>
    %c0_9 = arith.constant 0 : index
    %c0_10 = arith.constant 0 : index
    %c0_11 = arith.constant 0 : index
    %10 = vector.load %arg4[%c0_9, %c0_10, %c0_11] : memref<3x256x512xf32, #tpu.memory_space<vmem>>, vector<1x256x512xf32>
    %11 = vector.shape_cast %10 : vector<1x256x512xf32> to vector<256x512xf32>
    %cst = arith.constant dense<0.000000e+00> : vector<8x512xf32>
    %12 = tpu.matmul %9, %11, %cst {dimension_numbers = #tpu.dot_dimension_numbers<[1], [0], [0], [1], [0, 0, 1, 1], [], []>} : vector<8x256xf32>, vector<256x512xf32>, vector<8x512xf32> -> vector<8x512xf32>
    %c0_12 = arith.constant 0 : index
    %c0_13 = arith.constant 0 : index
    %c0_14 = arith.constant 0 : index
    %13 = vector.load %arg5[%c0_12, %c0_13, %c0_14] : memref<3x1x512xf32, #tpu.memory_space<vmem>>, vector<1x1x512xf32>
    %14 = vector.shape_cast %13 : vector<1x1x512xf32> to vector<1x512xf32>
    %15 = vector.broadcast %14 : vector<1x512xf32> to vector<8x512xf32>
    %16 = arith.addf %12, %15 : vector<8x512xf32>
    %17 = vector.extract_strided_slice %16 {offsets = [0, 0], sizes = [8, 128], strides = [1, 1]} : vector<8x512xf32> to vector<8x128xf32>
    %18 = arith.negf %17 : vector<8x128xf32>
    %19 = math.exp %18 : vector<8x128xf32>
    %cst_15 = arith.constant 1.000000e+00 : f32
    %20 = vector.broadcast %cst_15 : f32 to vector<8x128xf32>
    %21 = arith.addf %20, %19 : vector<8x128xf32>
    %22 = arith.divf %20, %21 : vector<8x128xf32>
    %23 = vector.extract_strided_slice %16 {offsets = [0, 128], sizes = [8, 128], strides = [1, 1]} : vector<8x512xf32> to vector<8x128xf32>
    %24 = arith.negf %23 : vector<8x128xf32>
    %25 = math.exp %24 : vector<8x128xf32>
    %cst_16 = arith.constant 1.000000e+00 : f32
    %26 = vector.broadcast %cst_16 : f32 to vector<8x128xf32>
    %27 = arith.addf %26, %25 : vector<8x128xf32>
    %28 = arith.divf %26, %27 : vector<8x128xf32>
    %29 = vector.extract_strided_slice %16 {offsets = [0, 256], sizes = [8, 128], strides = [1, 1]} : vector<8x512xf32> to vector<8x128xf32>
    %30 = math.tanh %29 : vector<8x128xf32>
    %31 = vector.extract_strided_slice %16 {offsets = [0, 384], sizes = [8, 128], strides = [1, 1]} : vector<8x512xf32> to vector<8x128xf32>
    %32 = arith.negf %31 : vector<8x128xf32>
    %33 = math.exp %32 : vector<8x128xf32>
    %cst_17 = arith.constant 1.000000e+00 : f32
    %34 = vector.broadcast %cst_17 : f32 to vector<8x128xf32>
    %35 = arith.addf %34, %33 : vector<8x128xf32>
    %36 = arith.divf %34, %35 : vector<8x128xf32>
    %37 = arith.mulf %28, %8 : vector<8x128xf32>
    %38 = arith.mulf %22, %30 : vector<8x128xf32>
    %39 = arith.addf %37, %38 : vector<8x128xf32>
    %40 = math.tanh %39 : vector<8x128xf32>
    %41 = arith.mulf %36, %40 : vector<8x128xf32>
    %c0_18 = arith.constant 0 : index
    %c0_19 = arith.constant 0 : index
    %c0_20 = arith.constant 0 : index
    %42 = vector.load %arg9[%c0_18, %c0_19, %c0_20] : memref<3x8x128xf32, #tpu.memory_space<vmem>>, vector<1x8x128xf32>
    %43 = vector.shape_cast %42 : vector<1x8x128xf32> to vector<8x128xf32>
    %44 = vector.shape_cast %41 : vector<8x128xf32> to vector<1x8x128xf32>
    tpu.vector_store %arg9[%c0_18, %c0_19, %c0_20], %44 {strides = array<i32>} : memref<3x8x128xf32, #tpu.memory_space<vmem>>, vector<1x8x128xf32>,
    %c0_21 = arith.constant 0 : index
    %c0_22 = arith.constant 0 : index
    %c0_23 = arith.constant 0 : index
    %45 = vector.load %arg10[%c0_21, %c0_22, %c0_23] : memref<3x8x128xf32, #tpu.memory_space<vmem>>, vector<1x8x128xf32>
    %46 = vector.shape_cast %45 : vector<1x8x128xf32> to vector<8x128xf32>
    %47 = vector.shape_cast %39 : vector<8x128xf32> to vector<1x8x128xf32>
    tpu.vector_store %arg10[%c0_21, %c0_22, %c0_23], %47 {strides = array<i32>} : memref<3x8x128xf32, #tpu.memory_space<vmem>>, vector<1x8x128xf32>,
    %c1 = arith.constant 1 : index
    %c0_24 = arith.constant 0 : index
    %c0_25 = arith.constant 0 : index
    %48 = vector.load %arg9[%c1, %c0_24, %c0_25] : memref<3x8x128xf32, #tpu.memory_space<vmem>>, vector<1x8x128xf32>
    %49 = vector.shape_cast %48 : vector<1x8x128xf32> to vector<8x128xf32>
    %c1_26 = arith.constant 1 : index
    %c0_27 = arith.constant 0 : index
    %c0_28 = arith.constant 0 : index
    %50 = vector.load %arg10[%c1_26, %c0_27, %c0_28] : memref<3x8x128xf32, #tpu.memory_space<vmem>>, vector<1x8x128xf32>
    %51 = vector.shape_cast %50 : vector<1x8x128xf32> to vector<8x128xf32>
    %52 = tpu.concatenate %41, %49 in 1 : vector<8x128xf32>, vector<8x128xf32> -> vector<8x256xf32>
    %c1_29 = arith.constant 1 : index
    %c0_30 = arith.constant 0 : index
    %c0_31 = arith.constant 0 : index
    %53 = vector.load %arg4[%c1_29, %c0_30, %c0_31] : memref<3x256x512xf32, #tpu.memory_space<vmem>>, vector<1x256x512xf32>
    %54 = vector.shape_cast %53 : vector<1x256x512xf32> to vector<256x512xf32>
    %cst_32 = arith.constant dense<0.000000e+00> : vector<8x512xf32>
    %55 = tpu.matmul %52, %54, %cst_32 {dimension_numbers = #tpu.dot_dimension_numbers<[1], [0], [0], [1], [0, 0, 1, 1], [], []>} : vector<8x256xf32>, vector<256x512xf32>, vector<8x512xf32> -> vector<8x512xf32>
    %c1_33 = arith.constant 1 : index
    %c0_34 = arith.constant 0 : index
    %c0_35 = arith.constant 0 : index
    %56 = vector.load %arg5[%c1_33, %c0_34, %c0_35] : memref<3x1x512xf32, #tpu.memory_space<vmem>>, vector<1x1x512xf32>
    %57 = vector.shape_cast %56 : vector<1x1x512xf32> to vector<1x512xf32>
    %58 = vector.broadcast %57 : vector<1x512xf32> to vector<8x512xf32>
    %59 = arith.addf %55, %58 : vector<8x512xf32>
    %60 = vector.extract_strided_slice %59 {offsets = [0, 0], sizes = [8, 128], strides = [1, 1]} : vector<8x512xf32> to vector<8x128xf32>
    %61 = arith.negf %60 : vector<8x128xf32>
    %62 = math.exp %61 : vector<8x128xf32>
    %cst_36 = arith.constant 1.000000e+00 : f32
    %63 = vector.broadcast %cst_36 : f32 to vector<8x128xf32>
    %64 = arith.addf %63, %62 : vector<8x128xf32>
    %65 = arith.divf %63, %64 : vector<8x128xf32>
    %66 = vector.extract_strided_slice %59 {offsets = [0, 128], sizes = [8, 128], strides = [1, 1]} : vector<8x512xf32> to vector<8x128xf32>
    %67 = arith.negf %66 : vector<8x128xf32>
    %68 = math.exp %67 : vector<8x128xf32>
    %cst_37 = arith.constant 1.000000e+00 : f32
    %69 = vector.broadcast %cst_37 : f32 to vector<8x128xf32>
    %70 = arith.addf %69, %68 : vector<8x128xf32>
    %71 = arith.divf %69, %70 : vector<8x128xf32>
    %72 = vector.extract_strided_slice %59 {offsets = [0, 256], sizes = [8, 128], strides = [1, 1]} : vector<8x512xf32> to vector<8x128xf32>
    %73 = math.tanh %72 : vector<8x128xf32>
    %74 = vector.extract_strided_slice %59 {offsets = [0, 384], sizes = [8, 128], strides = [1, 1]} : vector<8x512xf32> to vector<8x128xf32>
    %75 = arith.negf %74 : vector<8x128xf32>
    %76 = math.exp %75 : vector<8x128xf32>
    %cst_38 = arith.constant 1.000000e+00 : f32
    %77 = vector.broadcast %cst_38 : f32 to vector<8x128xf32>
    %78 = arith.addf %77, %76 : vector<8x128xf32>
    %79 = arith.divf %77, %78 : vector<8x128xf32>
    %80 = arith.mulf %71, %51 : vector<8x128xf32>
    %81 = arith.mulf %65, %73 : vector<8x128xf32>
    %82 = arith.addf %80, %81 : vector<8x128xf32>
    %83 = math.tanh %82 : vector<8x128xf32>
    %84 = arith.mulf %79, %83 : vector<8x128xf32>
    %c1_39 = arith.constant 1 : index
    %c0_40 = arith.constant 0 : index
    %c0_41 = arith.constant 0 : index
    %85 = vector.load %arg9[%c1_39, %c0_40, %c0_41] : memref<3x8x128xf32, #tpu.memory_space<vmem>>, vector<1x8x128xf32>
    %86 = vector.shape_cast %85 : vector<1x8x128xf32> to vector<8x128xf32>
    %87 = vector.shape_cast %84 : vector<8x128xf32> to vector<1x8x128xf32>
    tpu.vector_store %arg9[%c1_39, %c0_40, %c0_41], %87 {strides = array<i32>} : memref<3x8x128xf32, #tpu.memory_space<vmem>>, vector<1x8x128xf32>,
    %c1_42 = arith.constant 1 : index
    %c0_43 = arith.constant 0 : index
    %c0_44 = arith.constant 0 : index
    %88 = vector.load %arg10[%c1_42, %c0_43, %c0_44] : memref<3x8x128xf32, #tpu.memory_space<vmem>>, vector<1x8x128xf32>
    %89 = vector.shape_cast %88 : vector<1x8x128xf32> to vector<8x128xf32>
    %90 = vector.shape_cast %82 : vector<8x128xf32> to vector<1x8x128xf32>
    tpu.vector_store %arg10[%c1_42, %c0_43, %c0_44], %90 {strides = array<i32>} : memref<3x8x128xf32, #tpu.memory_space<vmem>>, vector<1x8x128xf32>,
    %c2 = arith.constant 2 : index
    %c0_45 = arith.constant 0 : index
    %c0_46 = arith.constant 0 : index
    %91 = vector.load %arg9[%c2, %c0_45, %c0_46] : memref<3x8x128xf32, #tpu.memory_space<vmem>>, vector<1x8x128xf32>
    %92 = vector.shape_cast %91 : vector<1x8x128xf32> to vector<8x128xf32>
    %c2_47 = arith.constant 2 : index
    %c0_48 = arith.constant 0 : index
    %c0_49 = arith.constant 0 : index
    %93 = vector.load %arg10[%c2_47, %c0_48, %c0_49] : memref<3x8x128xf32, #tpu.memory_space<vmem>>, vector<1x8x128xf32>
    %94 = vector.shape_cast %93 : vector<1x8x128xf32> to vector<8x128xf32>
    %95 = tpu.concatenate %84, %92 in 1 : vector<8x128xf32>, vector<8x128xf32> -> vector<8x256xf32>
    %c2_50 = arith.constant 2 : index
    %c0_51 = arith.constant 0 : index
    %c0_52 = arith.constant 0 : index
    %96 = vector.load %arg4[%c2_50, %c0_51, %c0_52] : memref<3x256x512xf32, #tpu.memory_space<vmem>>, vector<1x256x512xf32>
    %97 = vector.shape_cast %96 : vector<1x256x512xf32> to vector<256x512xf32>
    %cst_53 = arith.constant dense<0.000000e+00> : vector<8x512xf32>
    %98 = tpu.matmul %95, %97, %cst_53 {dimension_numbers = #tpu.dot_dimension_numbers<[1], [0], [0], [1], [0, 0, 1, 1], [], []>} : vector<8x256xf32>, vector<256x512xf32>, vector<8x512xf32> -> vector<8x512xf32>
    %c2_54 = arith.constant 2 : index
    %c0_55 = arith.constant 0 : index
    %c0_56 = arith.constant 0 : index
    %99 = vector.load %arg5[%c2_54, %c0_55, %c0_56] : memref<3x1x512xf32, #tpu.memory_space<vmem>>, vector<1x1x512xf32>
    %100 = vector.shape_cast %99 : vector<1x1x512xf32> to vector<1x512xf32>
    %101 = vector.broadcast %100 : vector<1x512xf32> to vector<8x512xf32>
    %102 = arith.addf %98, %101 : vector<8x512xf32>
    %103 = vector.extract_strided_slice %102 {offsets = [0, 0], sizes = [8, 128], strides = [1, 1]} : vector<8x512xf32> to vector<8x128xf32>
    %104 = arith.negf %103 : vector<8x128xf32>
    %105 = math.exp %104 : vector<8x128xf32>
    %cst_57 = arith.constant 1.000000e+00 : f32
    %106 = vector.broadcast %cst_57 : f32 to vector<8x128xf32>
    %107 = arith.addf %106, %105 : vector<8x128xf32>
    %108 = arith.divf %106, %107 : vector<8x128xf32>
    %109 = vector.extract_strided_slice %102 {offsets = [0, 128], sizes = [8, 128], strides = [1, 1]} : vector<8x512xf32> to vector<8x128xf32>
    %110 = arith.negf %109 : vector<8x128xf32>
    %111 = math.exp %110 : vector<8x128xf32>
    %cst_58 = arith.constant 1.000000e+00 : f32
    %112 = vector.broadcast %cst_58 : f32 to vector<8x128xf32>
    %113 = arith.addf %112, %111 : vector<8x128xf32>
    %114 = arith.divf %112, %113 : vector<8x128xf32>
    %115 = vector.extract_strided_slice %102 {offsets = [0, 256], sizes = [8, 128], strides = [1, 1]} : vector<8x512xf32> to vector<8x128xf32>
    %116 = math.tanh %115 : vector<8x128xf32>
    %117 = vector.extract_strided_slice %102 {offsets = [0, 384], sizes = [8, 128], strides = [1, 1]} : vector<8x512xf32> to vector<8x128xf32>
    %118 = arith.negf %117 : vector<8x128xf32>
    %119 = math.exp %118 : vector<8x128xf32>
    %cst_59 = arith.constant 1.000000e+00 : f32
    %120 = vector.broadcast %cst_59 : f32 to vector<8x128xf32>
    %121 = arith.addf %120, %119 : vector<8x128xf32>
    %122 = arith.divf %120, %121 : vector<8x128xf32>
    %123 = arith.mulf %114, %94 : vector<8x128xf32>
    %124 = arith.mulf %108, %116 : vector<8x128xf32>
    %125 = arith.addf %123, %124 : vector<8x128xf32>
    %126 = math.tanh %125 : vector<8x128xf32>
    %127 = arith.mulf %122, %126 : vector<8x128xf32>
    %c2_60 = arith.constant 2 : index
    %c0_61 = arith.constant 0 : index
    %c0_62 = arith.constant 0 : index
    %128 = vector.load %arg9[%c2_60, %c0_61, %c0_62] : memref<3x8x128xf32, #tpu.memory_space<vmem>>, vector<1x8x128xf32>
    %129 = vector.shape_cast %128 : vector<1x8x128xf32> to vector<8x128xf32>
    %130 = vector.shape_cast %127 : vector<8x128xf32> to vector<1x8x128xf32>
    tpu.vector_store %arg9[%c2_60, %c0_61, %c0_62], %130 {strides = array<i32>} : memref<3x8x128xf32, #tpu.memory_space<vmem>>, vector<1x8x128xf32>,
    %c2_63 = arith.constant 2 : index
    %c0_64 = arith.constant 0 : index
    %c0_65 = arith.constant 0 : index
    %131 = vector.load %arg10[%c2_63, %c0_64, %c0_65] : memref<3x8x128xf32, #tpu.memory_space<vmem>>, vector<1x8x128xf32>
    %132 = vector.shape_cast %131 : vector<1x8x128xf32> to vector<8x128xf32>
    %133 = vector.shape_cast %125 : vector<8x128xf32> to vector<1x8x128xf32>
    tpu.vector_store %arg10[%c2_63, %c0_64, %c0_65], %133 {strides = array<i32>} : memref<3x8x128xf32, #tpu.memory_space<vmem>>, vector<1x8x128xf32>,
    %c0_66 = arith.constant 0 : index
    %c0_67 = arith.constant 0 : index
    %134 = vector.load %arg6[%c0_66, %c0_67] : memref<128x128xf32, #tpu.memory_space<vmem>>, vector<128x128xf32>
    %cst_68 = arith.constant dense<0.000000e+00> : vector<8x128xf32>
    %135 = tpu.matmul %127, %134, %cst_68 {dimension_numbers = #tpu.dot_dimension_numbers<[1], [0], [0], [1], [0, 0, 1, 1], [], []>} : vector<8x128xf32>, vector<128x128xf32>, vector<8x128xf32> -> vector<8x128xf32>
    %c0_69 = arith.constant 0 : index
    %c0_70 = arith.constant 0 : index
    %136 = vector.load %arg7[%c0_69, %c0_70] : memref<1x128xf32, #tpu.memory_space<vmem>>, vector<1x128xf32>
    %137 = vector.broadcast %136 : vector<1x128xf32> to vector<8x128xf32>
    %138 = arith.addf %135, %137 : vector<8x128xf32>
    %c0_71 = arith.constant 0 : index
    %c0_72 = arith.constant 0 : index
    %c0_73 = arith.constant 0 : index
    %139 = vector.load %arg8[%c0_71, %c0_72, %c0_73] : memref<1x8x128xf32, #tpu.memory_space<vmem>>, vector<1x8x128xf32>
    %140 = vector.shape_cast %139 : vector<1x8x128xf32> to vector<8x128xf32>
    %141 = vector.shape_cast %138 : vector<8x128xf32> to vector<1x8x128xf32>
    tpu.vector_store %arg8[%c0_71, %c0_72, %c0_73], %141 {strides = array<i32>} : memref<1x8x128xf32, #tpu.memory_space<vmem>>, vector<1x8x128xf32>,
    return
  }
  func.func @transform_0(%arg0: i32) -> (i32, i32, i32) {
    %c0_i32 = arith.constant 0 : i32
    %c0_i32_0 = arith.constant 0 : i32
    %c0_i32_1 = arith.constant 0 : i32
    return %arg0, %c0_i32, %c0_i32_0 : i32, i32, i32
  }
  func.func @transform_1(%arg0: i32) -> (i32, i32, i32) {
    %c0_i32 = arith.constant 0 : i32
    %c0_i32_0 = arith.constant 0 : i32
    %c0_i32_1 = arith.constant 0 : i32
    %c0_i32_2 = arith.constant 0 : i32
    return %c0_i32, %c0_i32_0, %c0_i32_1 : i32, i32, i32
  }
  func.func @transform_2(%arg0: i32) -> (i32, i32, i32) {
    %c0_i32 = arith.constant 0 : i32
    %c0_i32_0 = arith.constant 0 : i32
    %c0_i32_1 = arith.constant 0 : i32
    %c0_i32_2 = arith.constant 0 : i32
    return %c0_i32, %c0_i32_0, %c0_i32_1 : i32, i32, i32
  }
  func.func @transform_3(%arg0: i32) -> (i32, i32, i32) {
    %c0_i32 = arith.constant 0 : i32
    %c0_i32_0 = arith.constant 0 : i32
    %c0_i32_1 = arith.constant 0 : i32
    %c0_i32_2 = arith.constant 0 : i32
    return %c0_i32, %c0_i32_0, %c0_i32_1 : i32, i32, i32
  }
  func.func @transform_4(%arg0: i32) -> (i32, i32, i32) {
    %c0_i32 = arith.constant 0 : i32
    %c0_i32_0 = arith.constant 0 : i32
    %c0_i32_1 = arith.constant 0 : i32
    %c0_i32_2 = arith.constant 0 : i32
    return %c0_i32, %c0_i32_0, %c0_i32_1 : i32, i32, i32
  }
  func.func @transform_5(%arg0: i32) -> (i32, i32) {
    %c0_i32 = arith.constant 0 : i32
    %c0_i32_0 = arith.constant 0 : i32
    %c0_i32_1 = arith.constant 0 : i32
    return %c0_i32, %c0_i32_0 : i32, i32
  }
  func.func @transform_6(%arg0: i32) -> (i32, i32) {
    %c0_i32 = arith.constant 0 : i32
    %c0_i32_0 = arith.constant 0 : i32
    %c0_i32_1 = arith.constant 0 : i32
    return %c0_i32, %c0_i32_0 : i32, i32
  }
  func.func @transform_7(%arg0: i32) -> (i32, i32, i32) {
    %c0_i32 = arith.constant 0 : i32
    %c0_i32_0 = arith.constant 0 : i32
    %c0_i32_1 = arith.constant 0 : i32
    return %arg0, %c0_i32, %c0_i32_0 : i32, i32, i32
  }
}

</mosaic_0001>

<llo_original>
// kernel: seq2seq_forward.2
$region0: #{seq2seq_forward.2}
  #allocation0 [shape = 'u32[]', space=smem, size = 0x4, offset = 0x4, fixed_abs, tag = 'smem constant byte address 0x4 - core index']
  #allocation1 [shape = 'u32[144,128]{1,0:T(1,128)}', space=vmem, size = 0x12000, scoped, tag = 'internal scratch']
  #allocation2 [shape = 'f32[2,8,128]{2,1,0:T(8,128)}', space=vmem, size = 0x2000, scoped, tag = 'scratch operand']
  #allocation3 [shape = 'f32[2,8,128]{2,1,0:T(8,128)}', space=vmem, size = 0x2000, scoped, tag = 'scratch operand']
  %s0 = inlined_call_operand.vmem [shape: f32[8,8,128], index: 0, kind: input, shape index: {}]
  %s1 = inlined_call_operand.hbm [shape: f32[2,256,512], index: 1, kind: input, shape index: {}]
  %s2 = inlined_call_operand.hbm [shape: f32[2,1,512], index: 2, kind: input, shape index: {}]
  %s3 = inlined_call_operand.vmem [shape: f32[2,8,128], index: 3, kind: output, shape index: {0}]
  %s4 = inlined_call_operand.vmem [shape: f32[2,8,128], index: 4, kind: output, shape index: {1}]
  %5 = xla_tuple %s3, %s4
  %s6 = sld [smem:[#allocation0]]
  $region69: #{seq2seq_forward.2} parent=0
    _
  %s8 = ssub.s32 1, %s6
  %s9 = scalar_select 0, %s8, %s6
  $region1: #{seq2seq_forward.2} parent=0
    #allocation4 [shape = 'u8[1048576]{0}', space=vmem, size = 0x100000, scoped, tag = 'input window, operand 1, single buffered']
    #allocation5 [shape = 's32[2]{0}', space=sflag, size = 0x8, scoped, tag = 'scoped memory for seq2seq_forward.2']
    #allocation6 [shape = 'u8[4096]{0}', space=vmem, size = 0x1000, scoped, tag = 'input window, operand 2, single buffered']
    #allocation7 [shape = 's32[1]{0}', space=sflag, size = 0x4, scoped, tag = 'scoped memory for seq2seq_forward.2']
    %10 = vsyncpa [#allocation5], 0
    %11 = vsyncpa [#allocation7], 0
    loop: start=0, step=1, limit=10
    $region2: #{seq2seq_forward.2} parent=1 // loop_pre_header
      _
    $region3: #{seq2seq_forward.2} parent=1 // loop_header
      %s13 = sphi 0, %s17
      %p14 = scmp.ge.s32.totalorder %s13, 10
      %s23 = sphi 0, %s25
      %s26 = sphi 0, %s23
      %s27 = sphi 0, %s26
      %s43 = sphi 0, %s27
      %s47 = sphi 0, %s47
      %s49 = sphi 0, %s47
      %s50 = sphi 0, %s49
      %s64 = sphi 0, %s50
      %s68 = sphi 0, %s68
      %s70 = sphi 0, %s68
      %s71 = sphi 0, %s70
      %s85 = sphi 0, %s71
      %s89 = sphi 0, %s89
      %s91 = sphi 0, %s89
      %s92 = sphi 0, %s91
      %s106 = sphi 0, %s92
      %s110 = sphi 0, %s110
      %s112 = sphi 0, %s110
      %s113 = sphi 0, %s112
      %s127 = sphi 0, %s113
    $region4: #{seq2seq_forward.2} parent=1 // loop_header_branch
      %16 = sbr.rel (%p14) target = $region8
    $region5: #{seq2seq_forward.2} parent=1 // loop_body
      %s18 = ssub.s32 %s13, 1
      %s19 = ssub.s32 %s13, 2
      %s20 = sadd.s32 %s13, 1
      %s21 = ssub.s32 %s13, %s20
      %p22 = scmp.eq.s32.totalorder %s21, 0
      %s24 = sadd.s32 %s23, 1
      %s25 = scalar_select %p22, %s23, %s24
      %p28 = pneg %p22
      %p29 = scmp.eq.s32.totalorder %s13, 7
      %p30 = por %p28, %p29
      %p31 = scmp.ne.s32.totalorder %s23, %s26
      %p32 = scmp.eq.s32.totalorder %s13, 0
      %p33 = por %p31, %p32
      %p34 = scmp.ne.s32.totalorder %s23, %s26
      %p35 = scmp.eq.s32.totalorder %s18, 7
      %p36 = por %p34, %p35
      %p37 = scmp.ne.s32.totalorder %s26, %s27
      %p38 = scmp.eq.s32.totalorder %s18, 0
      %p39 = por %p37, %p38
      %p40 = scmp.ne.s32.totalorder %s26, %s27
      %p41 = scmp.eq.s32.totalorder %s19, 7
      %p42 = por %p40, %p41
      %p44 = scmp.ne.s32.totalorder %s27, %s43
      %p45 = scmp.eq.s32.totalorder %s19, 0
      %p46 = por %p44, %p45
      %s48 = sadd.s32 %s47, 1
      %p51 = scmp.eq.s32.totalorder %s13, 7
      %p52 = scmp.ne.s32.totalorder %s47, %s49
      %p53 = scmp.eq.s32.totalorder %s13, 0
      %p54 = por %p52, %p53
      %p55 = scmp.ne.s32.totalorder %s47, %s49
      %p56 = scmp.eq.s32.totalorder %s18, 7
      %p57 = por %p55, %p56
      %p58 = scmp.ne.s32.totalorder %s49, %s50
      %p59 = scmp.eq.s32.totalorder %s18, 0
      %p60 = por %p58, %p59
      %p61 = scmp.ne.s32.totalorder %s49, %s50
      %p62 = scmp.eq.s32.totalorder %s19, 7
      %p63 = por %p61, %p62
      %p65 = scmp.ne.s32.totalorder %s50, %s64
      %p66 = scmp.eq.s32.totalorder %s19, 0
      %p67 = por %p65, %p66
      %s69 = sadd.s32 %s68, 1
      %p72 = scmp.eq.s32.totalorder %s13, 7
      %p73 = scmp.ne.s32.totalorder %s68, %s70
      %p74 = scmp.eq.s32.totalorder %s13, 0
      %p75 = por %p73, %p74
      %p76 = scmp.ne.s32.totalorder %s68, %s70
      %p77 = scmp.eq.s32.totalorder %s18, 7
      %p78 = por %p76, %p77
      %p79 = scmp.ne.s32.totalorder %s70, %s71
      %p80 = scmp.eq.s32.totalorder %s18, 0
      %p81 = por %p79, %p80
      %p82 = scmp.ne.s32.totalorder %s70, %s71
      %p83 = scmp.eq.s32.totalorder %s19, 7
      %p84 = por %p82, %p83
      %p86 = scmp.ne.s32.totalorder %s71, %s85
      %p87 = scmp.eq.s32.totalorder %s19, 0
      %p88 = por %p86, %p87
      %s90 = sadd.s32 %s89, 1
      %p93 = scmp.eq.s32.totalorder %s13, 7
      %p94 = scmp.ne.s32.totalorder %s89, %s91
      %p95 = scmp.eq.s32.totalorder %s13, 0
      %p96 = por %p94, %p95
      %p97 = scmp.ne.s32.totalorder %s89, %s91
      %p98 = scmp.eq.s32.totalorder %s18, 7
      %p99 = por %p97, %p98
      %p100 = scmp.ne.s32.totalorder %s91, %s92
      %p101 = scmp.eq.s32.totalorder %s18, 0
      %p102 = por %p100, %p101
      %p103 = scmp.ne.s32.totalorder %s91, %s92
      %p104 = scmp.eq.s32.totalorder %s19, 7
      %p105 = por %p103, %p104
      %p107 = scmp.ne.s32.totalorder %s92, %s106
      %p108 = scmp.eq.s32.totalorder %s19, 0
      %p109 = por %p107, %p108
      %s111 = sadd.s32 %s110, 1
      %p114 = scmp.eq.s32.totalorder %s13, 7
      %p115 = scmp.ne.s32.totalorder %s110, %s112
      %p116 = scmp.eq.s32.totalorder %s13, 0
      %p117 = por %p115, %p116
      %p118 = scmp.ne.s32.totalorder %s110, %s112
      %p119 = scmp.eq.s32.totalorder %s18, 7
      %p120 = por %p118, %p119
      %p121 = scmp.ne.s32.totalorder %s112, %s113
      %p122 = scmp.eq.s32.totalorder %s18, 0
      %p123 = por %p121, %p122
      %p124 = scmp.ne.s32.totalorder %s112, %s113
      %p125 = scmp.eq.s32.totalorder %s19, 7
      %p126 = por %p124, %p125
      %p128 = scmp.ne.s32.totalorder %s113, %s127
      %p129 = scmp.eq.s32.totalorder %s19, 0
      %p130 = por %p128, %p129
      %p131 = scmp.le.s32.totalorder 1, %s13
      %p132 = scmp.lt.s32.totalorder %s13, 9
      %p133 = pnand %p131, %p132
      %p134 = pneg %p133
      // Predicated region
      $region9: #{seq2seq_forward.2} parent=5 // pred_check
        _
      $region10: #{seq2seq_forward.2} parent=5 // pred_check_branch
        %136 = sbr.rel (%p133) target = $region12
      $region11: #{seq2seq_forward.2} parent=5 // pred_region
        %s137 = ssub.s32 %s13, 1
        // Predicated region
        $region13: #{seq2seq_forward.2} parent=11 // pred_check
          %p138 = pneg %p60
        $region14: #{seq2seq_forward.2} parent=11 // pred_check_branch
          %140 = sbr.rel (%p138) target = $region16
        $region15: #{seq2seq_forward.2} parent=11 // pred_region
          %s142 = ssub.s32 32768, 32768
          %143 = vsyncadd [#allocation5], %s142
          %s144 = sshll.u32 [#allocation4], 4
          %s145 = int_to_ptr.vmem [resolvable:$true] %s144
          %150 = dma.hbm_to_vmem [thread:$0]  %s1, 32768, %s145, [#allocation5], 512, 512, 32
        $region16: #{seq2seq_forward.2} parent=11 // pred_fallthru
          _
        // Predicated region
        $region17: #{seq2seq_forward.2} parent=11 // pred_check
          %p151 = pneg %p81
        $region18: #{seq2seq_forward.2} parent=11 // pred_check_branch
          %153 = sbr.rel (%p151) target = $region20
        $region19: #{seq2seq_forward.2} parent=11 // pred_region
          %s155 = ssub.s32 128, 128
          %156 = vsyncadd [#allocation7], %s155
          %s157 = sshll.u32 [#allocation6], 4
          %s158 = int_to_ptr.vmem [resolvable:$true] %s157
          %163 = dma.hbm_to_vmem [thread:$0]  %s2, 128, %s158, [#allocation7], 64, 64, 4
        $region20: #{seq2seq_forward.2} parent=11 // pred_fallthru
          _
      $region12: #{seq2seq_forward.2} parent=5 // pred_fallthru
        _
      %p164 = scmp.lt.s32.totalorder %s13, 8
      // Predicated region
      $region21: #{seq2seq_forward.2} parent=5 // pred_check
        %p165 = pneg %p164
      $region22: #{seq2seq_forward.2} parent=5 // pred_check_branch
        %167 = sbr.rel (%p165) target = $region24
      $region23: #{seq2seq_forward.2} parent=5 // pred_region
        // Predicated region
        $region25: #{seq2seq_forward.2} parent=23 // pred_check
          %p168 = pneg %p33
        $region26: #{seq2seq_forward.2} parent=23 // pred_check_branch
          %170 = sbr.rel (%p168) target = $region28
        $region27: #{seq2seq_forward.2} parent=23 // pred_region
          %p171 = scmp.lt.s32.totalorder %s13, 7
          %s172 = scalar_select %p171, %s13, 7
          %s173 = smul.addr %s172, 8
          %s174 = scalar_lea.vmem %s0, %s173
        $region28: #{seq2seq_forward.2} parent=23 // pred_fallthru
          _
      $region24: #{seq2seq_forward.2} parent=5 // pred_fallthru
        _
      %p175 = scmp.le.s32.totalorder 1, %s13
      %p176 = scmp.lt.s32.totalorder %s13, 9
      %p177 = pnand %p175, %p176
      %p178 = pneg %p177
      // Predicated region
      $region29: #{seq2seq_forward.2} parent=5 // pred_check
        _
      $region30: #{seq2seq_forward.2} parent=5 // pred_check_branch
        %180 = sbr.rel (%p177) target = $region32
      $region31: #{seq2seq_forward.2} parent=5 // pred_region
        %s181 = ssub.s32 %s13, 1
        // Predicated region
        $region33: #{seq2seq_forward.2} parent=31 // pred_check
          %p182 = pneg %p60
        $region34: #{seq2seq_forward.2} parent=31 // pred_check_branch
          %184 = sbr.rel (%p182) target = $region36
        $region35: #{seq2seq_forward.2} parent=31 // pred_region
          %185 = dma.done [#allocation5], 32768
        $region36: #{seq2seq_forward.2} parent=31 // pred_fallthru
          _
        // Predicated region
        $region37: #{seq2seq_forward.2} parent=31 // pred_check
          %p186 = pneg %p81
        $region38: #{seq2seq_forward.2} parent=31 // pred_check_branch
          %188 = sbr.rel (%p186) target = $region40
        $region39: #{seq2seq_forward.2} parent=31 // pred_region
          %189 = dma.done [#allocation7], 128
        $region40: #{seq2seq_forward.2} parent=31 // pred_fallthru
          _
        %p190 = scmp.lt.s32.totalorder %s18, 7
        %s191 = scalar_select %p190, %s18, 7
        %s192 = smul.addr %s191, 8
        %s193 = scalar_lea.vmem %s0, %s192
        %p194 = pneg %p39
        %p195 = pneg %p36
        %p196 = pneg %p60
        %p197 = pneg %p57
        %p198 = pneg %p81
        %p199 = pneg %p78
        %p200 = pneg %p102
        %p201 = pneg %p99
        %p202 = pneg %p123
        %p203 = pneg %p120
        %p204 = scmp.lt.s32.totalorder %s18, 7
        %s205 = scalar_select %p204, %s18, 7
        %s206 = smul.addr %s205, 8
        %s207 = scalar_lea.vmem %s0, %s206
        %p208 = scmp.eq.s32.totalorder %s18, 0
        // Predicated region
        $region41: #{seq2seq_forward.2} parent=31 // pred_check
          %p209 = pneg %p208
        $region42: #{seq2seq_forward.2} parent=31 // pred_check_branch
          %211 = sbr.rel (%p209) target = $region44
        $region43: #{seq2seq_forward.2} parent=31 // pred_region
          %212 = vst [vmem:[#allocation2] sm:$0xff] 0.0
          %213 = vst [vmem:[#allocation2 + $0x8] sm:$0xff] 0.0
          %214 = vst [vmem:[#allocation3] sm:$0xff] 0.0
          %215 = vst [vmem:[#allocation3 + $0x8] sm:$0xff] 0.0
        $region44: #{seq2seq_forward.2} parent=31 // pred_fallthru
          _
        %v216 = vld [vmem:[%s207] sm:$0xff]
        %v217 = vld [vmem:[#allocation2] sm:$0xff]
        %v218 = vld [vmem:[#allocation3] sm:$0xff]
        %v219 = vld [vmem:[#allocation4] sm:$0xff]
        %v220 = vld [vmem:[#allocation4 + $0x8] sm:$0xff]
        %v221 = vld [vmem:[#allocation4 + $0x10] sm:$0xff]
        %v222 = vld [vmem:[#allocation4 + $0x18] sm:$0xff]
        %v223 = vld [vmem:[#allocation4 + $0x20] sm:$0xff]
        %v224 = vld [vmem:[#allocation4 + $0x28] sm:$0xff]
        %v225 = vld [vmem:[#allocation4 + $0x30] sm:$0xff]
        %v226 = vld [vmem:[#allocation4 + $0x38] sm:$0xff]
        %v227 = vld [vmem:[#allocation4 + $0x40] sm:$0xff]
        %v228 = vld [vmem:[#allocation4 + $0x48] sm:$0xff]
        %v229 = vld [vmem:[#allocation4 + $0x50] sm:$0xff]
        %v230 = vld [vmem:[#allocation4 + $0x58] sm:$0xff]
        %v231 = vld [vmem:[#allocation4 + $0x60] sm:$0xff]
        %v232 = vld [vmem:[#allocation4 + $0x68] sm:$0xff]
        %v233 = vld [vmem:[#allocation4 + $0x70] sm:$0xff]
        %v234 = vld [vmem:[#allocation4 + $0x78] sm:$0xff]
        %v235 = vld [vmem:[#allocation4 + $0x80] sm:$0xff]
        %v236 = vld [vmem:[#allocation4 + $0x88] sm:$0xff]
        %v237 = vld [vmem:[#allocation4 + $0x90] sm:$0xff]
        %v238 = vld [vmem:[#allocation4 + $0x98] sm:$0xff]
        %v239 = vld [vmem:[#allocation4 + $0xa0] sm:$0xff]
        %v240 = vld [vmem:[#allocation4 + $0xa8] sm:$0xff]
        %v241 = vld [vmem:[#allocation4 + $0xb0] sm:$0xff]
        %v242 = vld [vmem:[#allocation4 + $0xb8] sm:$0xff]
        %v243 = vld [vmem:[#allocation4 + $0xc0] sm:$0xff]
        %v244 = vld [vmem:[#allocation4 + $0xc8] sm:$0xff]
        %v245 = vld [vmem:[#allocation4 + $0xd0] sm:$0xff]
        %v246 = vld [vmem:[#allocation4 + $0xd8] sm:$0xff]
        %v247 = vld [vmem:[#allocation4 + $0xe0] sm:$0xff]
        %v248 = vld [vmem:[#allocation4 + $0xe8] sm:$0xff]
        %v249 = vld [vmem:[#allocation4 + $0xf0] sm:$0xff]
        %v250 = vld [vmem:[#allocation4 + $0xf8] sm:$0xff]
        %v251 = vld [vmem:[#allocation4 + $0x100] sm:$0xff]
        %v252 = vld [vmem:[#allocation4 + $0x108] sm:$0xff]
        %v253 = vld [vmem:[#allocation4 + $0x110] sm:$0xff]
        %v254 = vld [vmem:[#allocation4 + $0x118] sm:$0xff]
        %v255 = vld [vmem:[#allocation4 + $0x120] sm:$0xff]
        %v256 = vld [vmem:[#allocation4 + $0x128] sm:$0xff]
        %v257 = vld [vmem:[#allocation4 + $0x130] sm:$0xff]
        %v258 = vld [vmem:[#allocation4 + $0x138] sm:$0xff]
        %v259 = vld [vmem:[#allocation4 + $0x140] sm:$0xff]
        %v260 = vld [vmem:[#allocation4 + $0x148] sm:$0xff]
        %v261 = vld [vmem:[#allocation4 + $0x150] sm:$0xff]
        %v262 = vld [vmem:[#allocation4 + $0x158] sm:$0xff]
        %v263 = vld [vmem:[#allocation4 + $0x160] sm:$0xff]
        %v264 = vld [vmem:[#allocation4 + $0x168] sm:$0xff]
        %v265 = vld [vmem:[#allocation4 + $0x170] sm:$0xff]
        %v266 = vld [vmem:[#allocation4 + $0x178] sm:$0xff]
        %v267 = vld [vmem:[#allocation4 + $0x180] sm:$0xff]
        %v268 = vld [vmem:[#allocation4 + $0x188] sm:$0xff]
        %v269 = vld [vmem:[#allocation4 + $0x190] sm:$0xff]
        %v270 = vld [vmem:[#allocation4 + $0x198] sm:$0xff]
        %v271 = vld [vmem:[#allocation4 + $0x1a0] sm:$0xff]
        %v272 = vld [vmem:[#allocation4 + $0x1a8] sm:$0xff]
        %v273 = vld [vmem:[#allocation4 + $0x1b0] sm:$0xff]
        %v274 = vld [vmem:[#allocation4 + $0x1b8] sm:$0xff]
        %v275 = vld [vmem:[#allocation4 + $0x1c0] sm:$0xff]
        %v276 = vld [vmem:[#allocation4 + $0x1c8] sm:$0xff]
        %v277 = vld [vmem:[#allocation4 + $0x1d0] sm:$0xff]
        %v278 = vld [vmem:[#allocation4 + $0x1d8] sm:$0xff]
        %v279 = vld [vmem:[#allocation4 + $0x1e0] sm:$0xff]
        %v280 = vld [vmem:[#allocation4 + $0x1e8] sm:$0xff]
        %v281 = vld [vmem:[#allocation4 + $0x1f0] sm:$0xff]
        %v282 = vld [vmem:[#allocation4 + $0x1f8] sm:$0xff]
        %v283 = vld [vmem:[#allocation4 + $0x200] sm:$0xff]
        %v284 = vld [vmem:[#allocation4 + $0x208] sm:$0xff]
        %v285 = vld [vmem:[#allocation4 + $0x210] sm:$0xff]
        %v286 = vld [vmem:[#allocation4 + $0x218] sm:$0xff]
        %v287 = vld [vmem:[#allocation4 + $0x220] sm:$0xff]
        %v288 = vld [vmem:[#allocation4 + $0x228] sm:$0xff]
        %v289 = vld [vmem:[#allocation4 + $0x230] sm:$0xff]
        %v290 = vld [vmem:[#allocation4 + $0x238] sm:$0xff]
        %v291 = vld [vmem:[#allocation4 + $0x240] sm:$0xff]
        %v292 = vld [vmem:[#allocation4 + $0x248] sm:$0xff]
        %v293 = vld [vmem:[#allocation4 + $0x250] sm:$0xff]
        %v294 = vld [vmem:[#allocation4 + $0x258] sm:$0xff]
        %v295 = vld [vmem:[#allocation4 + $0x260] sm:$0xff]
        %v296 = vld [vmem:[#allocation4 + $0x268] sm:$0xff]
        %v297 = vld [vmem:[#allocation4 + $0x270] sm:$0xff]
        %v298 = vld [vmem:[#allocation4 + $0x278] sm:$0xff]
        %v299 = vld [vmem:[#allocation4 + $0x280] sm:$0xff]
        %v300 = vld [vmem:[#allocation4 + $0x288] sm:$0xff]
        %v301 = vld [vmem:[#allocation4 + $0x290] sm:$0xff]
        %v302 = vld [vmem:[#allocation4 + $0x298] sm:$0xff]
        %v303 = vld [vmem:[#allocation4 + $0x2a0] sm:$0xff]
        %v304 = vld [vmem:[#allocation4 + $0x2a8] sm:$0xff]
        %v305 = vld [vmem:[#allocation4 + $0x2b0] sm:$0xff]
        %v306 = vld [vmem:[#allocation4 + $0x2b8] sm:$0xff]
        %v307 = vld [vmem:[#allocation4 + $0x2c0] sm:$0xff]
        %v308 = vld [vmem:[#allocation4 + $0x2c8] sm:$0xff]
        %v309 = vld [vmem:[#allocation4 + $0x2d0] sm:$0xff]
        %v310 = vld [vmem:[#allocation4 + $0x2d8] sm:$0xff]
        %v311 = vld [vmem:[#allocation4 + $0x2e0] sm:$0xff]
        %v312 = vld [vmem:[#allocation4 + $0x2e8] sm:$0xff]
        %v313 = vld [vmem:[#allocation4 + $0x2f0] sm:$0xff]
        %v314 = vld [vmem:[#allocation4 + $0x2f8] sm:$0xff]
        %v315 = vld [vmem:[#allocation4 + $0x300] sm:$0xff]
        %v316 = vld [vmem:[#allocation4 + $0x308] sm:$0xff]
        %v317 = vld [vmem:[#allocation4 + $0x310] sm:$0xff]
        %v318 = vld [vmem:[#allocation4 + $0x318] sm:$0xff]
        %v319 = vld [vmem:[#allocation4 + $0x320] sm:$0xff]
        %v320 = vld [vmem:[#allocation4 + $0x328] sm:$0xff]
        %v321 = vld [vmem:[#allocation4 + $0x330] sm:$0xff]
        %v322 = vld [vmem:[#allocation4 + $0x338] sm:$0xff]
        %v323 = vld [vmem:[#allocation4 + $0x340] sm:$0xff]
        %v324 = vld [vmem:[#allocation4 + $0x348] sm:$0xff]
        %v325 = vld [vmem:[#allocation4 + $0x350] sm:$0xff]
        %v326 = vld [vmem:[#allocation4 + $0x358] sm:$0xff]
        %v327 = vld [vmem:[#allocation4 + $0x360] sm:$0xff]
        %v328 = vld [vmem:[#allocation4 + $0x368] sm:$0xff]
        %v329 = vld [vmem:[#allocation4 + $0x370] sm:$0xff]
        %v330 = vld [vmem:[#allocation4 + $0x378] sm:$0xff]
        %v331 = vld [vmem:[#allocation4 + $0x380] sm:$0xff]
        %v332 = vld [vmem:[#allocation4 + $0x388] sm:$0xff]
        %v333 = vld [vmem:[#allocation4 + $0x390] sm:$0xff]
        %v334 = vld [vmem:[#allocation4 + $0x398] sm:$0xff]
        %v335 = vld [vmem:[#allocation4 + $0x3a0] sm:$0xff]
        %v336 = vld [vmem:[#allocation4 + $0x3a8] sm:$0xff]
        %v337 = vld [vmem:[#allocation4 + $0x3b0] sm:$0xff]
        %v338 = vld [vmem:[#allocation4 + $0x3b8] sm:$0xff]
        %v339 = vld [vmem:[#allocation4 + $0x3c0] sm:$0xff]
        %v340 = vld [vmem:[#allocation4 + $0x3c8] sm:$0xff]
        %v341 = vld [vmem:[#allocation4 + $0x3d0] sm:$0xff]
        %v342 = vld [vmem:[#allocation4 + $0x3d8] sm:$0xff]
        %v343 = vld [vmem:[#allocation4 + $0x3e0] sm:$0xff]
        %v344 = vld [vmem:[#allocation4 + $0x3e8] sm:$0xff]
        %v345 = vld [vmem:[#allocation4 + $0x3f0] sm:$0xff]
        %v346 = vld [vmem:[#allocation4 + $0x3f8] sm:$0xff]
        %v347 = vld [vmem:[#allocation6] sm:$0xf]
        %v349 = vlaneseq
        %v350 = vshrl.u32 %v349, 7
        %v351 = vsub.s32 0, %v350
        %v352 = vrot.slane %v347, %v351
        %v353 = vlaneseq
        %v354 = vshrl.u32 %v353, 7
        %v355 = vsub.s32 1, %v354
        %v356 = vrot.slane %v347, %v355
        %v357 = vlaneseq
        %v358 = vshrl.u32 %v357, 7
        %v359 = vsub.s32 2, %v358
        %v360 = vrot.slane %v347, %v359
        %v361 = vlaneseq
        %v362 = vshrl.u32 %v361, 7
        %v363 = vsub.s32 3, %v362
        %v364 = vrot.slane %v347, %v363
        %369 = vmatprep.subr.mxu0 %v280
        %370 = vmatpush1.msra.mxu0 %v279
        %371 = vmatprep.subr.mxu0 %v276
        %372 = vmatpush1.msra.mxu0 %v275
        %373 = vmatprep.subr.mxu0 %v272
        %374 = vmatpush1.msra.mxu0 %v271
        %375 = vmatprep.subr.mxu0 %v268
        %376 = vmatpush1.msra.mxu0 %v267
        %377 = vmatprep.subr.mxu0 %v264
        %378 = vmatpush1.msra.mxu0 %v263
        %379 = vmatprep.subr.mxu0 %v260
        %380 = vmatpush1.msra.mxu0 %v259
        %381 = vmatprep.subr.mxu0 %v256
        %382 = vmatpush1.msra.mxu0 %v255
        %383 = vmatprep.subr.mxu0 %v252
        %384 = vmatpush1.msra.mxu0 %v251
        %385 = vmatprep.subr.mxu0 %v248
        %386 = vmatpush1.msra.mxu0 %v247
        %387 = vmatprep.subr.mxu0 %v244
        %388 = vmatpush1.msra.mxu0 %v243
        %389 = vmatprep.subr.mxu0 %v240
        %390 = vmatpush1.msra.mxu0 %v239
        %391 = vmatprep.subr.mxu0 %v236
        %392 = vmatpush1.msra.mxu0 %v235
        %393 = vmatprep.subr.mxu0 %v232
        %394 = vmatpush1.msra.mxu0 %v231
        %395 = vmatprep.subr.mxu0 %v228
        %396 = vmatpush1.msra.mxu0 %v227
        %397 = vmatprep.subr.mxu0 %v224
        %398 = vmatpush1.msra.mxu0 %v223
        %399 = vmatprep.subr.mxu0 %v220
        %400 = vmatpush1.msra.mxu0 %v219
        %401 = vmatprep.subr.mxu0 %v344
        %402 = vmatpush2.msra.mxu0 %v343
        %403 = vmatprep.subr.mxu0 %v340
        %404 = vmatpush2.msra.mxu0 %v339
        %405 = vmatprep.subr.mxu0 %v336
        %406 = vmatpush2.msra.mxu0 %v335
        %407 = vmatprep.subr.mxu0 %v332
        %408 = vmatpush2.msra.mxu0 %v331
        %409 = vmatprep.subr.mxu0 %v328
        %410 = vmatpush2.msra.mxu0 %v327
        %411 = vmatprep.subr.mxu0 %v324
        %412 = vmatpush2.msra.mxu0 %v323
        %413 = vmatprep.subr.mxu0 %v320
        %414 = vmatpush2.msra.mxu0 %v319
        %415 = vmatprep.subr.mxu0 %v316
        %416 = vmatpush2.msra.mxu0 %v315
        %417 = vmatprep.subr.mxu0 %v312
        %418 = vmatpush2.msra.mxu0 %v311
        %419 = vmatprep.subr.mxu0 %v308
        %420 = vmatpush2.msra.mxu0 %v307
        %421 = vmatprep.subr.mxu0 %v304
        %422 = vmatpush2.msra.mxu0 %v303
        %423 = vmatprep.subr.mxu0 %v300
        %424 = vmatpush2.msra.mxu0 %v299
        %425 = vmatprep.subr.mxu0 %v296
        %426 = vmatpush2.msra.mxu0 %v295
        %427 = vmatprep.subr.mxu0 %v292
        %428 = vmatpush2.msra.mxu0 %v291
        %429 = vmatprep.subr.mxu0 %v288
        %430 = vmatpush2.msra.mxu0 %v287
        %431 = vmatprep.subr.mxu0 %v284
        %432 = vmatpush2.msra.mxu0 %v283
        %433 = vmatprep.mubr.f32.mxu0 %v217
        %434 = vmatmul.mubr.f32.gmra.mxu0 %v216
        %v435 = vpop.f32.mrf.mxu0
        %v436 = vadd.f32 %v352, %v435
        %v437 = vpop.f32.mrf.mxu0
        %v438 = vadd.f32 %v356, %v437
        %439 = vdwg.mxu0
        %440 = vmatprep.subr.mxu0 %v282
        %441 = vmatpush1.msra.mxu0 %v281
        %442 = vmatprep.subr.mxu0 %v278
        %443 = vmatpush1.msra.mxu0 %v277
        %444 = vmatprep.subr.mxu0 %v274
        %445 = vmatpush1.msra.mxu0 %v273
        %446 = vmatprep.subr.mxu0 %v270
        %447 = vmatpush1.msra.mxu0 %v269
        %448 = vmatprep.subr.mxu0 %v266
        %449 = vmatpush1.msra.mxu0 %v265
        %450 = vmatprep.subr.mxu0 %v262
        %451 = vmatpush1.msra.mxu0 %v261
        %452 = vmatprep.subr.mxu0 %v258
        %453 = vmatpush1.msra.mxu0 %v257
        %454 = vmatprep.subr.mxu0 %v254
        %455 = vmatpush1.msra.mxu0 %v253
        %456 = vmatprep.subr.mxu0 %v250
        %457 = vmatpush1.msra.mxu0 %v249
        %458 = vmatprep.subr.mxu0 %v246
        %459 = vmatpush1.msra.mxu0 %v245
        %460 = vmatprep.subr.mxu0 %v242
        %461 = vmatpush1.msra.mxu0 %v241
        %462 = vmatprep.subr.mxu0 %v238
        %463 = vmatpush1.msra.mxu0 %v237
        %464 = vmatprep.subr.mxu0 %v234
        %465 = vmatpush1.msra.mxu0 %v233
        %466 = vmatprep.subr.mxu0 %v230
        %467 = vmatpush1.msra.mxu0 %v229
        %468 = vmatprep.subr.mxu0 %v226
        %469 = vmatpush1.msra.mxu0 %v225
        %470 = vmatprep.subr.mxu0 %v222
        %471 = vmatpush1.msra.mxu0 %v221
        %472 = vmatprep.subr.mxu0 %v346
        %473 = vmatpush2.msra.mxu0 %v345
        %474 = vmatprep.subr.mxu0 %v342
        %475 = vmatpush2.msra.mxu0 %v341
        %476 = vmatprep.subr.mxu0 %v338
        %477 = vmatpush2.msra.mxu0 %v337
        %478 = vmatprep.subr.mxu0 %v334
        %479 = vmatpush2.msra.mxu0 %v333
        %480 = vmatprep.subr.mxu0 %v330
        %481 = vmatpush2.msra.mxu0 %v329
        %482 = vmatprep.subr.mxu0 %v326
        %483 = vmatpush2.msra.mxu0 %v325
        %484 = vmatprep.subr.mxu0 %v322
        %485 = vmatpush2.msra.mxu0 %v321
        %486 = vmatprep.subr.mxu0 %v318
        %487 = vmatpush2.msra.mxu0 %v317
        %488 = vmatprep.subr.mxu0 %v314
        %489 = vmatpush2.msra.mxu0 %v313
        %490 = vmatprep.subr.mxu0 %v310
        %491 = vmatpush2.msra.mxu0 %v309
        %492 = vmatprep.subr.mxu0 %v306
        %493 = vmatpush2.msra.mxu0 %v305
        %494 = vmatprep.subr.mxu0 %v302
        %495 = vmatpush2.msra.mxu0 %v301
        %496 = vmatprep.subr.mxu0 %v298
        %497 = vmatpush2.msra.mxu0 %v297
        %498 = vmatprep.subr.mxu0 %v294
        %499 = vmatpush2.msra.mxu0 %v293
        %500 = vmatprep.subr.mxu0 %v290
        %501 = vmatpush2.msra.mxu0 %v289
        %502 = vmatprep.subr.mxu0 %v286
        %503 = vmatpush2.msra.mxu0 %v285
        %504 = vmatprep.mubr.f32.mxu0 %v217
        %505 = vmatmul.mubr.f32.gmra.mxu0 %v216
        %v506 = vpop.f32.mrf.mxu0
        %v507 = vadd.f32 %v360, %v506
        %v508 = vpop.f32.mrf.mxu0
        %v509 = vadd.f32 %v364, %v508
        %510 = vdwg.mxu0
        %v511 = vxor.u32 %v436, 2147483648
        %v512 = vmul.f32 %v511, 1.442695
        %v513 = vpow.pop %v512
        %v514 = vadd.f32 %v513, 1.0
        %v515 = vrcp.pop %v514
        %v516 = vmul.f32 1.0, %v515
        %v517 = vxor.u32 %v438, 2147483648
        %v518 = vmul.f32 %v517, 1.442695
        %v519 = vpow.pop %v518
        %v520 = vadd.f32 %v519, 1.0
        %v521 = vrcp.pop %v520
        %v522 = vmul.f32 1.0, %v521
        %v523 = vtanh.pop %v507
        %v524 = vxor.u32 %v509, 2147483648
        %v525 = vmul.f32 %v524, 1.442695
        %v526 = vpow.pop %v525
        %v527 = vadd.f32 %v526, 1.0
        %v528 = vrcp.pop %v527
        %v529 = vmul.f32 1.0, %v528
        %v530 = vmul.f32 %v522, %v218
        %v531 = vmul.f32 %v516, %v523
        %v532 = vadd.f32 %v530, %v531
        %v533 = vtanh.pop %v532
        %v534 = vmul.f32 %v529, %v533
        %535 = vst [vmem:[#allocation2] sm:$0xff] %v534
        %536 = vst [vmem:[#allocation3] sm:$0xff] %v532
        %s537 = scalar_lea.vmem [#allocation2], 8
        %v538 = vld [vmem:[%s537] sm:$0xff]
        %s539 = scalar_lea.vmem [#allocation3], 8
        %v540 = vld [vmem:[%s539] sm:$0xff]
        %s541 = scalar_lea.vmem [#allocation4], 1024
        %v542 = vld [vmem:[%s541] sm:$0xff]
        %v543 = vld [vmem:[%s541 + $0x8] sm:$0xff]
        %v544 = vld [vmem:[%s541 + $0x10] sm:$0xff]
        %v545 = vld [vmem:[%s541 + $0x18] sm:$0xff]
        %v546 = vld [vmem:[%s541 + $0x20] sm:$0xff]
        %v547 = vld [vmem:[%s541 + $0x28] sm:$0xff]
        %v548 = vld [vmem:[%s541 + $0x30] sm:$0xff]
        %v549 = vld [vmem:[%s541 + $0x38] sm:$0xff]
        %v550 = vld [vmem:[%s541 + $0x40] sm:$0xff]
        %v551 = vld [vmem:[%s541 + $0x48] sm:$0xff]
        %v552 = vld [vmem:[%s541 + $0x50] sm:$0xff]
        %v553 = vld [vmem:[%s541 + $0x58] sm:$0xff]
        %v554 = vld [vmem:[%s541 + $0x60] sm:$0xff]
        %v555 = vld [vmem:[%s541 + $0x68] sm:$0xff]
        %v556 = vld [vmem:[%s541 + $0x70] sm:$0xff]
        %v557 = vld [vmem:[%s541 + $0x78] sm:$0xff]
        %v558 = vld [vmem:[%s541 + $0x80] sm:$0xff]
        %v559 = vld [vmem:[%s541 + $0x88] sm:$0xff]
        %v560 = vld [vmem:[%s541 + $0x90] sm:$0xff]
        %v561 = vld [vmem:[%s541 + $0x98] sm:$0xff]
        %v562 = vld [vmem:[%s541 + $0xa0] sm:$0xff]
        %v563 = vld [vmem:[%s541 + $0xa8] sm:$0xff]
        %v564 = vld [vmem:[%s541 + $0xb0] sm:$0xff]
        %v565 = vld [vmem:[%s541 + $0xb8] sm:$0xff]
        %v566 = vld [vmem:[%s541 + $0xc0] sm:$0xff]
        %v567 = vld [vmem:[%s541 + $0xc8] sm:$0xff]
        %v568 = vld [vmem:[%s541 + $0xd0] sm:$0xff]
        %v569 = vld [vmem:[%s541 + $0xd8] sm:$0xff]
        %v570 = vld [vmem:[%s541 + $0xe0] sm:$0xff]
        %v571 = vld [vmem:[%s541 + $0xe8] sm:$0xff]
        %v572 = vld [vmem:[%s541 + $0xf0] sm:$0xff]
        %v573 = vld [vmem:[%s541 + $0xf8] sm:$0xff]
        %v574 = vld [vmem:[%s541 + $0x100] sm:$0xff]
        %v575 = vld [vmem:[%s541 + $0x108] sm:$0xff]
        %v576 = vld [vmem:[%s541 + $0x110] sm:$0xff]
        %v577 = vld [vmem:[%s541 + $0x118] sm:$0xff]
        %v578 = vld [vmem:[%s541 + $0x120] sm:$0xff]
        %v579 = vld [vmem:[%s541 + $0x128] sm:$0xff]
        %v580 = vld [vmem:[%s541 + $0x130] sm:$0xff]
        %v581 = vld [vmem:[%s541 + $0x138] sm:$0xff]
        %v582 = vld [vmem:[%s541 + $0x140] sm:$0xff]
        %v583 = vld [vmem:[%s541 + $0x148] sm:$0xff]
        %v584 = vld [vmem:[%s541 + $0x150] sm:$0xff]
        %v585 = vld [vmem:[%s541 + $0x158] sm:$0xff]
        %v586 = vld [vmem:[%s541 + $0x160] sm:$0xff]
        %v587 = vld [vmem:[%s541 + $0x168] sm:$0xff]
        %v588 = vld [vmem:[%s541 + $0x170] sm:$0xff]
        %v589 = vld [vmem:[%s541 + $0x178] sm:$0xff]
        %v590 = vld [vmem:[%s541 + $0x180] sm:$0xff]
        %v591 = vld [vmem:[%s541 + $0x188] sm:$0xff]
        %v592 = vld [vmem:[%s541 + $0x190] sm:$0xff]
        %v593 = vld [vmem:[%s541 + $0x198] sm:$0xff]
        %v594 = vld [vmem:[%s541 + $0x1a0] sm:$0xff]
        %v595 = vld [vmem:[%s541 + $0x1a8] sm:$0xff]
        %v596 = vld [vmem:[%s541 + $0x1b0] sm:$0xff]
        %v597 = vld [vmem:[%s541 + $0x1b8] sm:$0xff]
        %v598 = vld [vmem:[%s541 + $0x1c0] sm:$0xff]
        %v599 = vld [vmem:[%s541 + $0x1c8] sm:$0xff]
        %v600 = vld [vmem:[%s541 + $0x1d0] sm:$0xff]
        %v601 = vld [vmem:[%s541 + $0x1d8] sm:$0xff]
        %v602 = vld [vmem:[%s541 + $0x1e0] sm:$0xff]
        %v603 = vld [vmem:[%s541 + $0x1e8] sm:$0xff]
        %v604 = vld [vmem:[%s541 + $0x1f0] sm:$0xff]
        %v605 = vld [vmem:[%s541 + $0x1f8] sm:$0xff]
        %v606 = vld [vmem:[%s541 + $0x200] sm:$0xff]
        %v607 = vld [vmem:[%s541 + $0x208] sm:$0xff]
        %v608 = vld [vmem:[%s541 + $0x210] sm:$0xff]
        %v609 = vld [vmem:[%s541 + $0x218] sm:$0xff]
        %v610 = vld [vmem:[%s541 + $0x220] sm:$0xff]
        %v611 = vld [vmem:[%s541 + $0x228] sm:$0xff]
        %v612 = vld [vmem:[%s541 + $0x230] sm:$0xff]
        %v613 = vld [vmem:[%s541 + $0x238] sm:$0xff]
        %v614 = vld [vmem:[%s541 + $0x240] sm:$0xff]
        %v615 = vld [vmem:[%s541 + $0x248] sm:$0xff]
        %v616 = vld [vmem:[%s541 + $0x250] sm:$0xff]
        %v617 = vld [vmem:[%s541 + $0x258] sm:$0xff]
        %v618 = vld [vmem:[%s541 + $0x260] sm:$0xff]
        %v619 = vld [vmem:[%s541 + $0x268] sm:$0xff]
        %v620 = vld [vmem:[%s541 + $0x270] sm:$0xff]
        %v621 = vld [vmem:[%s541 + $0x278] sm:$0xff]
        %v622 = vld [vmem:[%s541 + $0x280] sm:$0xff]
        %v623 = vld [vmem:[%s541 + $0x288] sm:$0xff]
        %v624 = vld [vmem:[%s541 + $0x290] sm:$0xff]
        %v625 = vld [vmem:[%s541 + $0x298] sm:$0xff]
        %v626 = vld [vmem:[%s541 + $0x2a0] sm:$0xff]
        %v627 = vld [vmem:[%s541 + $0x2a8] sm:$0xff]
        %v628 = vld [vmem:[%s541 + $0x2b0] sm:$0xff]
        %v629 = vld [vmem:[%s541 + $0x2b8] sm:$0xff]
        %v630 = vld [vmem:[%s541 + $0x2c0] sm:$0xff]
        %v631 = vld [vmem:[%s541 + $0x2c8] sm:$0xff]
        %v632 = vld [vmem:[%s541 + $0x2d0] sm:$0xff]
        %v633 = vld [vmem:[%s541 + $0x2d8] sm:$0xff]
        %v634 = vld [vmem:[%s541 + $0x2e0] sm:$0xff]
        %v635 = vld [vmem:[%s541 + $0x2e8] sm:$0xff]
        %v636 = vld [vmem:[%s541 + $0x2f0] sm:$0xff]
        %v637 = vld [vmem:[%s541 + $0x2f8] sm:$0xff]
        %v638 = vld [vmem:[%s541 + $0x300] sm:$0xff]
        %v639 = vld [vmem:[%s541 + $0x308] sm:$0xff]
        %v640 = vld [vmem:[%s541 + $0x310] sm:$0xff]
        %v641 = vld [vmem:[%s541 + $0x318] sm:$0xff]
        %v642 = vld [vmem:[%s541 + $0x320] sm:$0xff]
        %v643 = vld [vmem:[%s541 + $0x328] sm:$0xff]
        %v644 = vld [vmem:[%s541 + $0x330] sm:$0xff]
        %v645 = vld [vmem:[%s541 + $0x338] sm:$0xff]
        %v646 = vld [vmem:[%s541 + $0x340] sm:$0xff]
        %v647 = vld [vmem:[%s541 + $0x348] sm:$0xff]
        %v648 = vld [vmem:[%s541 + $0x350] sm:$0xff]
        %v649 = vld [vmem:[%s541 + $0x358] sm:$0xff]
        %v650 = vld [vmem:[%s541 + $0x360] sm:$0xff]
        %v651 = vld [vmem:[%s541 + $0x368] sm:$0xff]
        %v652 = vld [vmem:[%s541 + $0x370] sm:$0xff]
        %v653 = vld [vmem:[%s541 + $0x378] sm:$0xff]
        %v654 = vld [vmem:[%s541 + $0x380] sm:$0xff]
        %v655 = vld [vmem:[%s541 + $0x388] sm:$0xff]
        %v656 = vld [vmem:[%s541 + $0x390] sm:$0xff]
        %v657 = vld [vmem:[%s541 + $0x398] sm:$0xff]
        %v658 = vld [vmem:[%s541 + $0x3a0] sm:$0xff]
        %v659 = vld [vmem:[%s541 + $0x3a8] sm:$0xff]
        %v660 = vld [vmem:[%s541 + $0x3b0] sm:$0xff]
        %v661 = vld [vmem:[%s541 + $0x3b8] sm:$0xff]
        %v662 = vld [vmem:[%s541 + $0x3c0] sm:$0xff]
        %v663 = vld [vmem:[%s541 + $0x3c8] sm:$0xff]
        %v664 = vld [vmem:[%s541 + $0x3d0] sm:$0xff]
        %v665 = vld [vmem:[%s541 + $0x3d8] sm:$0xff]
        %v666 = vld [vmem:[%s541 + $0x3e0] sm:$0xff]
        %v667 = vld [vmem:[%s541 + $0x3e8] sm:$0xff]
        %v668 = vld [vmem:[%s541 + $0x3f0] sm:$0xff]
        %v669 = vld [vmem:[%s541 + $0x3f8] sm:$0xff]
        %s670 = scalar_lea.vmem [#allocation6], 4
        %v671 = vld [vmem:[%s670] sm:$0xf]
        %v673 = vlaneseq
        %v674 = vshrl.u32 %v673, 7
        %v675 = vsub.s32 0, %v674
        %v676 = vrot.slane %v671, %v675
        %v677 = vlaneseq
        %v678 = vshrl.u32 %v677, 7
        %v679 = vsub.s32 1, %v678
        %v680 = vrot.slane %v671, %v679
        %v681 = vlaneseq
        %v682 = vshrl.u32 %v681, 7
        %v683 = vsub.s32 2, %v682
        %v684 = vrot.slane %v671, %v683
        %v685 = vlaneseq
        %v686 = vshrl.u32 %v685, 7
        %v687 = vsub.s32 3, %v686
        %v688 = vrot.slane %v671, %v687
        %693 = vmatprep.subr.mxu0 %v603
        %694 = vmatpush1.msra.mxu0 %v602
        %695 = vmatprep.subr.mxu0 %v599
        %696 = vmatpush1.msra.mxu0 %v598
        %697 = vmatprep.subr.mxu0 %v595
        %698 = vmatpush1.msra.mxu0 %v594
        %699 = vmatprep.subr.mxu0 %v591
        %700 = vmatpush1.msra.mxu0 %v590
        %701 = vmatprep.subr.mxu0 %v587
        %702 = vmatpush1.msra.mxu0 %v586
        %703 = vmatprep.subr.mxu0 %v583
        %704 = vmatpush1.msra.mxu0 %v582
        %705 = vmatprep.subr.mxu0 %v579
        %706 = vmatpush1.msra.mxu0 %v578
        %707 = vmatprep.subr.mxu0 %v575
        %708 = vmatpush1.msra.mxu0 %v574
        %709 = vmatprep.subr.mxu0 %v571
        %710 = vmatpush1.msra.mxu0 %v570
        %711 = vmatprep.subr.mxu0 %v567
        %712 = vmatpush1.msra.mxu0 %v566
        %713 = vmatprep.subr.mxu0 %v563
        %714 = vmatpush1.msra.mxu0 %v562
        %715 = vmatprep.subr.mxu0 %v559
        %716 = vmatpush1.msra.mxu0 %v558
        %717 = vmatprep.subr.mxu0 %v555
        %718 = vmatpush1.msra.mxu0 %v554
        %719 = vmatprep.subr.mxu0 %v551
        %720 = vmatpush1.msra.mxu0 %v550
        %721 = vmatprep.subr.mxu0 %v547
        %722 = vmatpush1.msra.mxu0 %v546
        %723 = vmatprep.subr.mxu0 %v543
        %724 = vmatpush1.msra.mxu0 %v542
        %725 = vmatprep.subr.mxu0 %v667
        %726 = vmatpush2.msra.mxu0 %v666
        %727 = vmatprep.subr.mxu0 %v663
        %728 = vmatpush2.msra.mxu0 %v662
        %729 = vmatprep.subr.mxu0 %v659
        %730 = vmatpush2.msra.mxu0 %v658
        %731 = vmatprep.subr.mxu0 %v655
        %732 = vmatpush2.msra.mxu0 %v654
        %733 = vmatprep.subr.mxu0 %v651
        %734 = vmatpush2.msra.mxu0 %v650
        %735 = vmatprep.subr.mxu0 %v647
        %736 = vmatpush2.msra.mxu0 %v646
        %737 = vmatprep.subr.mxu0 %v643
        %738 = vmatpush2.msra.mxu0 %v642
        %739 = vmatprep.subr.mxu0 %v639
        %740 = vmatpush2.msra.mxu0 %v638
        %741 = vmatprep.subr.mxu0 %v635
        %742 = vmatpush2.msra.mxu0 %v634
        %743 = vmatprep.subr.mxu0 %v631
        %744 = vmatpush2.msra.mxu0 %v630
        %745 = vmatprep.subr.mxu0 %v627
        %746 = vmatpush2.msra.mxu0 %v626
        %747 = vmatprep.subr.mxu0 %v623
        %748 = vmatpush2.msra.mxu0 %v622
        %749 = vmatprep.subr.mxu0 %v619
        %750 = vmatpush2.msra.mxu0 %v618
        %751 = vmatprep.subr.mxu0 %v615
        %752 = vmatpush2.msra.mxu0 %v614
        %753 = vmatprep.subr.mxu0 %v611
        %754 = vmatpush2.msra.mxu0 %v610
        %755 = vmatprep.subr.mxu0 %v607
        %756 = vmatpush2.msra.mxu0 %v606
        %757 = vmatprep.mubr.f32.mxu0 %v538
        %758 = vmatmul.mubr.f32.gmra.mxu0 %v534
        %v759 = vpop.f32.mrf.mxu0
        %v760 = vadd.f32 %v676, %v759
        %v761 = vpop.f32.mrf.mxu0
        %v762 = vadd.f32 %v680, %v761
        %763 = vdwg.mxu0
        %764 = vmatprep.subr.mxu0 %v605
        %765 = vmatpush1.msra.mxu0 %v604
        %766 = vmatprep.subr.mxu0 %v601
        %767 = vmatpush1.msra.mxu0 %v600
        %768 = vmatprep.subr.mxu0 %v597
        %769 = vmatpush1.msra.mxu0 %v596
        %770 = vmatprep.subr.mxu0 %v593
        %771 = vmatpush1.msra.mxu0 %v592
        %772 = vmatprep.subr.mxu0 %v589
        %773 = vmatpush1.msra.mxu0 %v588
        %774 = vmatprep.subr.mxu0 %v585
        %775 = vmatpush1.msra.mxu0 %v584
        %776 = vmatprep.subr.mxu0 %v581
        %777 = vmatpush1.msra.mxu0 %v580
        %778 = vmatprep.subr.mxu0 %v577
        %779 = vmatpush1.msra.mxu0 %v576
        %780 = vmatprep.subr.mxu0 %v573
        %781 = vmatpush1.msra.mxu0 %v572
        %782 = vmatprep.subr.mxu0 %v569
        %783 = vmatpush1.msra.mxu0 %v568
        %784 = vmatprep.subr.mxu0 %v565
        %785 = vmatpush1.msra.mxu0 %v564
        %786 = vmatprep.subr.mxu0 %v561
        %787 = vmatpush1.msra.mxu0 %v560
        %788 = vmatprep.subr.mxu0 %v557
        %789 = vmatpush1.msra.mxu0 %v556
        %790 = vmatprep.subr.mxu0 %v553
        %791 = vmatpush1.msra.mxu0 %v552
        %792 = vmatprep.subr.mxu0 %v549
        %793 = vmatpush1.msra.mxu0 %v548
        %794 = vmatprep.subr.mxu0 %v545
        %795 = vmatpush1.msra.mxu0 %v544
        %796 = vmatprep.subr.mxu0 %v669
        %797 = vmatpush2.msra.mxu0 %v668
        %798 = vmatprep.subr.mxu0 %v665
        %799 = vmatpush2.msra.mxu0 %v664
        %800 = vmatprep.subr.mxu0 %v661
        %801 = vmatpush2.msra.mxu0 %v660
        %802 = vmatprep.subr.mxu0 %v657
        %803 = vmatpush2.msra.mxu0 %v656
        %804 = vmatprep.subr.mxu0 %v653
        %805 = vmatpush2.msra.mxu0 %v652
        %806 = vmatprep.subr.mxu0 %v649
        %807 = vmatpush2.msra.mxu0 %v648
        %808 = vmatprep.subr.mxu0 %v645
        %809 = vmatpush2.msra.mxu0 %v644
        %810 = vmatprep.subr.mxu0 %v641
        %811 = vmatpush2.msra.mxu0 %v640
        %812 = vmatprep.subr.mxu0 %v637
        %813 = vmatpush2.msra.mxu0 %v636
        %814 = vmatprep.subr.mxu0 %v633
        %815 = vmatpush2.msra.mxu0 %v632
        %816 = vmatprep.subr.mxu0 %v629
        %817 = vmatpush2.msra.mxu0 %v628
        %818 = vmatprep.subr.mxu0 %v625
        %819 = vmatpush2.msra.mxu0 %v624
        %820 = vmatprep.subr.mxu0 %v621
        %821 = vmatpush2.msra.mxu0 %v620
        %822 = vmatprep.subr.mxu0 %v617
        %823 = vmatpush2.msra.mxu0 %v616
        %824 = vmatprep.subr.mxu0 %v613
        %825 = vmatpush2.msra.mxu0 %v612
        %826 = vmatprep.subr.mxu0 %v609
        %827 = vmatpush2.msra.mxu0 %v608
        %828 = vmatprep.mubr.f32.mxu0 %v538
        %829 = vmatmul.mubr.f32.gmra.mxu0 %v534
        %v830 = vpop.f32.mrf.mxu0
        %v831 = vadd.f32 %v684, %v830
        %v832 = vpop.f32.mrf.mxu0
        %v833 = vadd.f32 %v688, %v832
        %834 = vdwg.mxu0
        %v835 = vxor.u32 %v760, 2147483648
        %v836 = vmul.f32 %v835, 1.442695
        %v837 = vpow.pop %v836
        %v838 = vadd.f32 %v837, 1.0
        %v839 = vrcp.pop %v838
        %v840 = vmul.f32 1.0, %v839
        %v841 = vxor.u32 %v762, 2147483648
        %v842 = vmul.f32 %v841, 1.442695
        %v843 = vpow.pop %v842
        %v844 = vadd.f32 %v843, 1.0
        %v845 = vrcp.pop %v844
        %v846 = vmul.f32 1.0, %v845
        %v847 = vtanh.pop %v831
        %v848 = vxor.u32 %v833, 2147483648
        %v849 = vmul.f32 %v848, 1.442695
        %v850 = vpow.pop %v849
        %v851 = vadd.f32 %v850, 1.0
        %v852 = vrcp.pop %v851
        %v853 = vmul.f32 1.0, %v852
        %v854 = vmul.f32 %v846, %v540
        %v855 = vmul.f32 %v840, %v847
        %v856 = vadd.f32 %v854, %v855
        %v857 = vtanh.pop %v856
        %v858 = vmul.f32 %v853, %v857
        %859 = vst [vmem:[%s537] sm:$0xff] %v858
        %860 = vst [vmem:[%s539] sm:$0xff] %v856
        %p861 = scmp.eq.s32.totalorder %s18, 7
        // Predicated region
        $region45: #{seq2seq_forward.2} parent=31 // pred_check
          %p862 = pneg %p861
        $region46: #{seq2seq_forward.2} parent=31 // pred_check_branch
          %864 = sbr.rel (%p862) target = $region48
        $region47: #{seq2seq_forward.2} parent=31 // pred_region
          %v865 = vld [vmem:[#allocation2] sm:$0xff]
          %v866 = vld [vmem:[#allocation2 + $0x8] sm:$0xff]
          %867 = vst [vmem:[%s3] sm:$0xff] %v865
          %868 = vst [vmem:[%s3 + $0x8] sm:$0xff] %v866
          %v869 = vld [vmem:[#allocation3] sm:$0xff]
          %v870 = vld [vmem:[#allocation3 + $0x8] sm:$0xff]
          %871 = vst [vmem:[%s4] sm:$0xff] %v869
          %872 = vst [vmem:[%s4 + $0x8] sm:$0xff] %v870
        $region48: #{seq2seq_forward.2} parent=31 // pred_fallthru
          _
        // Predicated region
        $region49: #{seq2seq_forward.2} parent=31 // pred_check
          %p873 = pneg %p99
        $region50: #{seq2seq_forward.2} parent=31 // pred_check_branch
          %875 = sbr.rel (%p873) target = $region52
        $region51: #{seq2seq_forward.2} parent=31 // pred_region
          _
        $region52: #{seq2seq_forward.2} parent=31 // pred_fallthru
          _
        // Predicated region
        $region53: #{seq2seq_forward.2} parent=31 // pred_check
          %p876 = pneg %p120
        $region54: #{seq2seq_forward.2} parent=31 // pred_check_branch
          %878 = sbr.rel (%p876) target = $region56
        $region55: #{seq2seq_forward.2} parent=31 // pred_region
          _
        $region56: #{seq2seq_forward.2} parent=31 // pred_fallthru
          _
        // Predicated region
        $region57: #{seq2seq_forward.2} parent=31 // pred_check
          %p879 = pneg %p99
        $region58: #{seq2seq_forward.2} parent=31 // pred_check_branch
          %881 = sbr.rel (%p879) target = $region60
        $region59: #{seq2seq_forward.2} parent=31 // pred_region
          _
        $region60: #{seq2seq_forward.2} parent=31 // pred_fallthru
          _
        // Predicated region
        $region61: #{seq2seq_forward.2} parent=31 // pred_check
          %p882 = pneg %p120
        $region62: #{seq2seq_forward.2} parent=31 // pred_check_branch
          %884 = sbr.rel (%p882) target = $region64
        $region63: #{seq2seq_forward.2} parent=31 // pred_region
          _
        $region64: #{seq2seq_forward.2} parent=31 // pred_fallthru
          _
      $region32: #{seq2seq_forward.2} parent=5 // pred_fallthru
        _
      %p885 = scmp.le.s32.totalorder 2, %s13
      // Predicated region
      $region65: #{seq2seq_forward.2} parent=5 // pred_check
        %p886 = pneg %p885
      $region66: #{seq2seq_forward.2} parent=5 // pred_check_branch
        %888 = sbr.rel (%p886) target = $region68
      $region67: #{seq2seq_forward.2} parent=5 // pred_region
        %s889 = ssub.s32 %s13, 2
      $region68: #{seq2seq_forward.2} parent=5 // pred_fallthru
        _
    $region6: #{seq2seq_forward.2} parent=1 // loop_footer
      %s17 = sadd.s32 1, %s13
    $region7: #{seq2seq_forward.2} parent=1 // loop_footer_branch
      %12 = sbr.rel target = $region3
    $region8: #{seq2seq_forward.2} parent=1 // loop_exit
      _
    %890 = vsyncpa [#allocation5], 1
    %s891 = scalar_lea.sflag [#allocation5], 1
    %892 = vsyncpa %s891, 1
    %893 = vsyncpa [#allocation7], 1

// kernel: seq2seq_forward.3
$region0: #{seq2seq_forward.3}
  #allocation0 [shape = 'u32[]', space=smem, size = 0x4, offset = 0x4, fixed_abs, tag = 'smem constant byte address 0x4 - core index']
  #allocation1 [shape = 'u32[144,128]{1,0:T(1,128)}', space=vmem, size = 0x12000, scoped, tag = 'internal scratch']
  #allocation2 [shape = 'f32[3,8,128]{2,1,0:T(8,128)}', space=vmem, size = 0x3000, scoped, tag = 'scratch operand']
  #allocation3 [shape = 'f32[3,8,128]{2,1,0:T(8,128)}', space=vmem, size = 0x3000, scoped, tag = 'scratch operand']
  %s0 = inlined_call_operand.vmem [shape: f32[7,8,128], index: 0, kind: input, shape index: {}]
  %s1 = inlined_call_operand.vmem [shape: f32[3,8,128], index: 1, kind: input, shape index: {}]
  %s2 = inlined_call_operand.vmem [shape: f32[3,8,128], index: 2, kind: input, shape index: {}]
  %s3 = inlined_call_operand.hbm [shape: f32[3,256,512], index: 3, kind: input, shape index: {}]
  %s4 = inlined_call_operand.hbm [shape: f32[3,1,512], index: 4, kind: input, shape index: {}]
  %s5 = inlined_call_operand.hbm [shape: f32[128,128], index: 5, kind: input, shape index: {}]
  %s6 = inlined_call_operand.hbm [shape: f32[1,128], index: 6, kind: input, shape index: {}]
  %s7 = inlined_call_operand.vmem [shape: f32[7,8,128], index: 7, kind: output, shape index: {}]
  %s8 = sld [smem:[#allocation0]]
  $region81: #{seq2seq_forward.3} parent=0
    _
  %s10 = ssub.s32 1, %s8
  %s11 = scalar_select 0, %s10, %s8
  $region1: #{seq2seq_forward.3} parent=0
    #allocation4 [shape = 'u8[1572864]{0}', space=vmem, size = 0x180000, scoped, tag = 'input window, operand 3, single buffered']
    #allocation5 [shape = 's32[2]{0}', space=sflag, size = 0x8, scoped, tag = 'scoped memory for seq2seq_forward.3']
    #allocation6 [shape = 'u8[6144]{0}', space=vmem, size = 0x1800, scoped, tag = 'input window, operand 4, single buffered']
    #allocation7 [shape = 's32[1]{0}', space=sflag, size = 0x4, scoped, tag = 'scoped memory for seq2seq_forward.3']
    #allocation8 [shape = 'u8[65536]{0}', space=vmem, size = 0x10000, scoped, tag = 'input window, operand 5, single buffered']
    #allocation9 [shape = 'u8[512]{0}', space=vmem, size = 0x400, scoped, tag = 'input window, operand 6, single buffered']
    #allocation10 [shape = 's32[1]{0}', space=sflag, size = 0x4, scoped, tag = 'scoped memory for seq2seq_forward.3']
    %12 = vsyncpa [#allocation5], 0
    %13 = vsyncpa [#allocation7], 0
    %14 = vsyncpa [#allocation10], 0
    loop: start=0, step=1, limit=9
    $region2: #{seq2seq_forward.3} parent=1 // loop_pre_header
      _
    $region3: #{seq2seq_forward.3} parent=1 // loop_header
      %s16 = sphi 0, %s20
      %p17 = scmp.ge.s32.totalorder %s16, 9
      %s26 = sphi 0, %s28
      %s29 = sphi 0, %s26
      %s30 = sphi 0, %s29
      %s46 = sphi 0, %s30
      %s50 = sphi 0, %s50
      %s52 = sphi 0, %s50
      %s53 = sphi 0, %s52
      %s67 = sphi 0, %s53
      %s71 = sphi 0, %s71
      %s73 = sphi 0, %s71
      %s74 = sphi 0, %s73
      %s88 = sphi 0, %s74
      %s92 = sphi 0, %s92
      %s94 = sphi 0, %s92
      %s95 = sphi 0, %s94
      %s109 = sphi 0, %s95
      %s113 = sphi 0, %s113
      %s115 = sphi 0, %s113
      %s116 = sphi 0, %s115
      %s130 = sphi 0, %s116
      %s134 = sphi 0, %s134
      %s136 = sphi 0, %s134
      %s137 = sphi 0, %s136
      %s151 = sphi 0, %s137
      %s155 = sphi 0, %s155
      %s157 = sphi 0, %s155
      %s158 = sphi 0, %s157
      %s172 = sphi 0, %s158
      %s178 = sphi 0, %s180
      %s181 = sphi 0, %s178
      %s182 = sphi 0, %s181
      %s198 = sphi 0, %s182
    $region4: #{seq2seq_forward.3} parent=1 // loop_header_branch
      %19 = sbr.rel (%p17) target = $region8
    $region5: #{seq2seq_forward.3} parent=1 // loop_body
      %s21 = ssub.s32 %s16, 1
      %s22 = ssub.s32 %s16, 2
      %s23 = sadd.s32 %s16, 1
      %s24 = ssub.s32 %s16, %s23
      %p25 = scmp.eq.s32.totalorder %s24, 0
      %s27 = sadd.s32 %s26, 1
      %s28 = scalar_select %p25, %s26, %s27
      %p31 = pneg %p25
      %p32 = scmp.eq.s32.totalorder %s16, 6
      %p33 = por %p31, %p32
      %p34 = scmp.ne.s32.totalorder %s26, %s29
      %p35 = scmp.eq.s32.totalorder %s16, 0
      %p36 = por %p34, %p35
      %p37 = scmp.ne.s32.totalorder %s26, %s29
      %p38 = scmp.eq.s32.totalorder %s21, 6
      %p39 = por %p37, %p38
      %p40 = scmp.ne.s32.totalorder %s29, %s30
      %p41 = scmp.eq.s32.totalorder %s21, 0
      %p42 = por %p40, %p41
      %p43 = scmp.ne.s32.totalorder %s29, %s30
      %p44 = scmp.eq.s32.totalorder %s22, 6
      %p45 = por %p43, %p44
      %p47 = scmp.ne.s32.totalorder %s30, %s46
      %p48 = scmp.eq.s32.totalorder %s22, 0
      %p49 = por %p47, %p48
      %s51 = sadd.s32 %s50, 1
      %p54 = scmp.eq.s32.totalorder %s16, 6
      %p55 = scmp.ne.s32.totalorder %s50, %s52
      %p56 = scmp.eq.s32.totalorder %s16, 0
      %p57 = por %p55, %p56
      %p58 = scmp.ne.s32.totalorder %s50, %s52
      %p59 = scmp.eq.s32.totalorder %s21, 6
      %p60 = por %p58, %p59
      %p61 = scmp.ne.s32.totalorder %s52, %s53
      %p62 = scmp.eq.s32.totalorder %s21, 0
      %p63 = por %p61, %p62
      %p64 = scmp.ne.s32.totalorder %s52, %s53
      %p65 = scmp.eq.s32.totalorder %s22, 6
      %p66 = por %p64, %p65
      %p68 = scmp.ne.s32.totalorder %s53, %s67
      %p69 = scmp.eq.s32.totalorder %s22, 0
      %p70 = por %p68, %p69
      %s72 = sadd.s32 %s71, 1
      %p75 = scmp.eq.s32.totalorder %s16, 6
      %p76 = scmp.ne.s32.totalorder %s71, %s73
      %p77 = scmp.eq.s32.totalorder %s16, 0
      %p78 = por %p76, %p77
      %p79 = scmp.ne.s32.totalorder %s71, %s73
      %p80 = scmp.eq.s32.totalorder %s21, 6
      %p81 = por %p79, %p80
      %p82 = scmp.ne.s32.totalorder %s73, %s74
      %p83 = scmp.eq.s32.totalorder %s21, 0
      %p84 = por %p82, %p83
      %p85 = scmp.ne.s32.totalorder %s73, %s74
      %p86 = scmp.eq.s32.totalorder %s22, 6
      %p87 = por %p85, %p86
      %p89 = scmp.ne.s32.totalorder %s74, %s88
      %p90 = scmp.eq.s32.totalorder %s22, 0
      %p91 = por %p89, %p90
      %s93 = sadd.s32 %s92, 1
      %p96 = scmp.eq.s32.totalorder %s16, 6
      %p97 = scmp.ne.s32.totalorder %s92, %s94
      %p98 = scmp.eq.s32.totalorder %s16, 0
      %p99 = por %p97, %p98
      %p100 = scmp.ne.s32.totalorder %s92, %s94
      %p101 = scmp.eq.s32.totalorder %s21, 6
      %p102 = por %p100, %p101
      %p103 = scmp.ne.s32.totalorder %s94, %s95
      %p104 = scmp.eq.s32.totalorder %s21, 0
      %p105 = por %p103, %p104
      %p106 = scmp.ne.s32.totalorder %s94, %s95
      %p107 = scmp.eq.s32.totalorder %s22, 6
      %p108 = por %p106, %p107
      %p110 = scmp.ne.s32.totalorder %s95, %s109
      %p111 = scmp.eq.s32.totalorder %s22, 0
      %p112 = por %p110, %p111
      %s114 = sadd.s32 %s113, 1
      %p117 = scmp.eq.s32.totalorder %s16, 6
      %p118 = scmp.ne.s32.totalorder %s113, %s115
      %p119 = scmp.eq.s32.totalorder %s16, 0
      %p120 = por %p118, %p119
      %p121 = scmp.ne.s32.totalorder %s113, %s115
      %p122 = scmp.eq.s32.totalorder %s21, 6
      %p123 = por %p121, %p122
      %p124 = scmp.ne.s32.totalorder %s115, %s116
      %p125 = scmp.eq.s32.totalorder %s21, 0
      %p126 = por %p124, %p125
      %p127 = scmp.ne.s32.totalorder %s115, %s116
      %p128 = scmp.eq.s32.totalorder %s22, 6
      %p129 = por %p127, %p128
      %p131 = scmp.ne.s32.totalorder %s116, %s130
      %p132 = scmp.eq.s32.totalorder %s22, 0
      %p133 = por %p131, %p132
      %s135 = sadd.s32 %s134, 1
      %p138 = scmp.eq.s32.totalorder %s16, 6
      %p139 = scmp.ne.s32.totalorder %s134, %s136
      %p140 = scmp.eq.s32.totalorder %s16, 0
      %p141 = por %p139, %p140
      %p142 = scmp.ne.s32.totalorder %s134, %s136
      %p143 = scmp.eq.s32.totalorder %s21, 6
      %p144 = por %p142, %p143
      %p145 = scmp.ne.s32.totalorder %s136, %s137
      %p146 = scmp.eq.s32.totalorder %s21, 0
      %p147 = por %p145, %p146
      %p148 = scmp.ne.s32.totalorder %s136, %s137
      %p149 = scmp.eq.s32.totalorder %s22, 6
      %p150 = por %p148, %p149
      %p152 = scmp.ne.s32.totalorder %s137, %s151
      %p153 = scmp.eq.s32.totalorder %s22, 0
      %p154 = por %p152, %p153
      %s156 = sadd.s32 %s155, 1
      %p159 = scmp.eq.s32.totalorder %s16, 6
      %p160 = scmp.ne.s32.totalorder %s155, %s157
      %p161 = scmp.eq.s32.totalorder %s16, 0
      %p162 = por %p160, %p161
      %p163 = scmp.ne.s32.totalorder %s155, %s157
      %p164 = scmp.eq.s32.totalorder %s21, 6
      %p165 = por %p163, %p164
      %p166 = scmp.ne.s32.totalorder %s157, %s158
      %p167 = scmp.eq.s32.totalorder %s21, 0
      %p168 = por %p166, %p167
      %p169 = scmp.ne.s32.totalorder %s157, %s158
      %p170 = scmp.eq.s32.totalorder %s22, 6
      %p171 = por %p169, %p170
      %p173 = scmp.ne.s32.totalorder %s158, %s172
      %p174 = scmp.eq.s32.totalorder %s22, 0
      %p175 = por %p173, %p174
      %s176 = ssub.s32 %s16, %s23
      %p177 = scmp.eq.s32.totalorder %s176, 0
      %s179 = sadd.s32 %s178, 1
      %s180 = scalar_select %p177, %s178, %s179
      %p183 = pneg %p177
      %p184 = scmp.eq.s32.totalorder %s16, 6
      %p185 = por %p183, %p184
      %p186 = scmp.ne.s32.totalorder %s178, %s181
      %p187 = scmp.eq.s32.totalorder %s16, 0
      %p188 = por %p186, %p187
      %p189 = scmp.ne.s32.totalorder %s178, %s181
      %p190 = scmp.eq.s32.totalorder %s21, 6
      %p191 = por %p189, %p190
      %p192 = scmp.ne.s32.totalorder %s181, %s182
      %p193 = scmp.eq.s32.totalorder %s21, 0
      %p194 = por %p192, %p193
      %p195 = scmp.ne.s32.totalorder %s181, %s182
      %p196 = scmp.eq.s32.totalorder %s22, 6
      %p197 = por %p195, %p196
      %p199 = scmp.ne.s32.totalorder %s182, %s198
      %p200 = scmp.eq.s32.totalorder %s22, 0
      %p201 = por %p199, %p200
      %p202 = scmp.le.s32.totalorder 1, %s16
      %p203 = scmp.lt.s32.totalorder %s16, 8
      %p204 = pnand %p202, %p203
      %p205 = pneg %p204
      // Predicated region
      $region9: #{seq2seq_forward.3} parent=5 // pred_check
        _
      $region10: #{seq2seq_forward.3} parent=5 // pred_check_branch
        %207 = sbr.rel (%p204) target = $region12
      $region11: #{seq2seq_forward.3} parent=5 // pred_region
        %s208 = ssub.s32 %s16, 1
        // Predicated region
        $region13: #{seq2seq_forward.3} parent=11 // pred_check
          %p209 = pneg %p63
        $region14: #{seq2seq_forward.3} parent=11 // pred_check_branch
          %211 = sbr.rel (%p209) target = $region16
        $region15: #{seq2seq_forward.3} parent=11 // pred_region
          _
        $region16: #{seq2seq_forward.3} parent=11 // pred_fallthru
          _
        // Predicated region
        $region17: #{seq2seq_forward.3} parent=11 // pred_check
          %p212 = pneg %p84
        $region18: #{seq2seq_forward.3} parent=11 // pred_check_branch
          %214 = sbr.rel (%p212) target = $region20
        $region19: #{seq2seq_forward.3} parent=11 // pred_region
          _
        $region20: #{seq2seq_forward.3} parent=11 // pred_fallthru
          _
        // Predicated region
        $region21: #{seq2seq_forward.3} parent=11 // pred_check
          %p215 = pneg %p105
        $region22: #{seq2seq_forward.3} parent=11 // pred_check_branch
          %217 = sbr.rel (%p215) target = $region24
        $region23: #{seq2seq_forward.3} parent=11 // pred_region
          %s219 = ssub.s32 49152, 49152
          %220 = vsyncadd [#allocation5], %s219
          %s221 = sshll.u32 [#allocation4], 4
          %s222 = int_to_ptr.vmem [resolvable:$true] %s221
          %227 = dma.hbm_to_vmem [thread:$0]  %s3, 49152, %s222, [#allocation5], 512, 512, 32
        $region24: #{seq2seq_forward.3} parent=11 // pred_fallthru
          _
        // Predicated region
        $region25: #{seq2seq_forward.3} parent=11 // pred_check
          %p228 = pneg %p126
        $region26: #{seq2seq_forward.3} parent=11 // pred_check_branch
          %230 = sbr.rel (%p228) target = $region28
        $region27: #{seq2seq_forward.3} parent=11 // pred_region
          %s232 = ssub.s32 192, 192
          %233 = vsyncadd [#allocation7], %s232
          %s234 = sshll.u32 [#allocation6], 4
          %s235 = int_to_ptr.vmem [resolvable:$true] %s234
          %240 = dma.hbm_to_vmem [thread:$0]  %s4, 192, %s235, [#allocation7], 64, 64, 4
        $region28: #{seq2seq_forward.3} parent=11 // pred_fallthru
          _
        // Predicated region
        $region29: #{seq2seq_forward.3} parent=11 // pred_check
          %p241 = pneg %p147
        $region30: #{seq2seq_forward.3} parent=11 // pred_check_branch
          %243 = sbr.rel (%p241) target = $region32
        $region31: #{seq2seq_forward.3} parent=11 // pred_region
          %s245 = ssub.s32 2048, 2048
          %246 = vsyncadd [#allocation7], %s245
          %s247 = sshll.u32 [#allocation8], 4
          %s248 = int_to_ptr.vmem [resolvable:$true] %s247
          %253 = dma.hbm_to_vmem [thread:$0]  %s5, 2048, %s248, [#allocation7], 128, 128, 8
        $region32: #{seq2seq_forward.3} parent=11 // pred_fallthru
          _
        // Predicated region
        $region33: #{seq2seq_forward.3} parent=11 // pred_check
          %p254 = pneg %p168
        $region34: #{seq2seq_forward.3} parent=11 // pred_check_branch
          %256 = sbr.rel (%p254) target = $region36
        $region35: #{seq2seq_forward.3} parent=11 // pred_region
          %s258 = ssub.s32 16, 16
          %259 = vsyncadd [#allocation10], %s258
          %s261 = sshll.u32 [#allocation9], 4
          %s262 = int_to_ptr.vmem [resolvable:$true] %s261
          %264 = dma.hbm_to_vmem [thread:$0]  %s6, 16, %s262, [#allocation10]
        $region36: #{seq2seq_forward.3} parent=11 // pred_fallthru
          _
      $region12: #{seq2seq_forward.3} parent=5 // pred_fallthru
        _
      %p265 = scmp.lt.s32.totalorder %s16, 7
      // Predicated region
      $region37: #{seq2seq_forward.3} parent=5 // pred_check
        %p266 = pneg %p265
      $region38: #{seq2seq_forward.3} parent=5 // pred_check_branch
        %268 = sbr.rel (%p266) target = $region40
      $region39: #{seq2seq_forward.3} parent=5 // pred_region
        // Predicated region
        $region41: #{seq2seq_forward.3} parent=39 // pred_check
          %p269 = pneg %p36
        $region42: #{seq2seq_forward.3} parent=39 // pred_check_branch
          %271 = sbr.rel (%p269) target = $region44
        $region43: #{seq2seq_forward.3} parent=39 // pred_region
          %p272 = scmp.lt.s32.totalorder %s16, 6
          %s273 = scalar_select %p272, %s16, 6
          %s274 = smul.addr %s273, 8
          %s275 = scalar_lea.vmem %s0, %s274
        $region44: #{seq2seq_forward.3} parent=39 // pred_fallthru
          _
      $region40: #{seq2seq_forward.3} parent=5 // pred_fallthru
        _
      %p276 = scmp.le.s32.totalorder 1, %s16
      %p277 = scmp.lt.s32.totalorder %s16, 8
      %p278 = pnand %p276, %p277
      %p279 = pneg %p278
      // Predicated region
      $region45: #{seq2seq_forward.3} parent=5 // pred_check
        _
      $region46: #{seq2seq_forward.3} parent=5 // pred_check_branch
        %281 = sbr.rel (%p278) target = $region48
      $region47: #{seq2seq_forward.3} parent=5 // pred_region
        %s282 = ssub.s32 %s16, 1
        // Predicated region
        $region49: #{seq2seq_forward.3} parent=47 // pred_check
          %p283 = pneg %p105
        $region50: #{seq2seq_forward.3} parent=47 // pred_check_branch
          %285 = sbr.rel (%p283) target = $region52
        $region51: #{seq2seq_forward.3} parent=47 // pred_region
          %286 = dma.done [#allocation5], 49152
        $region52: #{seq2seq_forward.3} parent=47 // pred_fallthru
          _
        // Predicated region
        $region53: #{seq2seq_forward.3} parent=47 // pred_check
          %p287 = pneg %p126
        $region54: #{seq2seq_forward.3} parent=47 // pred_check_branch
          %289 = sbr.rel (%p287) target = $region56
        $region55: #{seq2seq_forward.3} parent=47 // pred_region
          %290 = dma.done [#allocation7], 192
        $region56: #{seq2seq_forward.3} parent=47 // pred_fallthru
          _
        // Predicated region
        $region57: #{seq2seq_forward.3} parent=47 // pred_check
          %p291 = pneg %p147
        $region58: #{seq2seq_forward.3} parent=47 // pred_check_branch
          %293 = sbr.rel (%p291) target = $region60
        $region59: #{seq2seq_forward.3} parent=47 // pred_region
          %294 = dma.done [#allocation7], 2048
        $region60: #{seq2seq_forward.3} parent=47 // pred_fallthru
          _
        // Predicated region
        $region61: #{seq2seq_forward.3} parent=47 // pred_check
          %p295 = pneg %p168
        $region62: #{seq2seq_forward.3} parent=47 // pred_check_branch
          %297 = sbr.rel (%p295) target = $region64
        $region63: #{seq2seq_forward.3} parent=47 // pred_region
          %298 = dma.done [#allocation10], 16
        $region64: #{seq2seq_forward.3} parent=47 // pred_fallthru
          _
        %p299 = scmp.lt.s32.totalorder %s21, 6
        %s300 = scalar_select %p299, %s21, 6
        %s301 = smul.addr %s300, 8
        %s302 = scalar_lea.vmem %s0, %s301
        %p303 = pneg %p42
        %p304 = pneg %p39
        %p305 = pneg %p63
        %p306 = pneg %p60
        %p307 = pneg %p84
        %p308 = pneg %p81
        %p309 = pneg %p105
        %p310 = pneg %p102
        %p311 = pneg %p126
        %p312 = pneg %p123
        %p313 = pneg %p147
        %p314 = pneg %p144
        %p315 = pneg %p168
        %p316 = pneg %p165
        %p317 = pneg %p194
        %p318 = pneg %p191
        %p319 = scmp.lt.s32.totalorder %s21, 6
        %s320 = scalar_select %p319, %s21, 6
        %s321 = smul.addr %s320, 8
        %s322 = scalar_lea.vmem %s7, %s321
        %p323 = scmp.lt.s32.totalorder %s21, 6
        %s324 = scalar_select %p323, %s21, 6
        %s325 = smul.addr %s324, 8
        %s326 = scalar_lea.vmem %s0, %s325
        %p327 = scmp.lt.s32.totalorder %s21, 6
        %s328 = scalar_select %p327, %s21, 6
        %s329 = smul.addr %s328, 8
        %s330 = scalar_lea.vmem %s7, %s329
        %p331 = scmp.eq.s32.totalorder %s21, 0
        // Predicated region
        $region65: #{seq2seq_forward.3} parent=47 // pred_check
          %p332 = pneg %p331
        $region66: #{seq2seq_forward.3} parent=47 // pred_check_branch
          %334 = sbr.rel (%p332) target = $region68
        $region67: #{seq2seq_forward.3} parent=47 // pred_region
          %v335 = vld [vmem:[%s1] sm:$0xff]
          %v336 = vld [vmem:[%s1 + $0x8] sm:$0xff]
          %v337 = vld [vmem:[%s1 + $0x10] sm:$0xff]
          %338 = vst [vmem:[#allocation2] sm:$0xff] %v335
          %339 = vst [vmem:[#allocation2 + $0x8] sm:$0xff] %v336
          %340 = vst [vmem:[#allocation2 + $0x10] sm:$0xff] %v337
          %v341 = vld [vmem:[%s2] sm:$0xff]
          %v342 = vld [vmem:[%s2 + $0x8] sm:$0xff]
          %v343 = vld [vmem:[%s2 + $0x10] sm:$0xff]
          %344 = vst [vmem:[#allocation3] sm:$0xff] %v341
          %345 = vst [vmem:[#allocation3 + $0x8] sm:$0xff] %v342
          %346 = vst [vmem:[#allocation3 + $0x10] sm:$0xff] %v343
        $region68: #{seq2seq_forward.3} parent=47 // pred_fallthru
          _
        %v347 = vld [vmem:[%s326] sm:$0xff]
        %v348 = vld [vmem:[#allocation2] sm:$0xff]
        %v349 = vld [vmem:[#allocation3] sm:$0xff]
        %v350 = vld [vmem:[#allocation4] sm:$0xff]
        %v351 = vld [vmem:[#allocation4 + $0x8] sm:$0xff]
        %v352 = vld [vmem:[#allocation4 + $0x10] sm:$0xff]
        %v353 = vld [vmem:[#allocation4 + $0x18] sm:$0xff]
        %v354 = vld [vmem:[#allocation4 + $0x20] sm:$0xff]
        %v355 = vld [vmem:[#allocation4 + $0x28] sm:$0xff]
        %v356 = vld [vmem:[#allocation4 + $0x30] sm:$0xff]
        %v357 = vld [vmem:[#allocation4 + $0x38] sm:$0xff]
        %v358 = vld [vmem:[#allocation4 + $0x40] sm:$0xff]
        %v359 = vld [vmem:[#allocation4 + $0x48] sm:$0xff]
        %v360 = vld [vmem:[#allocation4 + $0x50] sm:$0xff]
        %v361 = vld [vmem:[#allocation4 + $0x58] sm:$0xff]
        %v362 = vld [vmem:[#allocation4 + $0x60] sm:$0xff]
        %v363 = vld [vmem:[#allocation4 + $0x68] sm:$0xff]
        %v364 = vld [vmem:[#allocation4 + $0x70] sm:$0xff]
        %v365 = vld [vmem:[#allocation4 + $0x78] sm:$0xff]
        %v366 = vld [vmem:[#allocation4 + $0x80] sm:$0xff]
        %v367 = vld [vmem:[#allocation4 + $0x88] sm:$0xff]
        %v368 = vld [vmem:[#allocation4 + $0x90] sm:$0xff]
        %v369 = vld [vmem:[#allocation4 + $0x98] sm:$0xff]
        %v370 = vld [vmem:[#allocation4 + $0xa0] sm:$0xff]
        %v371 = vld [vmem:[#allocation4 + $0xa8] sm:$0xff]
        %v372 = vld [vmem:[#allocation4 + $0xb0] sm:$0xff]
        %v373 = vld [vmem:[#allocation4 + $0xb8] sm:$0xff]
        %v374 = vld [vmem:[#allocation4 + $0xc0] sm:$0xff]
        %v375 = vld [vmem:[#allocation4 + $0xc8] sm:$0xff]
        %v376 = vld [vmem:[#allocation4 + $0xd0] sm:$0xff]
        %v377 = vld [vmem:[#allocation4 + $0xd8] sm:$0xff]
        %v378 = vld [vmem:[#allocation4 + $0xe0] sm:$0xff]
        %v379 = vld [vmem:[#allocation4 + $0xe8] sm:$0xff]
        %v380 = vld [vmem:[#allocation4 + $0xf0] sm:$0xff]
        %v381 = vld [vmem:[#allocation4 + $0xf8] sm:$0xff]
        %v382 = vld [vmem:[#allocation4 + $0x100] sm:$0xff]
        %v383 = vld [vmem:[#allocation4 + $0x108] sm:$0xff]
        %v384 = vld [vmem:[#allocation4 + $0x110] sm:$0xff]
        %v385 = vld [vmem:[#allocation4 + $0x118] sm:$0xff]
        %v386 = vld [vmem:[#allocation4 + $0x120] sm:$0xff]
        %v387 = vld [vmem:[#allocation4 + $0x128] sm:$0xff]
        %v388 = vld [vmem:[#allocation4 + $0x130] sm:$0xff]
        %v389 = vld [vmem:[#allocation4 + $0x138] sm:$0xff]
        %v390 = vld [vmem:[#allocation4 + $0x140] sm:$0xff]
        %v391 = vld [vmem:[#allocation4 + $0x148] sm:$0xff]
        %v392 = vld [vmem:[#allocation4 + $0x150] sm:$0xff]
        %v393 = vld [vmem:[#allocation4 + $0x158] sm:$0xff]
        %v394 = vld [vmem:[#allocation4 + $0x160] sm:$0xff]
        %v395 = vld [vmem:[#allocation4 + $0x168] sm:$0xff]
        %v396 = vld [vmem:[#allocation4 + $0x170] sm:$0xff]
        %v397 = vld [vmem:[#allocation4 + $0x178] sm:$0xff]
        %v398 = vld [vmem:[#allocation4 + $0x180] sm:$0xff]
        %v399 = vld [vmem:[#allocation4 + $0x188] sm:$0xff]
        %v400 = vld [vmem:[#allocation4 + $0x190] sm:$0xff]
        %v401 = vld [vmem:[#allocation4 + $0x198] sm:$0xff]
        %v402 = vld [vmem:[#allocation4 + $0x1a0] sm:$0xff]
        %v403 = vld [vmem:[#allocation4 + $0x1a8] sm:$0xff]
        %v404 = vld [vmem:[#allocation4 + $0x1b0] sm:$0xff]
        %v405 = vld [vmem:[#allocation4 + $0x1b8] sm:$0xff]
        %v406 = vld [vmem:[#allocation4 + $0x1c0] sm:$0xff]
        %v407 = vld [vmem:[#allocation4 + $0x1c8] sm:$0xff]
        %v408 = vld [vmem:[#allocation4 + $0x1d0] sm:$0xff]
        %v409 = vld [vmem:[#allocation4 + $0x1d8] sm:$0xff]
        %v410 = vld [vmem:[#allocation4 + $0x1e0] sm:$0xff]
        %v411 = vld [vmem:[#allocation4 + $0x1e8] sm:$0xff]
        %v412 = vld [vmem:[#allocation4 + $0x1f0] sm:$0xff]
        %v413 = vld [vmem:[#allocation4 + $0x1f8] sm:$0xff]
        %v414 = vld [vmem:[#allocation4 + $0x200] sm:$0xff]
        %v415 = vld [vmem:[#allocation4 + $0x208] sm:$0xff]
        %v416 = vld [vmem:[#allocation4 + $0x210] sm:$0xff]
        %v417 = vld [vmem:[#allocation4 + $0x218] sm:$0xff]
        %v418 = vld [vmem:[#allocation4 + $0x220] sm:$0xff]
        %v419 = vld [vmem:[#allocation4 + $0x228] sm:$0xff]
        %v420 = vld [vmem:[#allocation4 + $0x230] sm:$0xff]
        %v421 = vld [vmem:[#allocation4 + $0x238] sm:$0xff]
        %v422 = vld [vmem:[#allocation4 + $0x240] sm:$0xff]
        %v423 = vld [vmem:[#allocation4 + $0x248] sm:$0xff]
        %v424 = vld [vmem:[#allocation4 + $0x250] sm:$0xff]
        %v425 = vld [vmem:[#allocation4 + $0x258] sm:$0xff]
        %v426 = vld [vmem:[#allocation4 + $0x260] sm:$0xff]
        %v427 = vld [vmem:[#allocation4 + $0x268] sm:$0xff]
        %v428 = vld [vmem:[#allocation4 + $0x270] sm:$0xff]
        %v429 = vld [vmem:[#allocation4 + $0x278] sm:$0xff]
        %v430 = vld [vmem:[#allocation4 + $0x280] sm:$0xff]
        %v431 = vld [vmem:[#allocation4 + $0x288] sm:$0xff]
        %v432 = vld [vmem:[#allocation4 + $0x290] sm:$0xff]
        %v433 = vld [vmem:[#allocation4 + $0x298] sm:$0xff]
        %v434 = vld [vmem:[#allocation4 + $0x2a0] sm:$0xff]
        %v435 = vld [vmem:[#allocation4 + $0x2a8] sm:$0xff]
        %v436 = vld [vmem:[#allocation4 + $0x2b0] sm:$0xff]
        %v437 = vld [vmem:[#allocation4 + $0x2b8] sm:$0xff]
        %v438 = vld [vmem:[#allocation4 + $0x2c0] sm:$0xff]
        %v439 = vld [vmem:[#allocation4 + $0x2c8] sm:$0xff]
        %v440 = vld [vmem:[#allocation4 + $0x2d0] sm:$0xff]
        %v441 = vld [vmem:[#allocation4 + $0x2d8] sm:$0xff]
        %v442 = vld [vmem:[#allocation4 + $0x2e0] sm:$0xff]
        %v443 = vld [vmem:[#allocation4 + $0x2e8] sm:$0xff]
        %v444 = vld [vmem:[#allocation4 + $0x2f0] sm:$0xff]
        %v445 = vld [vmem:[#allocation4 + $0x2f8] sm:$0xff]
        %v446 = vld [vmem:[#allocation4 + $0x300] sm:$0xff]
        %v447 = vld [vmem:[#allocation4 + $0x308] sm:$0xff]
        %v448 = vld [vmem:[#allocation4 + $0x310] sm:$0xff]
        %v449 = vld [vmem:[#allocation4 + $0x318] sm:$0xff]
        %v450 = vld [vmem:[#allocation4 + $0x320] sm:$0xff]
        %v451 = vld [vmem:[#allocation4 + $0x328] sm:$0xff]
        %v452 = vld [vmem:[#allocation4 + $0x330] sm:$0xff]
        %v453 = vld [vmem:[#allocation4 + $0x338] sm:$0xff]
        %v454 = vld [vmem:[#allocation4 + $0x340] sm:$0xff]
        %v455 = vld [vmem:[#allocation4 + $0x348] sm:$0xff]
        %v456 = vld [vmem:[#allocation4 + $0x350] sm:$0xff]
        %v457 = vld [vmem:[#allocation4 + $0x358] sm:$0xff]
        %v458 = vld [vmem:[#allocation4 + $0x360] sm:$0xff]
        %v459 = vld [vmem:[#allocation4 + $0x368] sm:$0xff]
        %v460 = vld [vmem:[#allocation4 + $0x370] sm:$0xff]
        %v461 = vld [vmem:[#allocation4 + $0x378] sm:$0xff]
        %v462 = vld [vmem:[#allocation4 + $0x380] sm:$0xff]
        %v463 = vld [vmem:[#allocation4 + $0x388] sm:$0xff]
        %v464 = vld [vmem:[#allocation4 + $0x390] sm:$0xff]
        %v465 = vld [vmem:[#allocation4 + $0x398] sm:$0xff]
        %v466 = vld [vmem:[#allocation4 + $0x3a0] sm:$0xff]
        %v467 = vld [vmem:[#allocation4 + $0x3a8] sm:$0xff]
        %v468 = vld [vmem:[#allocation4 + $0x3b0] sm:$0xff]
        %v469 = vld [vmem:[#allocation4 + $0x3b8] sm:$0xff]
        %v470 = vld [vmem:[#allocation4 + $0x3c0] sm:$0xff]
        %v471 = vld [vmem:[#allocation4 + $0x3c8] sm:$0xff]
        %v472 = vld [vmem:[#allocation4 + $0x3d0] sm:$0xff]
        %v473 = vld [vmem:[#allocation4 + $0x3d8] sm:$0xff]
        %v474 = vld [vmem:[#allocation4 + $0x3e0] sm:$0xff]
        %v475 = vld [vmem:[#allocation4 + $0x3e8] sm:$0xff]
        %v476 = vld [vmem:[#allocation4 + $0x3f0] sm:$0xff]
        %v477 = vld [vmem:[#allocation4 + $0x3f8] sm:$0xff]
        %v478 = vld [vmem:[#allocation6] sm:$0xf]
        %v480 = vlaneseq
        %v481 = vshrl.u32 %v480, 7
        %v482 = vsub.s32 0, %v481
        %v483 = vrot.slane %v478, %v482
        %v484 = vlaneseq
        %v485 = vshrl.u32 %v484, 7
        %v486 = vsub.s32 1, %v485
        %v487 = vrot.slane %v478, %v486
        %v488 = vlaneseq
        %v489 = vshrl.u32 %v488, 7
        %v490 = vsub.s32 2, %v489
        %v491 = vrot.slane %v478, %v490
        %v492 = vlaneseq
        %v493 = vshrl.u32 %v492, 7
        %v494 = vsub.s32 3, %v493
        %v495 = vrot.slane %v478, %v494
        %500 = vmatprep.subr.mxu0 %v411
        %501 = vmatpush1.msra.mxu0 %v410
        %502 = vmatprep.subr.mxu0 %v407
        %503 = vmatpush1.msra.mxu0 %v406
        %504 = vmatprep.subr.mxu0 %v403
        %505 = vmatpush1.msra.mxu0 %v402
        %506 = vmatprep.subr.mxu0 %v399
        %507 = vmatpush1.msra.mxu0 %v398
        %508 = vmatprep.subr.mxu0 %v395
        %509 = vmatpush1.msra.mxu0 %v394
        %510 = vmatprep.subr.mxu0 %v391
        %511 = vmatpush1.msra.mxu0 %v390
        %512 = vmatprep.subr.mxu0 %v387
        %513 = vmatpush1.msra.mxu0 %v386
        %514 = vmatprep.subr.mxu0 %v383
        %515 = vmatpush1.msra.mxu0 %v382
        %516 = vmatprep.subr.mxu0 %v379
        %517 = vmatpush1.msra.mxu0 %v378
        %518 = vmatprep.subr.mxu0 %v375
        %519 = vmatpush1.msra.mxu0 %v374
        %520 = vmatprep.subr.mxu0 %v371
        %521 = vmatpush1.msra.mxu0 %v370
        %522 = vmatprep.subr.mxu0 %v367
        %523 = vmatpush1.msra.mxu0 %v366
        %524 = vmatprep.subr.mxu0 %v363
        %525 = vmatpush1.msra.mxu0 %v362
        %526 = vmatprep.subr.mxu0 %v359
        %527 = vmatpush1.msra.mxu0 %v358
        %528 = vmatprep.subr.mxu0 %v355
        %529 = vmatpush1.msra.mxu0 %v354
        %530 = vmatprep.subr.mxu0 %v351
        %531 = vmatpush1.msra.mxu0 %v350
        %532 = vmatprep.subr.mxu0 %v475
        %533 = vmatpush2.msra.mxu0 %v474
        %534 = vmatprep.subr.mxu0 %v471
        %535 = vmatpush2.msra.mxu0 %v470
        %536 = vmatprep.subr.mxu0 %v467
        %537 = vmatpush2.msra.mxu0 %v466
        %538 = vmatprep.subr.mxu0 %v463
        %539 = vmatpush2.msra.mxu0 %v462
        %540 = vmatprep.subr.mxu0 %v459
        %541 = vmatpush2.msra.mxu0 %v458
        %542 = vmatprep.subr.mxu0 %v455
        %543 = vmatpush2.msra.mxu0 %v454
        %544 = vmatprep.subr.mxu0 %v451
        %545 = vmatpush2.msra.mxu0 %v450
        %546 = vmatprep.subr.mxu0 %v447
        %547 = vmatpush2.msra.mxu0 %v446
        %548 = vmatprep.subr.mxu0 %v443
        %549 = vmatpush2.msra.mxu0 %v442
        %550 = vmatprep.subr.mxu0 %v439
        %551 = vmatpush2.msra.mxu0 %v438
        %552 = vmatprep.subr.mxu0 %v435
        %553 = vmatpush2.msra.mxu0 %v434
        %554 = vmatprep.subr.mxu0 %v431
        %555 = vmatpush2.msra.mxu0 %v430
        %556 = vmatprep.subr.mxu0 %v427
        %557 = vmatpush2.msra.mxu0 %v426
        %558 = vmatprep.subr.mxu0 %v423
        %559 = vmatpush2.msra.mxu0 %v422
        %560 = vmatprep.subr.mxu0 %v419
        %561 = vmatpush2.msra.mxu0 %v418
        %562 = vmatprep.subr.mxu0 %v415
        %563 = vmatpush2.msra.mxu0 %v414
        %564 = vmatprep.mubr.f32.mxu0 %v348
        %565 = vmatmul.mubr.f32.gmra.mxu0 %v347
        %v566 = vpop.f32.mrf.mxu0
        %v567 = vadd.f32 %v483, %v566
        %v568 = vpop.f32.mrf.mxu0
        %v569 = vadd.f32 %v487, %v568
        %570 = vdwg.mxu0
        %571 = vmatprep.subr.mxu0 %v413
        %572 = vmatpush1.msra.mxu0 %v412
        %573 = vmatprep.subr.mxu0 %v409
        %574 = vmatpush1.msra.mxu0 %v408
        %575 = vmatprep.subr.mxu0 %v405
        %576 = vmatpush1.msra.mxu0 %v404
        %577 = vmatprep.subr.mxu0 %v401
        %578 = vmatpush1.msra.mxu0 %v400
        %579 = vmatprep.subr.mxu0 %v397
        %580 = vmatpush1.msra.mxu0 %v396
        %581 = vmatprep.subr.mxu0 %v393
        %582 = vmatpush1.msra.mxu0 %v392
        %583 = vmatprep.subr.mxu0 %v389
        %584 = vmatpush1.msra.mxu0 %v388
        %585 = vmatprep.subr.mxu0 %v385
        %586 = vmatpush1.msra.mxu0 %v384
        %587 = vmatprep.subr.mxu0 %v381
        %588 = vmatpush1.msra.mxu0 %v380
        %589 = vmatprep.subr.mxu0 %v377
        %590 = vmatpush1.msra.mxu0 %v376
        %591 = vmatprep.subr.mxu0 %v373
        %592 = vmatpush1.msra.mxu0 %v372
        %593 = vmatprep.subr.mxu0 %v369
        %594 = vmatpush1.msra.mxu0 %v368
        %595 = vmatprep.subr.mxu0 %v365
        %596 = vmatpush1.msra.mxu0 %v364
        %597 = vmatprep.subr.mxu0 %v361
        %598 = vmatpush1.msra.mxu0 %v360
        %599 = vmatprep.subr.mxu0 %v357
        %600 = vmatpush1.msra.mxu0 %v356
        %601 = vmatprep.subr.mxu0 %v353
        %602 = vmatpush1.msra.mxu0 %v352
        %603 = vmatprep.subr.mxu0 %v477
        %604 = vmatpush2.msra.mxu0 %v476
        %605 = vmatprep.subr.mxu0 %v473
        %606 = vmatpush2.msra.mxu0 %v472
        %607 = vmatprep.subr.mxu0 %v469
        %608 = vmatpush2.msra.mxu0 %v468
        %609 = vmatprep.subr.mxu0 %v465
        %610 = vmatpush2.msra.mxu0 %v464
        %611 = vmatprep.subr.mxu0 %v461
        %612 = vmatpush2.msra.mxu0 %v460
        %613 = vmatprep.subr.mxu0 %v457
        %614 = vmatpush2.msra.mxu0 %v456
        %615 = vmatprep.subr.mxu0 %v453
        %616 = vmatpush2.msra.mxu0 %v452
        %617 = vmatprep.subr.mxu0 %v449
        %618 = vmatpush2.msra.mxu0 %v448
        %619 = vmatprep.subr.mxu0 %v445
        %620 = vmatpush2.msra.mxu0 %v444
        %621 = vmatprep.subr.mxu0 %v441
        %622 = vmatpush2.msra.mxu0 %v440
        %623 = vmatprep.subr.mxu0 %v437
        %624 = vmatpush2.msra.mxu0 %v436
        %625 = vmatprep.subr.mxu0 %v433
        %626 = vmatpush2.msra.mxu0 %v432
        %627 = vmatprep.subr.mxu0 %v429
        %628 = vmatpush2.msra.mxu0 %v428
        %629 = vmatprep.subr.mxu0 %v425
        %630 = vmatpush2.msra.mxu0 %v424
        %631 = vmatprep.subr.mxu0 %v421
        %632 = vmatpush2.msra.mxu0 %v420
        %633 = vmatprep.subr.mxu0 %v417
        %634 = vmatpush2.msra.mxu0 %v416
        %635 = vmatprep.mubr.f32.mxu0 %v348
        %636 = vmatmul.mubr.f32.gmra.mxu0 %v347
        %v637 = vpop.f32.mrf.mxu0
        %v638 = vadd.f32 %v491, %v637
        %v639 = vpop.f32.mrf.mxu0
        %v640 = vadd.f32 %v495, %v639
        %641 = vdwg.mxu0
        %v642 = vxor.u32 %v567, 2147483648
        %v643 = vmul.f32 %v642, 1.442695
        %v644 = vpow.pop %v643
        %v645 = vadd.f32 %v644, 1.0
        %v646 = vrcp.pop %v645
        %v647 = vmul.f32 1.0, %v646
        %v648 = vxor.u32 %v569, 2147483648
        %v649 = vmul.f32 %v648, 1.442695
        %v650 = vpow.pop %v649
        %v651 = vadd.f32 %v650, 1.0
        %v652 = vrcp.pop %v651
        %v653 = vmul.f32 1.0, %v652
        %v654 = vtanh.pop %v638
        %v655 = vxor.u32 %v640, 2147483648
        %v656 = vmul.f32 %v655, 1.442695
        %v657 = vpow.pop %v656
        %v658 = vadd.f32 %v657, 1.0
        %v659 = vrcp.pop %v658
        %v660 = vmul.f32 1.0, %v659
        %v661 = vmul.f32 %v653, %v349
        %v662 = vmul.f32 %v647, %v654
        %v663 = vadd.f32 %v661, %v662
        %v664 = vtanh.pop %v663
        %v665 = vmul.f32 %v660, %v664
        %666 = vst [vmem:[#allocation2] sm:$0xff] %v665
        %667 = vst [vmem:[#allocation3] sm:$0xff] %v663
        %s668 = scalar_lea.vmem [#allocation2], 8
        %v669 = vld [vmem:[%s668] sm:$0xff]
        %s670 = scalar_lea.vmem [#allocation3], 8
        %v671 = vld [vmem:[%s670] sm:$0xff]
        %s672 = scalar_lea.vmem [#allocation4], 1024
        %v673 = vld [vmem:[%s672] sm:$0xff]
        %v674 = vld [vmem:[%s672 + $0x8] sm:$0xff]
        %v675 = vld [vmem:[%s672 + $0x10] sm:$0xff]
        %v676 = vld [vmem:[%s672 + $0x18] sm:$0xff]
        %v677 = vld [vmem:[%s672 + $0x20] sm:$0xff]
        %v678 = vld [vmem:[%s672 + $0x28] sm:$0xff]
        %v679 = vld [vmem:[%s672 + $0x30] sm:$0xff]
        %v680 = vld [vmem:[%s672 + $0x38] sm:$0xff]
        %v681 = vld [vmem:[%s672 + $0x40] sm:$0xff]
        %v682 = vld [vmem:[%s672 + $0x48] sm:$0xff]
        %v683 = vld [vmem:[%s672 + $0x50] sm:$0xff]
        %v684 = vld [vmem:[%s672 + $0x58] sm:$0xff]
        %v685 = vld [vmem:[%s672 + $0x60] sm:$0xff]
        %v686 = vld [vmem:[%s672 + $0x68] sm:$0xff]
        %v687 = vld [vmem:[%s672 + $0x70] sm:$0xff]
        %v688 = vld [vmem:[%s672 + $0x78] sm:$0xff]
        %v689 = vld [vmem:[%s672 + $0x80] sm:$0xff]
        %v690 = vld [vmem:[%s672 + $0x88] sm:$0xff]
        %v691 = vld [vmem:[%s672 + $0x90] sm:$0xff]
        %v692 = vld [vmem:[%s672 + $0x98] sm:$0xff]
        %v693 = vld [vmem:[%s672 + $0xa0] sm:$0xff]
        %v694 = vld [vmem:[%s672 + $0xa8] sm:$0xff]
        %v695 = vld [vmem:[%s672 + $0xb0] sm:$0xff]
        %v696 = vld [vmem:[%s672 + $0xb8] sm:$0xff]
        %v697 = vld [vmem:[%s672 + $0xc0] sm:$0xff]
        %v698 = vld [vmem:[%s672 + $0xc8] sm:$0xff]
        %v699 = vld [vmem:[%s672 + $0xd0] sm:$0xff]
        %v700 = vld [vmem:[%s672 + $0xd8] sm:$0xff]
        %v701 = vld [vmem:[%s672 + $0xe0] sm:$0xff]
        %v702 = vld [vmem:[%s672 + $0xe8] sm:$0xff]
        %v703 = vld [vmem:[%s672 + $0xf0] sm:$0xff]
        %v704 = vld [vmem:[%s672 + $0xf8] sm:$0xff]
        %v705 = vld [vmem:[%s672 + $0x100] sm:$0xff]
        %v706 = vld [vmem:[%s672 + $0x108] sm:$0xff]
        %v707 = vld [vmem:[%s672 + $0x110] sm:$0xff]
        %v708 = vld [vmem:[%s672 + $0x118] sm:$0xff]
        %v709 = vld [vmem:[%s672 + $0x120] sm:$0xff]
        %v710 = vld [vmem:[%s672 + $0x128] sm:$0xff]
        %v711 = vld [vmem:[%s672 + $0x130] sm:$0xff]
        %v712 = vld [vmem:[%s672 + $0x138] sm:$0xff]
        %v713 = vld [vmem:[%s672 + $0x140] sm:$0xff]
        %v714 = vld [vmem:[%s672 + $0x148] sm:$0xff]
        %v715 = vld [vmem:[%s672 + $0x150] sm:$0xff]
        %v716 = vld [vmem:[%s672 + $0x158] sm:$0xff]
        %v717 = vld [vmem:[%s672 + $0x160] sm:$0xff]
        %v718 = vld [vmem:[%s672 + $0x168] sm:$0xff]
        %v719 = vld [vmem:[%s672 + $0x170] sm:$0xff]
        %v720 = vld [vmem:[%s672 + $0x178] sm:$0xff]
        %v721 = vld [vmem:[%s672 + $0x180] sm:$0xff]
        %v722 = vld [vmem:[%s672 + $0x188] sm:$0xff]
        %v723 = vld [vmem:[%s672 + $0x190] sm:$0xff]
        %v724 = vld [vmem:[%s672 + $0x198] sm:$0xff]
        %v725 = vld [vmem:[%s672 + $0x1a0] sm:$0xff]
        %v726 = vld [vmem:[%s672 + $0x1a8] sm:$0xff]
        %v727 = vld [vmem:[%s672 + $0x1b0] sm:$0xff]
        %v728 = vld [vmem:[%s672 + $0x1b8] sm:$0xff]
        %v729 = vld [vmem:[%s672 + $0x1c0] sm:$0xff]
        %v730 = vld [vmem:[%s672 + $0x1c8] sm:$0xff]
        %v731 = vld [vmem:[%s672 + $0x1d0] sm:$0xff]
        %v732 = vld [vmem:[%s672 + $0x1d8] sm:$0xff]
        %v733 = vld [vmem:[%s672 + $0x1e0] sm:$0xff]
        %v734 = vld [vmem:[%s672 + $0x1e8] sm:$0xff]
        %v735 = vld [vmem:[%s672 + $0x1f0] sm:$0xff]
        %v736 = vld [vmem:[%s672 + $0x1f8] sm:$0xff]
        %v737 = vld [vmem:[%s672 + $0x200] sm:$0xff]
        %v738 = vld [vmem:[%s672 + $0x208] sm:$0xff]
        %v739 = vld [vmem:[%s672 + $0x210] sm:$0xff]
        %v740 = vld [vmem:[%s672 + $0x218] sm:$0xff]
        %v741 = vld [vmem:[%s672 + $0x220] sm:$0xff]
        %v742 = vld [vmem:[%s672 + $0x228] sm:$0xff]
        %v743 = vld [vmem:[%s672 + $0x230] sm:$0xff]
        %v744 = vld [vmem:[%s672 + $0x238] sm:$0xff]
        %v745 = vld [vmem:[%s672 + $0x240] sm:$0xff]
        %v746 = vld [vmem:[%s672 + $0x248] sm:$0xff]
        %v747 = vld [vmem:[%s672 + $0x250] sm:$0xff]
        %v748 = vld [vmem:[%s672 + $0x258] sm:$0xff]
        %v749 = vld [vmem:[%s672 + $0x260] sm:$0xff]
        %v750 = vld [vmem:[%s672 + $0x268] sm:$0xff]
        %v751 = vld [vmem:[%s672 + $0x270] sm:$0xff]
        %v752 = vld [vmem:[%s672 + $0x278] sm:$0xff]
        %v753 = vld [vmem:[%s672 + $0x280] sm:$0xff]
        %v754 = vld [vmem:[%s672 + $0x288] sm:$0xff]
        %v755 = vld [vmem:[%s672 + $0x290] sm:$0xff]
        %v756 = vld [vmem:[%s672 + $0x298] sm:$0xff]
        %v757 = vld [vmem:[%s672 + $0x2a0] sm:$0xff]
        %v758 = vld [vmem:[%s672 + $0x2a8] sm:$0xff]
        %v759 = vld [vmem:[%s672 + $0x2b0] sm:$0xff]
        %v760 = vld [vmem:[%s672 + $0x2b8] sm:$0xff]
        %v761 = vld [vmem:[%s672 + $0x2c0] sm:$0xff]
        %v762 = vld [vmem:[%s672 + $0x2c8] sm:$0xff]
        %v763 = vld [vmem:[%s672 + $0x2d0] sm:$0xff]
        %v764 = vld [vmem:[%s672 + $0x2d8] sm:$0xff]
        %v765 = vld [vmem:[%s672 + $0x2e0] sm:$0xff]
        %v766 = vld [vmem:[%s672 + $0x2e8] sm:$0xff]
        %v767 = vld [vmem:[%s672 + $0x2f0] sm:$0xff]
        %v768 = vld [vmem:[%s672 + $0x2f8] sm:$0xff]
        %v769 = vld [vmem:[%s672 + $0x300] sm:$0xff]
        %v770 = vld [vmem:[%s672 + $0x308] sm:$0xff]
        %v771 = vld [vmem:[%s672 + $0x310] sm:$0xff]
        %v772 = vld [vmem:[%s672 + $0x318] sm:$0xff]
        %v773 = vld [vmem:[%s672 + $0x320] sm:$0xff]
        %v774 = vld [vmem:[%s672 + $0x328] sm:$0xff]
        %v775 = vld [vmem:[%s672 + $0x330] sm:$0xff]
        %v776 = vld [vmem:[%s672 + $0x338] sm:$0xff]
        %v777 = vld [vmem:[%s672 + $0x340] sm:$0xff]
        %v778 = vld [vmem:[%s672 + $0x348] sm:$0xff]
        %v779 = vld [vmem:[%s672 + $0x350] sm:$0xff]
        %v780 = vld [vmem:[%s672 + $0x358] sm:$0xff]
        %v781 = vld [vmem:[%s672 + $0x360] sm:$0xff]
        %v782 = vld [vmem:[%s672 + $0x368] sm:$0xff]
        %v783 = vld [vmem:[%s672 + $0x370] sm:$0xff]
        %v784 = vld [vmem:[%s672 + $0x378] sm:$0xff]
        %v785 = vld [vmem:[%s672 + $0x380] sm:$0xff]
        %v786 = vld [vmem:[%s672 + $0x388] sm:$0xff]
        %v787 = vld [vmem:[%s672 + $0x390] sm:$0xff]
        %v788 = vld [vmem:[%s672 + $0x398] sm:$0xff]
        %v789 = vld [vmem:[%s672 + $0x3a0] sm:$0xff]
        %v790 = vld [vmem:[%s672 + $0x3a8] sm:$0xff]
        %v791 = vld [vmem:[%s672 + $0x3b0] sm:$0xff]
        %v792 = vld [vmem:[%s672 + $0x3b8] sm:$0xff]
        %v793 = vld [vmem:[%s672 + $0x3c0] sm:$0xff]
        %v794 = vld [vmem:[%s672 + $0x3c8] sm:$0xff]
        %v795 = vld [vmem:[%s672 + $0x3d0] sm:$0xff]
        %v796 = vld [vmem:[%s672 + $0x3d8] sm:$0xff]
        %v797 = vld [vmem:[%s672 + $0x3e0] sm:$0xff]
        %v798 = vld [vmem:[%s672 + $0x3e8] sm:$0xff]
        %v799 = vld [vmem:[%s672 + $0x3f0] sm:$0xff]
        %v800 = vld [vmem:[%s672 + $0x3f8] sm:$0xff]
        %s801 = scalar_lea.vmem [#allocation6], 4
        %v802 = vld [vmem:[%s801] sm:$0xf]
        %v804 = vlaneseq
        %v805 = vshrl.u32 %v804, 7
        %v806 = vsub.s32 0, %v805
        %v807 = vrot.slane %v802, %v806
        %v808 = vlaneseq
        %v809 = vshrl.u32 %v808, 7
        %v810 = vsub.s32 1, %v809
        %v811 = vrot.slane %v802, %v810
        %v812 = vlaneseq
        %v813 = vshrl.u32 %v812, 7
        %v814 = vsub.s32 2, %v813
        %v815 = vrot.slane %v802, %v814
        %v816 = vlaneseq
        %v817 = vshrl.u32 %v816, 7
        %v818 = vsub.s32 3, %v817
        %v819 = vrot.slane %v802, %v818
        %824 = vmatprep.subr.mxu0 %v734
        %825 = vmatpush1.msra.mxu0 %v733
        %826 = vmatprep.subr.mxu0 %v730
        %827 = vmatpush1.msra.mxu0 %v729
        %828 = vmatprep.subr.mxu0 %v726
        %829 = vmatpush1.msra.mxu0 %v725
        %830 = vmatprep.subr.mxu0 %v722
        %831 = vmatpush1.msra.mxu0 %v721
        %832 = vmatprep.subr.mxu0 %v718
        %833 = vmatpush1.msra.mxu0 %v717
        %834 = vmatprep.subr.mxu0 %v714
        %835 = vmatpush1.msra.mxu0 %v713
        %836 = vmatprep.subr.mxu0 %v710
        %837 = vmatpush1.msra.mxu0 %v709
        %838 = vmatprep.subr.mxu0 %v706
        %839 = vmatpush1.msra.mxu0 %v705
        %840 = vmatprep.subr.mxu0 %v702
        %841 = vmatpush1.msra.mxu0 %v701
        %842 = vmatprep.subr.mxu0 %v698
        %843 = vmatpush1.msra.mxu0 %v697
        %844 = vmatprep.subr.mxu0 %v694
        %845 = vmatpush1.msra.mxu0 %v693
        %846 = vmatprep.subr.mxu0 %v690
        %847 = vmatpush1.msra.mxu0 %v689
        %848 = vmatprep.subr.mxu0 %v686
        %849 = vmatpush1.msra.mxu0 %v685
        %850 = vmatprep.subr.mxu0 %v682
        %851 = vmatpush1.msra.mxu0 %v681
        %852 = vmatprep.subr.mxu0 %v678
        %853 = vmatpush1.msra.mxu0 %v677
        %854 = vmatprep.subr.mxu0 %v674
        %855 = vmatpush1.msra.mxu0 %v673
        %856 = vmatprep.subr.mxu0 %v798
        %857 = vmatpush2.msra.mxu0 %v797
        %858 = vmatprep.subr.mxu0 %v794
        %859 = vmatpush2.msra.mxu0 %v793
        %860 = vmatprep.subr.mxu0 %v790
        %861 = vmatpush2.msra.mxu0 %v789
        %862 = vmatprep.subr.mxu0 %v786
        %863 = vmatpush2.msra.mxu0 %v785
        %864 = vmatprep.subr.mxu0 %v782
        %865 = vmatpush2.msra.mxu0 %v781
        %866 = vmatprep.subr.mxu0 %v778
        %867 = vmatpush2.msra.mxu0 %v777
        %868 = vmatprep.subr.mxu0 %v774
        %869 = vmatpush2.msra.mxu0 %v773
        %870 = vmatprep.subr.mxu0 %v770
        %871 = vmatpush2.msra.mxu0 %v769
        %872 = vmatprep.subr.mxu0 %v766
        %873 = vmatpush2.msra.mxu0 %v765
        %874 = vmatprep.subr.mxu0 %v762
        %875 = vmatpush2.msra.mxu0 %v761
        %876 = vmatprep.subr.mxu0 %v758
        %877 = vmatpush2.msra.mxu0 %v757
        %878 = vmatprep.subr.mxu0 %v754
        %879 = vmatpush2.msra.mxu0 %v753
        %880 = vmatprep.subr.mxu0 %v750
        %881 = vmatpush2.msra.mxu0 %v749
        %882 = vmatprep.subr.mxu0 %v746
        %883 = vmatpush2.msra.mxu0 %v745
        %884 = vmatprep.subr.mxu0 %v742
        %885 = vmatpush2.msra.mxu0 %v741
        %886 = vmatprep.subr.mxu0 %v738
        %887 = vmatpush2.msra.mxu0 %v737
        %888 = vmatprep.mubr.f32.mxu0 %v669
        %889 = vmatmul.mubr.f32.gmra.mxu0 %v665
        %v890 = vpop.f32.mrf.mxu0
        %v891 = vadd.f32 %v807, %v890
        %v892 = vpop.f32.mrf.mxu0
        %v893 = vadd.f32 %v811, %v892
        %894 = vdwg.mxu0
        %895 = vmatprep.subr.mxu0 %v736
        %896 = vmatpush1.msra.mxu0 %v735
        %897 = vmatprep.subr.mxu0 %v732
        %898 = vmatpush1.msra.mxu0 %v731
        %899 = vmatprep.subr.mxu0 %v728
        %900 = vmatpush1.msra.mxu0 %v727
        %901 = vmatprep.subr.mxu0 %v724
        %902 = vmatpush1.msra.mxu0 %v723
        %903 = vmatprep.subr.mxu0 %v720
        %904 = vmatpush1.msra.mxu0 %v719
        %905 = vmatprep.subr.mxu0 %v716
        %906 = vmatpush1.msra.mxu0 %v715
        %907 = vmatprep.subr.mxu0 %v712
        %908 = vmatpush1.msra.mxu0 %v711
        %909 = vmatprep.subr.mxu0 %v708
        %910 = vmatpush1.msra.mxu0 %v707
        %911 = vmatprep.subr.mxu0 %v704
        %912 = vmatpush1.msra.mxu0 %v703
        %913 = vmatprep.subr.mxu0 %v700
        %914 = vmatpush1.msra.mxu0 %v699
        %915 = vmatprep.subr.mxu0 %v696
        %916 = vmatpush1.msra.mxu0 %v695
        %917 = vmatprep.subr.mxu0 %v692
        %918 = vmatpush1.msra.mxu0 %v691
        %919 = vmatprep.subr.mxu0 %v688
        %920 = vmatpush1.msra.mxu0 %v687
        %921 = vmatprep.subr.mxu0 %v684
        %922 = vmatpush1.msra.mxu0 %v683
        %923 = vmatprep.subr.mxu0 %v680
        %924 = vmatpush1.msra.mxu0 %v679
        %925 = vmatprep.subr.mxu0 %v676
        %926 = vmatpush1.msra.mxu0 %v675
        %927 = vmatprep.subr.mxu0 %v800
        %928 = vmatpush2.msra.mxu0 %v799
        %929 = vmatprep.subr.mxu0 %v796
        %930 = vmatpush2.msra.mxu0 %v795
        %931 = vmatprep.subr.mxu0 %v792
        %932 = vmatpush2.msra.mxu0 %v791
        %933 = vmatprep.subr.mxu0 %v788
        %934 = vmatpush2.msra.mxu0 %v787
        %935 = vmatprep.subr.mxu0 %v784
        %936 = vmatpush2.msra.mxu0 %v783
        %937 = vmatprep.subr.mxu0 %v780
        %938 = vmatpush2.msra.mxu0 %v779
        %939 = vmatprep.subr.mxu0 %v776
        %940 = vmatpush2.msra.mxu0 %v775
        %941 = vmatprep.subr.mxu0 %v772
        %942 = vmatpush2.msra.mxu0 %v771
        %943 = vmatprep.subr.mxu0 %v768
        %944 = vmatpush2.msra.mxu0 %v767
        %945 = vmatprep.subr.mxu0 %v764
        %946 = vmatpush2.msra.mxu0 %v763
        %947 = vmatprep.subr.mxu0 %v760
        %948 = vmatpush2.msra.mxu0 %v759
        %949 = vmatprep.subr.mxu0 %v756
        %950 = vmatpush2.msra.mxu0 %v755
        %951 = vmatprep.subr.mxu0 %v752
        %952 = vmatpush2.msra.mxu0 %v751
        %953 = vmatprep.subr.mxu0 %v748
        %954 = vmatpush2.msra.mxu0 %v747
        %955 = vmatprep.subr.mxu0 %v744
        %956 = vmatpush2.msra.mxu0 %v743
        %957 = vmatprep.subr.mxu0 %v740
        %958 = vmatpush2.msra.mxu0 %v739
        %959 = vmatprep.mubr.f32.mxu0 %v669
        %960 = vmatmul.mubr.f32.gmra.mxu0 %v665
        %v961 = vpop.f32.mrf.mxu0
        %v962 = vadd.f32 %v815, %v961
        %v963 = vpop.f32.mrf.mxu0
        %v964 = vadd.f32 %v819, %v963
        %965 = vdwg.mxu0
        %v966 = vxor.u32 %v891, 2147483648
        %v967 = vmul.f32 %v966, 1.442695
        %v968 = vpow.pop %v967
        %v969 = vadd.f32 %v968, 1.0
        %v970 = vrcp.pop %v969
        %v971 = vmul.f32 1.0, %v970
        %v972 = vxor.u32 %v893, 2147483648
        %v973 = vmul.f32 %v972, 1.442695
        %v974 = vpow.pop %v973
        %v975 = vadd.f32 %v974, 1.0
        %v976 = vrcp.pop %v975
        %v977 = vmul.f32 1.0, %v976
        %v978 = vtanh.pop %v962
        %v979 = vxor.u32 %v964, 2147483648
        %v980 = vmul.f32 %v979, 1.442695
        %v981 = vpow.pop %v980
        %v982 = vadd.f32 %v981, 1.0
        %v983 = vrcp.pop %v982
        %v984 = vmul.f32 1.0, %v983
        %v985 = vmul.f32 %v977, %v671
        %v986 = vmul.f32 %v971, %v978
        %v987 = vadd.f32 %v985, %v986
        %v988 = vtanh.pop %v987
        %v989 = vmul.f32 %v984, %v988
        %990 = vst [vmem:[%s668] sm:$0xff] %v989
        %991 = vst [vmem:[%s670] sm:$0xff] %v987
        %s992 = scalar_lea.vmem [#allocation2], 16
        %v993 = vld [vmem:[%s992] sm:$0xff]
        %s994 = scalar_lea.vmem [#allocation3], 16
        %v995 = vld [vmem:[%s994] sm:$0xff]
        %s996 = scalar_lea.vmem [#allocation4], 2048
        %v997 = vld [vmem:[%s996] sm:$0xff]
        %v998 = vld [vmem:[%s996 + $0x8] sm:$0xff]
        %v999 = vld [vmem:[%s996 + $0x10] sm:$0xff]
        %v1000 = vld [vmem:[%s996 + $0x18] sm:$0xff]
        %v1001 = vld [vmem:[%s996 + $0x20] sm:$0xff]
        %v1002 = vld [vmem:[%s996 + $0x28] sm:$0xff]
        %v1003 = vld [vmem:[%s996 + $0x30] sm:$0xff]
        %v1004 = vld [vmem:[%s996 + $0x38] sm:$0xff]
        %v1005 = vld [vmem:[%s996 + $0x40] sm:$0xff]
        %v1006 = vld [vmem:[%s996 + $0x48] sm:$0xff]
        %v1007 = vld [vmem:[%s996 + $0x50] sm:$0xff]
        %v1008 = vld [vmem:[%s996 + $0x58] sm:$0xff]
        %v1009 = vld [vmem:[%s996 + $0x60] sm:$0xff]
        %v1010 = vld [vmem:[%s996 + $0x68] sm:$0xff]
        %v1011 = vld [vmem:[%s996 + $0x70] sm:$0xff]
        %v1012 = vld [vmem:[%s996 + $0x78] sm:$0xff]
        %v1013 = vld [vmem:[%s996 + $0x80] sm:$0xff]
        %v1014 = vld [vmem:[%s996 + $0x88] sm:$0xff]
        %v1015 = vld [vmem:[%s996 + $0x90] sm:$0xff]
        %v1016 = vld [vmem:[%s996 + $0x98] sm:$0xff]
        %v1017 = vld [vmem:[%s996 + $0xa0] sm:$0xff]
        %v1018 = vld [vmem:[%s996 + $0xa8] sm:$0xff]
        %v1019 = vld [vmem:[%s996 + $0xb0] sm:$0xff]
        %v1020 = vld [vmem:[%s996 + $0xb8] sm:$0xff]
        %v1021 = vld [vmem:[%s996 + $0xc0] sm:$0xff]
        %v1022 = vld [vmem:[%s996 + $0xc8] sm:$0xff]
        %v1023 = vld [vmem:[%s996 + $0xd0] sm:$0xff]
        %v1024 = vld [vmem:[%s996 + $0xd8] sm:$0xff]
        %v1025 = vld [vmem:[%s996 + $0xe0] sm:$0xff]
        %v1026 = vld [vmem:[%s996 + $0xe8] sm:$0xff]
        %v1027 = vld [vmem:[%s996 + $0xf0] sm:$0xff]
        %v1028 = vld [vmem:[%s996 + $0xf8] sm:$0xff]
        %v1029 = vld [vmem:[%s996 + $0x100] sm:$0xff]
        %v1030 = vld [vmem:[%s996 + $0x108] sm:$0xff]
        %v1031 = vld [vmem:[%s996 + $0x110] sm:$0xff]
        %v1032 = vld [vmem:[%s996 + $0x118] sm:$0xff]
        %v1033 = vld [vmem:[%s996 + $0x120] sm:$0xff]
        %v1034 = vld [vmem:[%s996 + $0x128] sm:$0xff]
        %v1035 = vld [vmem:[%s996 + $0x130] sm:$0xff]
        %v1036 = vld [vmem:[%s996 + $0x138] sm:$0xff]
        %v1037 = vld [vmem:[%s996 + $0x140] sm:$0xff]
        %v1038 = vld [vmem:[%s996 + $0x148] sm:$0xff]
        %v1039 = vld [vmem:[%s996 + $0x150] sm:$0xff]
        %v1040 = vld [vmem:[%s996 + $0x158] sm:$0xff]
        %v1041 = vld [vmem:[%s996 + $0x160] sm:$0xff]
        %v1042 = vld [vmem:[%s996 + $0x168] sm:$0xff]
        %v1043 = vld [vmem:[%s996 + $0x170] sm:$0xff]
        %v1044 = vld [vmem:[%s996 + $0x178] sm:$0xff]
        %v1045 = vld [vmem:[%s996 + $0x180] sm:$0xff]
        %v1046 = vld [vmem:[%s996 + $0x188] sm:$0xff]
        %v1047 = vld [vmem:[%s996 + $0x190] sm:$0xff]
        %v1048 = vld [vmem:[%s996 + $0x198] sm:$0xff]
        %v1049 = vld [vmem:[%s996 + $0x1a0] sm:$0xff]
        %v1050 = vld [vmem:[%s996 + $0x1a8] sm:$0xff]
        %v1051 = vld [vmem:[%s996 + $0x1b0] sm:$0xff]
        %v1052 = vld [vmem:[%s996 + $0x1b8] sm:$0xff]
        %v1053 = vld [vmem:[%s996 + $0x1c0] sm:$0xff]
        %v1054 = vld [vmem:[%s996 + $0x1c8] sm:$0xff]
        %v1055 = vld [vmem:[%s996 + $0x1d0] sm:$0xff]
        %v1056 = vld [vmem:[%s996 + $0x1d8] sm:$0xff]
        %v1057 = vld [vmem:[%s996 + $0x1e0] sm:$0xff]
        %v1058 = vld [vmem:[%s996 + $0x1e8] sm:$0xff]
        %v1059 = vld [vmem:[%s996 + $0x1f0] sm:$0xff]
        %v1060 = vld [vmem:[%s996 + $0x1f8] sm:$0xff]
        %v1061 = vld [vmem:[%s996 + $0x200] sm:$0xff]
        %v1062 = vld [vmem:[%s996 + $0x208] sm:$0xff]
        %v1063 = vld [vmem:[%s996 + $0x210] sm:$0xff]
        %v1064 = vld [vmem:[%s996 + $0x218] sm:$0xff]
        %v1065 = vld [vmem:[%s996 + $0x220] sm:$0xff]
        %v1066 = vld [vmem:[%s996 + $0x228] sm:$0xff]
        %v1067 = vld [vmem:[%s996 + $0x230] sm:$0xff]
        %v1068 = vld [vmem:[%s996 + $0x238] sm:$0xff]
        %v1069 = vld [vmem:[%s996 + $0x240] sm:$0xff]
        %v1070 = vld [vmem:[%s996 + $0x248] sm:$0xff]
        %v1071 = vld [vmem:[%s996 + $0x250] sm:$0xff]
        %v1072 = vld [vmem:[%s996 + $0x258] sm:$0xff]
        %v1073 = vld [vmem:[%s996 + $0x260] sm:$0xff]
        %v1074 = vld [vmem:[%s996 + $0x268] sm:$0xff]
        %v1075 = vld [vmem:[%s996 + $0x270] sm:$0xff]
        %v1076 = vld [vmem:[%s996 + $0x278] sm:$0xff]
        %v1077 = vld [vmem:[%s996 + $0x280] sm:$0xff]
        %v1078 = vld [vmem:[%s996 + $0x288] sm:$0xff]
        %v1079 = vld [vmem:[%s996 + $0x290] sm:$0xff]
        %v1080 = vld [vmem:[%s996 + $0x298] sm:$0xff]
        %v1081 = vld [vmem:[%s996 + $0x2a0] sm:$0xff]
        %v1082 = vld [vmem:[%s996 + $0x2a8] sm:$0xff]
        %v1083 = vld [vmem:[%s996 + $0x2b0] sm:$0xff]
        %v1084 = vld [vmem:[%s996 + $0x2b8] sm:$0xff]
        %v1085 = vld [vmem:[%s996 + $0x2c0] sm:$0xff]
        %v1086 = vld [vmem:[%s996 + $0x2c8] sm:$0xff]
        %v1087 = vld [vmem:[%s996 + $0x2d0] sm:$0xff]
        %v1088 = vld [vmem:[%s996 + $0x2d8] sm:$0xff]
        %v1089 = vld [vmem:[%s996 + $0x2e0] sm:$0xff]
        %v1090 = vld [vmem:[%s996 + $0x2e8] sm:$0xff]
        %v1091 = vld [vmem:[%s996 + $0x2f0] sm:$0xff]
        %v1092 = vld [vmem:[%s996 + $0x2f8] sm:$0xff]
        %v1093 = vld [vmem:[%s996 + $0x300] sm:$0xff]
        %v1094 = vld [vmem:[%s996 + $0x308] sm:$0xff]
        %v1095 = vld [vmem:[%s996 + $0x310] sm:$0xff]
        %v1096 = vld [vmem:[%s996 + $0x318] sm:$0xff]
        %v1097 = vld [vmem:[%s996 + $0x320] sm:$0xff]
        %v1098 = vld [vmem:[%s996 + $0x328] sm:$0xff]
        %v1099 = vld [vmem:[%s996 + $0x330] sm:$0xff]
        %v1100 = vld [vmem:[%s996 + $0x338] sm:$0xff]
        %v1101 = vld [vmem:[%s996 + $0x340] sm:$0xff]
        %v1102 = vld [vmem:[%s996 + $0x348] sm:$0xff]
        %v1103 = vld [vmem:[%s996 + $0x350] sm:$0xff]
        %v1104 = vld [vmem:[%s996 + $0x358] sm:$0xff]
        %v1105 = vld [vmem:[%s996 + $0x360] sm:$0xff]
        %v1106 = vld [vmem:[%s996 + $0x368] sm:$0xff]
        %v1107 = vld [vmem:[%s996 + $0x370] sm:$0xff]
        %v1108 = vld [vmem:[%s996 + $0x378] sm:$0xff]
        %v1109 = vld [vmem:[%s996 + $0x380] sm:$0xff]
        %v1110 = vld [vmem:[%s996 + $0x388] sm:$0xff]
        %v1111 = vld [vmem:[%s996 + $0x390] sm:$0xff]
        %v1112 = vld [vmem:[%s996 + $0x398] sm:$0xff]
        %v1113 = vld [vmem:[%s996 + $0x3a0] sm:$0xff]
        %v1114 = vld [vmem:[%s996 + $0x3a8] sm:$0xff]
        %v1115 = vld [vmem:[%s996 + $0x3b0] sm:$0xff]
        %v1116 = vld [vmem:[%s996 + $0x3b8] sm:$0xff]
        %v1117 = vld [vmem:[%s996 + $0x3c0] sm:$0xff]
        %v1118 = vld [vmem:[%s996 + $0x3c8] sm:$0xff]
        %v1119 = vld [vmem:[%s996 + $0x3d0] sm:$0xff]
        %v1120 = vld [vmem:[%s996 + $0x3d8] sm:$0xff]
        %v1121 = vld [vmem:[%s996 + $0x3e0] sm:$0xff]
        %v1122 = vld [vmem:[%s996 + $0x3e8] sm:$0xff]
        %v1123 = vld [vmem:[%s996 + $0x3f0] sm:$0xff]
        %v1124 = vld [vmem:[%s996 + $0x3f8] sm:$0xff]
        %s1125 = scalar_lea.vmem [#allocation6], 8
        %v1126 = vld [vmem:[%s1125] sm:$0xf]
        %v1128 = vlaneseq
        %v1129 = vshrl.u32 %v1128, 7
        %v1130 = vsub.s32 0, %v1129
        %v1131 = vrot.slane %v1126, %v1130
        %v1132 = vlaneseq
        %v1133 = vshrl.u32 %v1132, 7
        %v1134 = vsub.s32 1, %v1133
        %v1135 = vrot.slane %v1126, %v1134
        %v1136 = vlaneseq
        %v1137 = vshrl.u32 %v1136, 7
        %v1138 = vsub.s32 2, %v1137
        %v1139 = vrot.slane %v1126, %v1138
        %v1140 = vlaneseq
        %v1141 = vshrl.u32 %v1140, 7
        %v1142 = vsub.s32 3, %v1141
        %v1143 = vrot.slane %v1126, %v1142
        %1148 = vmatprep.subr.mxu0 %v1058
        %1149 = vmatpush1.msra.mxu0 %v1057
        %1150 = vmatprep.subr.mxu0 %v1054
        %1151 = vmatpush1.msra.mxu0 %v1053
        %1152 = vmatprep.subr.mxu0 %v1050
        %1153 = vmatpush1.msra.mxu0 %v1049
        %1154 = vmatprep.subr.mxu0 %v1046
        %1155 = vmatpush1.msra.mxu0 %v1045
        %1156 = vmatprep.subr.mxu0 %v1042
        %1157 = vmatpush1.msra.mxu0 %v1041
        %1158 = vmatprep.subr.mxu0 %v1038
        %1159 = vmatpush1.msra.mxu0 %v1037
        %1160 = vmatprep.subr.mxu0 %v1034
        %1161 = vmatpush1.msra.mxu0 %v1033
        %1162 = vmatprep.subr.mxu0 %v1030
        %1163 = vmatpush1.msra.mxu0 %v1029
        %1164 = vmatprep.subr.mxu0 %v1026
        %1165 = vmatpush1.msra.mxu0 %v1025
        %1166 = vmatprep.subr.mxu0 %v1022
        %1167 = vmatpush1.msra.mxu0 %v1021
        %1168 = vmatprep.subr.mxu0 %v1018
        %1169 = vmatpush1.msra.mxu0 %v1017
        %1170 = vmatprep.subr.mxu0 %v1014
        %1171 = vmatpush1.msra.mxu0 %v1013
        %1172 = vmatprep.subr.mxu0 %v1010
        %1173 = vmatpush1.msra.mxu0 %v1009
        %1174 = vmatprep.subr.mxu0 %v1006
        %1175 = vmatpush1.msra.mxu0 %v1005
        %1176 = vmatprep.subr.mxu0 %v1002
        %1177 = vmatpush1.msra.mxu0 %v1001
        %1178 = vmatprep.subr.mxu0 %v998
        %1179 = vmatpush1.msra.mxu0 %v997
        %1180 = vmatprep.subr.mxu0 %v1122
        %1181 = vmatpush2.msra.mxu0 %v1121
        %1182 = vmatprep.subr.mxu0 %v1118
        %1183 = vmatpush2.msra.mxu0 %v1117
        %1184 = vmatprep.subr.mxu0 %v1114
        %1185 = vmatpush2.msra.mxu0 %v1113
        %1186 = vmatprep.subr.mxu0 %v1110
        %1187 = vmatpush2.msra.mxu0 %v1109
        %1188 = vmatprep.subr.mxu0 %v1106
        %1189 = vmatpush2.msra.mxu0 %v1105
        %1190 = vmatprep.subr.mxu0 %v1102
        %1191 = vmatpush2.msra.mxu0 %v1101
        %1192 = vmatprep.subr.mxu0 %v1098
        %1193 = vmatpush2.msra.mxu0 %v1097
        %1194 = vmatprep.subr.mxu0 %v1094
        %1195 = vmatpush2.msra.mxu0 %v1093
        %1196 = vmatprep.subr.mxu0 %v1090
        %1197 = vmatpush2.msra.mxu0 %v1089
        %1198 = vmatprep.subr.mxu0 %v1086
        %1199 = vmatpush2.msra.mxu0 %v1085
        %1200 = vmatprep.subr.mxu0 %v1082
        %1201 = vmatpush2.msra.mxu0 %v1081
        %1202 = vmatprep.subr.mxu0 %v1078
        %1203 = vmatpush2.msra.mxu0 %v1077
        %1204 = vmatprep.subr.mxu0 %v1074
        %1205 = vmatpush2.msra.mxu0 %v1073
        %1206 = vmatprep.subr.mxu0 %v1070
        %1207 = vmatpush2.msra.mxu0 %v1069
        %1208 = vmatprep.subr.mxu0 %v1066
        %1209 = vmatpush2.msra.mxu0 %v1065
        %1210 = vmatprep.subr.mxu0 %v1062
        %1211 = vmatpush2.msra.mxu0 %v1061
        %1212 = vmatprep.mubr.f32.mxu0 %v993
        %1213 = vmatmul.mubr.f32.gmra.mxu0 %v989
        %v1214 = vpop.f32.mrf.mxu0
        %v1215 = vadd.f32 %v1131, %v1214
        %v1216 = vpop.f32.mrf.mxu0
        %v1217 = vadd.f32 %v1135, %v1216
        %1218 = vdwg.mxu0
        %1219 = vmatprep.subr.mxu0 %v1060
        %1220 = vmatpush1.msra.mxu0 %v1059
        %1221 = vmatprep.subr.mxu0 %v1056
        %1222 = vmatpush1.msra.mxu0 %v1055
        %1223 = vmatprep.subr.mxu0 %v1052
        %1224 = vmatpush1.msra.mxu0 %v1051
        %1225 = vmatprep.subr.mxu0 %v1048
        %1226 = vmatpush1.msra.mxu0 %v1047
        %1227 = vmatprep.subr.mxu0 %v1044
        %1228 = vmatpush1.msra.mxu0 %v1043
        %1229 = vmatprep.subr.mxu0 %v1040
        %1230 = vmatpush1.msra.mxu0 %v1039
        %1231 = vmatprep.subr.mxu0 %v1036
        %1232 = vmatpush1.msra.mxu0 %v1035
        %1233 = vmatprep.subr.mxu0 %v1032
        %1234 = vmatpush1.msra.mxu0 %v1031
        %1235 = vmatprep.subr.mxu0 %v1028
        %1236 = vmatpush1.msra.mxu0 %v1027
        %1237 = vmatprep.subr.mxu0 %v1024
        %1238 = vmatpush1.msra.mxu0 %v1023
        %1239 = vmatprep.subr.mxu0 %v1020
        %1240 = vmatpush1.msra.mxu0 %v1019
        %1241 = vmatprep.subr.mxu0 %v1016
        %1242 = vmatpush1.msra.mxu0 %v1015
        %1243 = vmatprep.subr.mxu0 %v1012
        %1244 = vmatpush1.msra.mxu0 %v1011
        %1245 = vmatprep.subr.mxu0 %v1008
        %1246 = vmatpush1.msra.mxu0 %v1007
        %1247 = vmatprep.subr.mxu0 %v1004
        %1248 = vmatpush1.msra.mxu0 %v1003
        %1249 = vmatprep.subr.mxu0 %v1000
        %1250 = vmatpush1.msra.mxu0 %v999
        %1251 = vmatprep.subr.mxu0 %v1124
        %1252 = vmatpush2.msra.mxu0 %v1123
        %1253 = vmatprep.subr.mxu0 %v1120
        %1254 = vmatpush2.msra.mxu0 %v1119
        %1255 = vmatprep.subr.mxu0 %v1116
        %1256 = vmatpush2.msra.mxu0 %v1115
        %1257 = vmatprep.subr.mxu0 %v1112
        %1258 = vmatpush2.msra.mxu0 %v1111
        %1259 = vmatprep.subr.mxu0 %v1108
        %1260 = vmatpush2.msra.mxu0 %v1107
        %1261 = vmatprep.subr.mxu0 %v1104
        %1262 = vmatpush2.msra.mxu0 %v1103
        %1263 = vmatprep.subr.mxu0 %v1100
        %1264 = vmatpush2.msra.mxu0 %v1099
        %1265 = vmatprep.subr.mxu0 %v1096
        %1266 = vmatpush2.msra.mxu0 %v1095
        %1267 = vmatprep.subr.mxu0 %v1092
        %1268 = vmatpush2.msra.mxu0 %v1091
        %1269 = vmatprep.subr.mxu0 %v1088
        %1270 = vmatpush2.msra.mxu0 %v1087
        %1271 = vmatprep.subr.mxu0 %v1084
        %1272 = vmatpush2.msra.mxu0 %v1083
        %1273 = vmatprep.subr.mxu0 %v1080
        %1274 = vmatpush2.msra.mxu0 %v1079
        %1275 = vmatprep.subr.mxu0 %v1076
        %1276 = vmatpush2.msra.mxu0 %v1075
        %1277 = vmatprep.subr.mxu0 %v1072
        %1278 = vmatpush2.msra.mxu0 %v1071
        %1279 = vmatprep.subr.mxu0 %v1068
        %1280 = vmatpush2.msra.mxu0 %v1067
        %1281 = vmatprep.subr.mxu0 %v1064
        %1282 = vmatpush2.msra.mxu0 %v1063
        %1283 = vmatprep.mubr.f32.mxu0 %v993
        %1284 = vmatmul.mubr.f32.gmra.mxu0 %v989
        %v1285 = vpop.f32.mrf.mxu0
        %v1286 = vadd.f32 %v1139, %v1285
        %v1287 = vpop.f32.mrf.mxu0
        %v1288 = vadd.f32 %v1143, %v1287
        %1289 = vdwg.mxu0
        %v1290 = vxor.u32 %v1215, 2147483648
        %v1291 = vmul.f32 %v1290, 1.442695
        %v1292 = vpow.pop %v1291
        %v1293 = vadd.f32 %v1292, 1.0
        %v1294 = vrcp.pop %v1293
        %v1295 = vmul.f32 1.0, %v1294
        %v1296 = vxor.u32 %v1217, 2147483648
        %v1297 = vmul.f32 %v1296, 1.442695
        %v1298 = vpow.pop %v1297
        %v1299 = vadd.f32 %v1298, 1.0
        %v1300 = vrcp.pop %v1299
        %v1301 = vmul.f32 1.0, %v1300
        %v1302 = vtanh.pop %v1286
        %v1303 = vxor.u32 %v1288, 2147483648
        %v1304 = vmul.f32 %v1303, 1.442695
        %v1305 = vpow.pop %v1304
        %v1306 = vadd.f32 %v1305, 1.0
        %v1307 = vrcp.pop %v1306
        %v1308 = vmul.f32 1.0, %v1307
        %v1309 = vmul.f32 %v1301, %v995
        %v1310 = vmul.f32 %v1295, %v1302
        %v1311 = vadd.f32 %v1309, %v1310
        %v1312 = vtanh.pop %v1311
        %v1313 = vmul.f32 %v1308, %v1312
        %1314 = vst [vmem:[%s992] sm:$0xff] %v1313
        %1315 = vst [vmem:[%s994] sm:$0xff] %v1311
        %v1316 = vld [vmem:[#allocation8] sm:$0xff]
        %v1317 = vld [vmem:[#allocation8 + $0x8] sm:$0xff]
        %v1318 = vld [vmem:[#allocation8 + $0x10] sm:$0xff]
        %v1319 = vld [vmem:[#allocation8 + $0x18] sm:$0xff]
        %v1320 = vld [vmem:[#allocation8 + $0x20] sm:$0xff]
        %v1321 = vld [vmem:[#allocation8 + $0x28] sm:$0xff]
        %v1322 = vld [vmem:[#allocation8 + $0x30] sm:$0xff]
        %v1323 = vld [vmem:[#allocation8 + $0x38] sm:$0xff]
        %v1324 = vld [vmem:[#allocation8 + $0x40] sm:$0xff]
        %v1325 = vld [vmem:[#allocation8 + $0x48] sm:$0xff]
        %v1326 = vld [vmem:[#allocation8 + $0x50] sm:$0xff]
        %v1327 = vld [vmem:[#allocation8 + $0x58] sm:$0xff]
        %v1328 = vld [vmem:[#allocation8 + $0x60] sm:$0xff]
        %v1329 = vld [vmem:[#allocation8 + $0x68] sm:$0xff]
        %v1330 = vld [vmem:[#allocation8 + $0x70] sm:$0xff]
        %v1331 = vld [vmem:[#allocation8 + $0x78] sm:$0xff]
        %v1332 = vld [vmem:[#allocation9] sm:$0x1]
        %v1334 = vlaneseq
        %v1335 = vshrl.u32 %v1334, 7
        %v1336 = vsub.s32 0, %v1335
        %v1337 = vrot.slane %v1332, %v1336
        %1339 = vmatprep.subr.mxu0 0.0
        %1340 = vmatpush1.msra.mxu0 %v1331
        %1341 = vmatprep.subr.mxu0 0.0
        %1342 = vmatpush1.msra.mxu0 %v1330
        %1343 = vmatprep.subr.mxu0 0.0
        %1344 = vmatpush1.msra.mxu0 %v1329
        %1345 = vmatprep.subr.mxu0 0.0
        %1346 = vmatpush1.msra.mxu0 %v1328
        %1347 = vmatprep.subr.mxu0 0.0
        %1348 = vmatpush1.msra.mxu0 %v1327
        %1349 = vmatprep.subr.mxu0 0.0
        %1350 = vmatpush1.msra.mxu0 %v1326
        %1351 = vmatprep.subr.mxu0 0.0
        %1352 = vmatpush1.msra.mxu0 %v1325
        %1353 = vmatprep.subr.mxu0 0.0
        %1354 = vmatpush1.msra.mxu0 %v1324
        %1355 = vmatprep.subr.mxu0 0.0
        %1356 = vmatpush1.msra.mxu0 %v1323
        %1357 = vmatprep.subr.mxu0 0.0
        %1358 = vmatpush1.msra.mxu0 %v1322
        %1359 = vmatprep.subr.mxu0 0.0
        %1360 = vmatpush1.msra.mxu0 %v1321
        %1361 = vmatprep.subr.mxu0 0.0
        %1362 = vmatpush1.msra.mxu0 %v1320
        %1363 = vmatprep.subr.mxu0 0.0
        %1364 = vmatpush1.msra.mxu0 %v1319
        %1365 = vmatprep.subr.mxu0 0.0
        %1366 = vmatpush1.msra.mxu0 %v1318
        %1367 = vmatprep.subr.mxu0 0.0
        %1368 = vmatpush1.msra.mxu0 %v1317
        %1369 = vmatprep.subr.mxu0 0.0
        %1370 = vmatpush1.msra.mxu0 %v1316
        %1371 = vmatprep.subr.mxu0 0.0
        %1372 = vmatpush2.msra.mxu0 0.0
        %1373 = vmatprep.subr.mxu0 0.0
        %1374 = vmatpush2.msra.mxu0 0.0
        %1375 = vmatprep.subr.mxu0 0.0
        %1376 = vmatpush2.msra.mxu0 0.0
        %1377 = vmatprep.subr.mxu0 0.0
        %1378 = vmatpush2.msra.mxu0 0.0
        %1379 = vmatprep.subr.mxu0 0.0
        %1380 = vmatpush2.msra.mxu0 0.0
        %1381 = vmatprep.subr.mxu0 0.0
        %1382 = vmatpush2.msra.mxu0 0.0
        %1383 = vmatprep.subr.mxu0 0.0
        %1384 = vmatpush2.msra.mxu0 0.0
        %1385 = vmatprep.subr.mxu0 0.0
        %1386 = vmatpush2.msra.mxu0 0.0
        %1387 = vmatprep.subr.mxu0 0.0
        %1388 = vmatpush2.msra.mxu0 0.0
        %1389 = vmatprep.subr.mxu0 0.0
        %1390 = vmatpush2.msra.mxu0 0.0
        %1391 = vmatprep.subr.mxu0 0.0
        %1392 = vmatpush2.msra.mxu0 0.0
        %1393 = vmatprep.subr.mxu0 0.0
        %1394 = vmatpush2.msra.mxu0 0.0
        %1395 = vmatprep.subr.mxu0 0.0
        %1396 = vmatpush2.msra.mxu0 0.0
        %1397 = vmatprep.subr.mxu0 0.0
        %1398 = vmatpush2.msra.mxu0 0.0
        %1399 = vmatprep.subr.mxu0 0.0
        %1400 = vmatpush2.msra.mxu0 0.0
        %1401 = vmatprep.subr.mxu0 0.0
        %1402 = vmatpush2.msra.mxu0 0.0
        %1403 = vmatprep.mubr.f32.mxu0 0.0
        %1404 = vmatmul.mubr.f32.gmra.mxu0 %v1313
        %v1405 = vpop.f32.mrf.mxu0
        %v1406 = vadd.f32 %v1337, %v1405
        %v1407 = vpop.f32.mrf.mxu0
        %1408 = vdwg.mxu0
        %1409 = vst [vmem:[%s330] sm:$0xff] %v1406
        %p1410 = scmp.lt.s32.totalorder %s21, 6
        %s1411 = scalar_select %p1410, %s21, 6
        %s1412 = smul.addr %s1411, 8
        %s1413 = scalar_lea.vmem %s7, %s1412
        // Predicated region
        $region69: #{seq2seq_forward.3} parent=47 // pred_check
          %p1414 = pneg %p191
        $region70: #{seq2seq_forward.3} parent=47 // pred_check_branch
          %1416 = sbr.rel (%p1414) target = $region72
        $region71: #{seq2seq_forward.3} parent=47 // pred_region
          _
        $region72: #{seq2seq_forward.3} parent=47 // pred_fallthru
          _
      $region48: #{seq2seq_forward.3} parent=5 // pred_fallthru
        _
      %p1417 = scmp.le.s32.totalorder 2, %s16
      // Predicated region
      $region73: #{seq2seq_forward.3} parent=5 // pred_check
        %p1418 = pneg %p1417
      $region74: #{seq2seq_forward.3} parent=5 // pred_check_branch
        %1420 = sbr.rel (%p1418) target = $region76
      $region75: #{seq2seq_forward.3} parent=5 // pred_region
        %s1421 = ssub.s32 %s16, 2
        // Predicated region
        $region77: #{seq2seq_forward.3} parent=75 // pred_check
          %p1422 = pneg %p197
        $region78: #{seq2seq_forward.3} parent=75 // pred_check_branch
          %1424 = sbr.rel (%p1422) target = $region80
        $region79: #{seq2seq_forward.3} parent=75 // pred_region
          %p1425 = scmp.lt.s32.totalorder %s22, 6
          %s1426 = scalar_select %p1425, %s22, 6
          %s1427 = smul.addr %s1426, 8
          %s1428 = scalar_lea.vmem %s7, %s1427
        $region80: #{seq2seq_forward.3} parent=75 // pred_fallthru
          _
      $region76: #{seq2seq_forward.3} parent=5 // pred_fallthru
        _
    $region6: #{seq2seq_forward.3} parent=1 // loop_footer
      %s20 = sadd.s32 1, %s16
    $region7: #{seq2seq_forward.3} parent=1 // loop_footer_branch
      %15 = sbr.rel target = $region3
    $region8: #{seq2seq_forward.3} parent=1 // loop_exit
      _
    %1429 = vsyncpa [#allocation5], 1
    %s1430 = scalar_lea.sflag [#allocation5], 1
    %1431 = vsyncpa %s1430, 1
    %1432 = vsyncpa [#allocation7], 1
    %1433 = vsyncpa [#allocation10], 1

</llo_original>
